<compile_context>
chip_gen: v5e
topology: v5e:2x2
jax: 0.10.0
libtpu: 0.0.40
codegen_flags: <defaults>
</compile_context>

<pallas_src>
import jax
import jax.numpy as jnp
from jax.experimental import pallas as pl
from jax.experimental.pallas import tpu as pltpu

EPS = 1e-5           # PyTorch BatchNorm default eps
OUT_LANES = 128      # lane-dense output width (column 0 carries the result)


def cnn_kernel(ids_ref, mask_ref, w1_ref, t1_ref, w2_ref, t2_ref,
               fw1_ref, fb1_ref, fw2_ref, fb2_ref, fw3_ref, fb3_ref, out_ref):
    R = ids_ref.shape[0]               # B * S rows, position-major (r = q*B + b)
    C0 = w1_ref.shape[0] // 3          # 4
    C2 = w2_ref.shape[1]               # 64
    B = out_ref.shape[0]
    L = fw1_ref.shape[0] // C2         # 33

    def shift_prev(x):                 # out[r] = x[r - B]  (previous position, same sample)
        return jnp.concatenate([x[R - B:, :], x[:R - B, :]], axis=0)

    def shift_next(x):                 # out[r] = x[r + B]  (next position, same sample)
        return jnp.concatenate([x[B:, :], x[:B, :]], axis=0)

    # ---- F.one_hot(inputs).float(); pad rows carry id -1 -> all-zero row (= zero padding)
    ids = ids_ref[...]                                            # (R, 1) int32
    cls = jax.lax.broadcasted_iota(jnp.int32, (R, C0), 1)
    oh = (ids == cls).astype(jnp.float32)                         # (R, 4)

    # ---- Conv1d(4->32, k=3, 'same') as one im2col matmul; BN1 scale folded into w1.
    cols1 = jnp.concatenate([shift_prev(oh), oh, shift_next(oh)], axis=1)   # (R, 12)
    h1 = jnp.dot(cols1, w1_ref[...], preferred_element_type=jnp.float32) + t1_ref[...]
    # ReLU, then zero all rows outside the valid positions q in [1, L]:
    # this also realises conv2's zero padding at q = 0 and q = L + 1.
    h1 = jnp.maximum(h1, 0.0) * mask_ref[...]                     # (R, 32)

    # ---- Conv1d(32->64, k=3, 'same'); BN2 scale folded; Dropout = identity (eval).
    cols2 = jnp.concatenate([shift_prev(h1), h1, shift_next(h1)], axis=1)   # (R, 96)
    h2 = jnp.dot(cols2, w2_ref[...], preferred_element_type=jnp.float32) + t2_ref[...]
    h2 = jnp.maximum(h2, 0.0)                                     # (R, 64)

    # ---- Flatten: take the L valid position blocks (rows (q)*B .. for q=1..L) and
    # concatenate along lanes -> (B, L*C2).  fw1 was permuted in the wrapper so this
    # position-major order matches PyTorch's channel-major flatten (f = c*L + l),
    # with BN3 folded in.  Cast to bf16 right at the MXU input (weights are bf16).
    flat = jnp.concatenate(
        [h2[(q + 1) * B:(q + 2) * B, :] for q in range(L)], axis=1)
    flat = flat.astype(jnp.bfloat16)                              # (B, L*C2)

    # ---- predictor: Linear(2112,512)+ReLU -> Linear(512,32)+ReLU -> Linear(32,1)
    # (BN3/BN4/BN5 folded into weights/biases wrapper-side; Dropout = identity.)
    o1 = jnp.dot(flat, fw1_ref[...], preferred_element_type=jnp.float32) + fb1_ref[...]
    o1 = jnp.maximum(o1, 0.0)                                     # (B, 512)
    o2 = jnp.dot(o1, fw2_ref[...], preferred_element_type=jnp.float32) + fb2_ref[...]
    o2 = jnp.maximum(o2, 0.0)                                     # (B, 32)
    out_ref[...] = jnp.dot(o2, fw3_ref[...],
                           preferred_element_type=jnp.float32) + fb3_ref[...]   # (B, 128)


def _bn_scale_shift(gamma, beta, mean, var):
    scale = gamma / jnp.sqrt(var + EPS)
    return scale, beta - mean * scale


def cnn_forward(x_ids, P):
    """x_ids: (B, L) int token ids in [0, 4). Returns (B,) float32."""
    B, L = x_ids.shape
    C1 = P['conv1_w'].shape[0]         # 32
    C2 = P['conv2_w'].shape[0]         # 64
    H1 = P['fc1_w'].shape[0]           # 512

    # Per-sample padded length: q=0 / q=L+1 are zero-pad positions for the k=3 convs;
    # round so the total row count is sublane-aligned.
    S = L + 2
    while (B * S) % 8:
        S += 1
    R = B * S

    # glue: ids in position-major layout (row r = q*B + b); pads are -1 -> zero one-hot.
    ids = jnp.full((S, B), -1, jnp.int32)
    ids = ids.at[1:L + 1, :].set(x_ids.astype(jnp.int32).T)
    ids = ids.reshape(R, 1)

    # glue: static row mask (1 for valid positions q in [1, L], else 0).
    qidx = jnp.arange(S)
    mask = ((qidx >= 1) & (qidx <= L)).astype(jnp.float32)
    mask = jnp.repeat(mask, B).reshape(R, 1)

    # glue: conv weights as im2col matrices with BN1/BN2 scales folded in.
    s1, t1 = _bn_scale_shift(*P['bn1'])
    w1 = jnp.transpose(P['conv1_w'], (2, 1, 0)).reshape(3 * 4, C1) * s1[None, :]   # (12, 32)
    t1 = t1.reshape(1, C1)
    s2, t2 = _bn_scale_shift(*P['bn2'])
    w2 = jnp.transpose(P['conv2_w'], (2, 1, 0)).reshape(3 * C1, C2) * s2[None, :]  # (96, 64)
    t2 = t2.reshape(1, C2)

    # glue: fold BN3 into fc1, permute for the in-kernel position-major flatten, bf16.
    s3, t3 = _bn_scale_shift(*P['bn3'])
    W1 = P['fc1_w']                                               # (512, 2112), f = c*L + l
    fw1 = (W1 * s3[None, :]).T                                    # (2112, 512)
    fb1 = (P['fc1_b'] + W1 @ t3).reshape(1, H1)
    fw1 = fw1.reshape(C2, L, H1).transpose(1, 0, 2).reshape(L * C2, H1)   # row = l*C2 + c
    fw1 = fw1.astype(jnp.bfloat16)

    # glue: fold BN4 into fc2, BN5 into fc3; pad fc3 to a lane-dense output.
    s4, t4 = _bn_scale_shift(*P['bn4'])
    W2 = P['fc2_w']                                               # (32, 512)
    fw2 = (W2 * s4[None, :]).T                                    # (512, 32)
    fb2 = (P['fc2_b'] + W2 @ t4).reshape(1, -1)
    s5, t5 = _bn_scale_shift(*P['bn5'])
    W3 = P['fc3_w']                                               # (1, 32)
    fw3 = (W3 * s5[None, :]).T                                    # (32, 1)
    fb3 = (P['fc3_b'] + W3 @ t5).reshape(1, 1)
    fw3 = jnp.pad(fw3, ((0, 0), (0, OUT_LANES - 1)))              # (32, 128)
    fb3 = jnp.pad(fb3, ((0, 0), (0, OUT_LANES - 1)))              # (1, 128)

    args = (ids, mask, w1, t1, w2, t2, fw1, fb1, fw2, fb2, fw3, fb3)
    in_specs = [pl.BlockSpec(a.shape, lambda i, nd=a.ndim: (0,) * nd) for a in args]

    out = pl.pallas_call(
        cnn_kernel,
        grid=(1,),
        in_specs=in_specs,
        out_specs=pl.BlockSpec((B, OUT_LANES), lambda i: (0, 0)),
        out_shape=jax.ShapeDtypeStruct((B, OUT_LANES), jnp.float32),
        compiler_params=pltpu.CompilerParams(
            dimension_semantics=("arbitrary",),
            vmem_limit_bytes=32 * 1024 * 1024),
    )(*args)
    return out[:, 0]                                              # .squeeze() on (B, 1)


def init_params(key, L):
    """Deterministic synthetic parameters with the shapes implied by __init__."""
    ks = jax.random.split(key, 13)

    def bn(k, n):
        k1, k2, k3, k4 = jax.random.split(k, 4)
        gamma = 1.0 + 0.1 * jax.random.normal(k1, (n,), jnp.float32)
        beta = 0.1 * jax.random.normal(k2, (n,), jnp.float32)
        mean = 0.1 * jax.random.normal(k3, (n,), jnp.float32)
        var = 1.0 + 0.2 * jax.random.uniform(k4, (n,), jnp.float32)
        return (gamma, beta, mean, var)

    nflat = 64 * L   # 2112 when L = 33
    return dict(
        conv1_w=0.3 * jax.random.normal(ks[0], (32, 4, 3), jnp.float32),
        bn1=bn(ks[1], 32),
        conv2_w=0.15 * jax.random.normal(ks[2], (64, 32, 3), jnp.float32),
        bn2=bn(ks[3], 64),
        bn3=bn(ks[4], nflat),
        fc1_w=0.03 * jax.random.normal(ks[5], (512, nflat), jnp.float32),
        fc1_b=0.1 * jax.random.normal(ks[6], (512,), jnp.float32),
        bn4=bn(ks[7], 512),
        fc2_w=0.06 * jax.random.normal(ks[8], (32, 512), jnp.float32),
        fc2_b=0.1 * jax.random.normal(ks[9], (32,), jnp.float32),
        bn5=bn(ks[10], 32),
        fc3_w=0.2 * jax.random.normal(ks[11], (1, 32), jnp.float32),
        fc3_b=0.1 * jax.random.normal(ks[12], (1,), jnp.float32),
    )


def reference_forward(x_ids, P):
    """Pure-JAX reference mirroring the PyTorch forward (NCL layout, eval mode)."""
    oh = jax.nn.one_hot(x_ids, 4, dtype=jnp.float32)              # (B, L, 4)
    x = jnp.transpose(oh, (0, 2, 1))                              # (B, 4, L)

    def conv1d_same(x, w):                                        # x (B,Cin,L), w (Cout,Cin,3)
        L = x.shape[2]
        xpad = jnp.pad(x, ((0, 0), (0, 0), (1, 1)))
        return sum(jnp.einsum('bcl,oc->bol', xpad[:, :, k:k + L], w[:, :, k])
                   for k in range(3))

    def bn(x, p, axis):
        g, b, m, v = p
        shp = [1] * x.ndim
        shp[axis] = -1
        return (x - m.reshape(shp)) / jnp.sqrt(v.reshape(shp) + EPS) * g.reshape(shp) \
            + b.reshape(shp)

    h = jax.nn.relu(bn(conv1d_same(x, P['conv1_w']), P['bn1'], 1))
    h = jax.nn.relu(bn(conv1d_same(h, P['conv2_w']), P['bn2'], 1))
    flat = h.reshape(h.shape[0], -1)                              # channel-major flatten
    z = bn(flat, P['bn3'], 1)
    z = jax.nn.relu(z @ P['fc1_w'].T + P['fc1_b'])
    z = bn(z, P['bn4'], 1)
    z = jax.nn.relu(z @ P['fc2_w'].T + P['fc2_b'])
    z = bn(z, P['bn5'], 1)
    z = z @ P['fc3_w'].T + P['fc3_b']
    return jnp.squeeze(z)


if __name__ == "__main__":
    # Linear(in_features=2112) with 64 conv channels => sequence length L = 33.
    B, L = 2, 33
    key = jax.random.PRNGKey(0)
    kx, kp = jax.random.split(key)
    x_ids = jax.random.randint(kx, (B, L), 0, 4, dtype=jnp.int32)
    params = init_params(kp, L)

    out = jax.block_until_ready(cnn_forward(x_ids, params))
    ref = jax.block_until_ready(reference_forward(x_ids, params))

    assert out.shape == (B,), f"unexpected output shape {out.shape}"
    if not bool(jnp.allclose(out, ref, rtol=2e-2, atol=2e-2)):
        raise AssertionError(f"kernel/reference mismatch: {out} vs {ref}")
    print("KERNEL_OK")
</pallas_src>

<mosaic_0001>
module attributes {stable_mosaic.version = 11 : i64} {
  func.func @cnn_kernel(%arg0: i32, %arg1: memref<72x1xi32, #tpu.memory_space<vmem>>, %arg2: memref<72x1xf32, #tpu.memory_space<vmem>>, %arg3: memref<12x32xf32, #tpu.memory_space<vmem>>, %arg4: memref<1x32xf32, #tpu.memory_space<vmem>>, %arg5: memref<96x64xf32, #tpu.memory_space<vmem>>, %arg6: memref<1x64xf32, #tpu.memory_space<vmem>>, %arg7: memref<2112x512xbf16, #tpu.memory_space<vmem>>, %arg8: memref<1x512xf32, #tpu.memory_space<vmem>>, %arg9: memref<512x32xf32, #tpu.memory_space<vmem>>, %arg10: memref<1x32xf32, #tpu.memory_space<vmem>>, %arg11: memref<32x128xf32, #tpu.memory_space<vmem>>, %arg12: memref<1x128xf32, #tpu.memory_space<vmem>>, %arg13: memref<2x128xf32, #tpu.memory_space<vmem>>) attributes {dimension_semantics = [#tpu.dimension_semantics<arbitrary>], iteration_bounds = array<i64: 1>, scalar_prefetch = 0 : i64, scratch_operands = 0 : i64, tpu.core_type = #tpu.core_type<tc>, window_params = [{pipeline_mode = #tpu.pipeline_mode<synchronous>, transform_indices = @transform_0, window_bounds = array<i64: 72, 1>}, {pipeline_mode = #tpu.pipeline_mode<synchronous>, transform_indices = @transform_1, window_bounds = array<i64: 72, 1>}, {pipeline_mode = #tpu.pipeline_mode<synchronous>, transform_indices = @transform_2, window_bounds = array<i64: 12, 32>}, {pipeline_mode = #tpu.pipeline_mode<synchronous>, transform_indices = @transform_3, window_bounds = array<i64: 1, 32>}, {pipeline_mode = #tpu.pipeline_mode<synchronous>, transform_indices = @transform_4, window_bounds = array<i64: 96, 64>}, {pipeline_mode = #tpu.pipeline_mode<synchronous>, transform_indices = @transform_5, window_bounds = array<i64: 1, 64>}, {pipeline_mode = #tpu.pipeline_mode<synchronous>, transform_indices = @transform_6, window_bounds = array<i64: 2112, 512>}, {pipeline_mode = #tpu.pipeline_mode<synchronous>, transform_indices = @transform_7, window_bounds = array<i64: 1, 512>}, {pipeline_mode = #tpu.pipeline_mode<synchronous>, transform_indices = @transform_8, window_bounds = array<i64: 512, 32>}, {pipeline_mode = #tpu.pipeline_mode<synchronous>, transform_indices = @transform_9, window_bounds = array<i64: 1, 32>}, {pipeline_mode = #tpu.pipeline_mode<synchronous>, transform_indices = @transform_10, window_bounds = array<i64: 32, 128>}, {pipeline_mode = #tpu.pipeline_mode<synchronous>, transform_indices = @transform_11, window_bounds = array<i64: 1, 128>}, {pipeline_mode = #tpu.pipeline_mode<synchronous>, transform_indices = @transform_12, window_bounds = array<i64: 2, 128>}]} {
    %c0 = arith.constant 0 : index
    %c0_0 = arith.constant 0 : index
    %0 = vector.load %arg1[%c0, %c0_0] : memref<72x1xi32, #tpu.memory_space<vmem>>, vector<72x1xi32>
    %1 = tpu.iota {dimensions = array<i32: 1>} : vector<72x4xi32>
    %2 = vector.broadcast %0 : vector<72x1xi32> to vector<72x4xi32>
    %3 = arith.cmpi eq, %2, %1 : vector<72x4xi32>
    %4 = arith.extui %3 : vector<72x4xi1> to vector<72x4xi32>
    %5 = arith.sitofp %4 : vector<72x4xi32> to vector<72x4xf32>
    %6 = vector.extract_strided_slice %5 {offsets = [70, 0], sizes = [2, 4], strides = [1, 1]} : vector<72x4xf32> to vector<2x4xf32>
    %7 = vector.extract_strided_slice %5 {offsets = [0, 0], sizes = [70, 4], strides = [1, 1]} : vector<72x4xf32> to vector<70x4xf32>
    %8 = tpu.concatenate %6, %7 in 0 : vector<2x4xf32>, vector<70x4xf32> -> vector<72x4xf32>
    %9 = vector.extract_strided_slice %5 {offsets = [2, 0], sizes = [70, 4], strides = [1, 1]} : vector<72x4xf32> to vector<70x4xf32>
    %10 = vector.extract_strided_slice %5 {offsets = [0, 0], sizes = [2, 4], strides = [1, 1]} : vector<72x4xf32> to vector<2x4xf32>
    %11 = tpu.concatenate %9, %10 in 0 : vector<70x4xf32>, vector<2x4xf32> -> vector<72x4xf32>
    %12 = tpu.concatenate %8, %5, %11 in 1 : vector<72x4xf32>, vector<72x4xf32>, vector<72x4xf32> -> vector<72x12xf32>
    %c0_1 = arith.constant 0 : index
    %c0_2 = arith.constant 0 : index
    %13 = vector.load %arg3[%c0_1, %c0_2] : memref<12x32xf32, #tpu.memory_space<vmem>>, vector<12x32xf32>
    %cst = arith.constant dense<0.000000e+00> : vector<72x32xf32>
    %14 = tpu.matmul %12, %13, %cst {dimension_numbers = #tpu.dot_dimension_numbers<[1], [0], [0], [1], [0, 0, 1, 1], [], []>} : vector<72x12xf32>, vector<12x32xf32>, vector<72x32xf32> -> vector<72x32xf32>
    %c0_3 = arith.constant 0 : index
    %c0_4 = arith.constant 0 : index
    %15 = vector.load %arg4[%c0_3, %c0_4] : memref<1x32xf32, #tpu.memory_space<vmem>>, vector<1x32xf32>
    %16 = vector.broadcast %15 : vector<1x32xf32> to vector<72x32xf32>
    %17 = arith.addf %14, %16 : vector<72x32xf32>
    %cst_5 = arith.constant 0.000000e+00 : f32
    %18 = vector.broadcast %cst_5 : f32 to vector<72x32xf32>
    %19 = arith.maximumf %17, %18 : vector<72x32xf32>
    %c0_6 = arith.constant 0 : index
    %c0_7 = arith.constant 0 : index
    %20 = vector.load %arg2[%c0_6, %c0_7] : memref<72x1xf32, #tpu.memory_space<vmem>>, vector<72x1xf32>
    %21 = vector.broadcast %20 : vector<72x1xf32> to vector<72x32xf32>
    %22 = arith.mulf %19, %21 : vector<72x32xf32>
    %23 = vector.extract_strided_slice %22 {offsets = [70, 0], sizes = [2, 32], strides = [1, 1]} : vector<72x32xf32> to vector<2x32xf32>
    %24 = vector.extract_strided_slice %22 {offsets = [0, 0], sizes = [70, 32], strides = [1, 1]} : vector<72x32xf32> to vector<70x32xf32>
    %25 = tpu.concatenate %23, %24 in 0 : vector<2x32xf32>, vector<70x32xf32> -> vector<72x32xf32>
    %26 = vector.extract_strided_slice %22 {offsets = [2, 0], sizes = [70, 32], strides = [1, 1]} : vector<72x32xf32> to vector<70x32xf32>
    %27 = vector.extract_strided_slice %22 {offsets = [0, 0], sizes = [2, 32], strides = [1, 1]} : vector<72x32xf32> to vector<2x32xf32>
    %28 = tpu.concatenate %26, %27 in 0 : vector<70x32xf32>, vector<2x32xf32> -> vector<72x32xf32>
    %29 = tpu.concatenate %25, %22, %28 in 1 : vector<72x32xf32>, vector<72x32xf32>, vector<72x32xf32> -> vector<72x96xf32>
    %c0_8 = arith.constant 0 : index
    %c0_9 = arith.constant 0 : index
    %30 = vector.load %arg5[%c0_8, %c0_9] : memref<96x64xf32, #tpu.memory_space<vmem>>, vector<96x64xf32>
    %cst_10 = arith.constant dense<0.000000e+00> : vector<72x64xf32>
    %31 = tpu.matmul %29, %30, %cst_10 {dimension_numbers = #tpu.dot_dimension_numbers<[1], [0], [0], [1], [0, 0, 1, 1], [], []>} : vector<72x96xf32>, vector<96x64xf32>, vector<72x64xf32> -> vector<72x64xf32>
    %c0_11 = arith.constant 0 : index
    %c0_12 = arith.constant 0 : index
    %32 = vector.load %arg6[%c0_11, %c0_12] : memref<1x64xf32, #tpu.memory_space<vmem>>, vector<1x64xf32>
    %33 = vector.broadcast %32 : vector<1x64xf32> to vector<72x64xf32>
    %34 = arith.addf %31, %33 : vector<72x64xf32>
    %cst_13 = arith.constant 0.000000e+00 : f32
    %35 = vector.broadcast %cst_13 : f32 to vector<72x64xf32>
    %36 = arith.maximumf %34, %35 : vector<72x64xf32>
    %37 = vector.extract_strided_slice %36 {offsets = [2, 0], sizes = [2, 64], strides = [1, 1]} : vector<72x64xf32> to vector<2x64xf32>
    %38 = vector.extract_strided_slice %36 {offsets = [4, 0], sizes = [2, 64], strides = [1, 1]} : vector<72x64xf32> to vector<2x64xf32>
    %39 = vector.extract_strided_slice %36 {offsets = [6, 0], sizes = [2, 64], strides = [1, 1]} : vector<72x64xf32> to vector<2x64xf32>
    %40 = vector.extract_strided_slice %36 {offsets = [8, 0], sizes = [2, 64], strides = [1, 1]} : vector<72x64xf32> to vector<2x64xf32>
    %41 = vector.extract_strided_slice %36 {offsets = [10, 0], sizes = [2, 64], strides = [1, 1]} : vector<72x64xf32> to vector<2x64xf32>
    %42 = vector.extract_strided_slice %36 {offsets = [12, 0], sizes = [2, 64], strides = [1, 1]} : vector<72x64xf32> to vector<2x64xf32>
    %43 = vector.extract_strided_slice %36 {offsets = [14, 0], sizes = [2, 64], strides = [1, 1]} : vector<72x64xf32> to vector<2x64xf32>
    %44 = vector.extract_strided_slice %36 {offsets = [16, 0], sizes = [2, 64], strides = [1, 1]} : vector<72x64xf32> to vector<2x64xf32>
    %45 = vector.extract_strided_slice %36 {offsets = [18, 0], sizes = [2, 64], strides = [1, 1]} : vector<72x64xf32> to vector<2x64xf32>
    %46 = vector.extract_strided_slice %36 {offsets = [20, 0], sizes = [2, 64], strides = [1, 1]} : vector<72x64xf32> to vector<2x64xf32>
    %47 = vector.extract_strided_slice %36 {offsets = [22, 0], sizes = [2, 64], strides = [1, 1]} : vector<72x64xf32> to vector<2x64xf32>
    %48 = vector.extract_strided_slice %36 {offsets = [24, 0], sizes = [2, 64], strides = [1, 1]} : vector<72x64xf32> to vector<2x64xf32>
    %49 = vector.extract_strided_slice %36 {offsets = [26, 0], sizes = [2, 64], strides = [1, 1]} : vector<72x64xf32> to vector<2x64xf32>
    %50 = vector.extract_strided_slice %36 {offsets = [28, 0], sizes = [2, 64], strides = [1, 1]} : vector<72x64xf32> to vector<2x64xf32>
    %51 = vector.extract_strided_slice %36 {offsets = [30, 0], sizes = [2, 64], strides = [1, 1]} : vector<72x64xf32> to vector<2x64xf32>
    %52 = vector.extract_strided_slice %36 {offsets = [32, 0], sizes = [2, 64], strides = [1, 1]} : vector<72x64xf32> to vector<2x64xf32>
    %53 = vector.extract_strided_slice %36 {offsets = [34, 0], sizes = [2, 64], strides = [1, 1]} : vector<72x64xf32> to vector<2x64xf32>
    %54 = vector.extract_strided_slice %36 {offsets = [36, 0], sizes = [2, 64], strides = [1, 1]} : vector<72x64xf32> to vector<2x64xf32>
    %55 = vector.extract_strided_slice %36 {offsets = [38, 0], sizes = [2, 64], strides = [1, 1]} : vector<72x64xf32> to vector<2x64xf32>
    %56 = vector.extract_strided_slice %36 {offsets = [40, 0], sizes = [2, 64], strides = [1, 1]} : vector<72x64xf32> to vector<2x64xf32>
    %57 = vector.extract_strided_slice %36 {offsets = [42, 0], sizes = [2, 64], strides = [1, 1]} : vector<72x64xf32> to vector<2x64xf32>
    %58 = vector.extract_strided_slice %36 {offsets = [44, 0], sizes = [2, 64], strides = [1, 1]} : vector<72x64xf32> to vector<2x64xf32>
    %59 = vector.extract_strided_slice %36 {offsets = [46, 0], sizes = [2, 64], strides = [1, 1]} : vector<72x64xf32> to vector<2x64xf32>
    %60 = vector.extract_strided_slice %36 {offsets = [48, 0], sizes = [2, 64], strides = [1, 1]} : vector<72x64xf32> to vector<2x64xf32>
    %61 = vector.extract_strided_slice %36 {offsets = [50, 0], sizes = [2, 64], strides = [1, 1]} : vector<72x64xf32> to vector<2x64xf32>
    %62 = vector.extract_strided_slice %36 {offsets = [52, 0], sizes = [2, 64], strides = [1, 1]} : vector<72x64xf32> to vector<2x64xf32>
    %63 = vector.extract_strided_slice %36 {offsets = [54, 0], sizes = [2, 64], strides = [1, 1]} : vector<72x64xf32> to vector<2x64xf32>
    %64 = vector.extract_strided_slice %36 {offsets = [56, 0], sizes = [2, 64], strides = [1, 1]} : vector<72x64xf32> to vector<2x64xf32>
    %65 = vector.extract_strided_slice %36 {offsets = [58, 0], sizes = [2, 64], strides = [1, 1]} : vector<72x64xf32> to vector<2x64xf32>
    %66 = vector.extract_strided_slice %36 {offsets = [60, 0], sizes = [2, 64], strides = [1, 1]} : vector<72x64xf32> to vector<2x64xf32>
    %67 = vector.extract_strided_slice %36 {offsets = [62, 0], sizes = [2, 64], strides = [1, 1]} : vector<72x64xf32> to vector<2x64xf32>
    %68 = vector.extract_strided_slice %36 {offsets = [64, 0], sizes = [2, 64], strides = [1, 1]} : vector<72x64xf32> to vector<2x64xf32>
    %69 = vector.extract_strided_slice %36 {offsets = [66, 0], sizes = [2, 64], strides = [1, 1]} : vector<72x64xf32> to vector<2x64xf32>
    %70 = tpu.concatenate %37, %38, %39, %40, %41, %42, %43, %44, %45, %46, %47, %48, %49, %50, %51, %52 in 1 : vector<2x64xf32>, vector<2x64xf32>, vector<2x64xf32>, vector<2x64xf32>, vector<2x64xf32>, vector<2x64xf32>, vector<2x64xf32>, vector<2x64xf32>, vector<2x64xf32>, vector<2x64xf32>, vector<2x64xf32>, vector<2x64xf32>, vector<2x64xf32>, vector<2x64xf32>, vector<2x64xf32>, vector<2x64xf32> -> vector<2x1024xf32>
    %71 = tpu.concatenate %53, %54, %55, %56, %57, %58, %59, %60, %61, %62, %63, %64, %65, %66, %67, %68 in 1 : vector<2x64xf32>, vector<2x64xf32>, vector<2x64xf32>, vector<2x64xf32>, vector<2x64xf32>, vector<2x64xf32>, vector<2x64xf32>, vector<2x64xf32>, vector<2x64xf32>, vector<2x64xf32>, vector<2x64xf32>, vector<2x64xf32>, vector<2x64xf32>, vector<2x64xf32>, vector<2x64xf32>, vector<2x64xf32> -> vector<2x1024xf32>
    %72 = tpu.concatenate %70, %71, %69 in 1 : vector<2x1024xf32>, vector<2x1024xf32>, vector<2x64xf32> -> vector<2x2112xf32>
    %73 = arith.truncf %72 : vector<2x2112xf32> to vector<2x2112xbf16>
    %c0_14 = arith.constant 0 : index
    %c0_15 = arith.constant 0 : index
    %74 = vector.load %arg7[%c0_14, %c0_15] : memref<2112x512xbf16, #tpu.memory_space<vmem>>, vector<2112x512xbf16>
    %cst_16 = arith.constant dense<0.000000e+00> : vector<2x512xf32>
    %75 = tpu.matmul %73, %74, %cst_16 {dimension_numbers = #tpu.dot_dimension_numbers<[1], [0], [0], [1], [0, 0, 1, 1], [], []>} : vector<2x2112xbf16>, vector<2112x512xbf16>, vector<2x512xf32> -> vector<2x512xf32>
    %c0_17 = arith.constant 0 : index
    %c0_18 = arith.constant 0 : index
    %76 = vector.load %arg8[%c0_17, %c0_18] : memref<1x512xf32, #tpu.memory_space<vmem>>, vector<1x512xf32>
    %77 = vector.broadcast %76 : vector<1x512xf32> to vector<2x512xf32>
    %78 = arith.addf %75, %77 : vector<2x512xf32>
    %cst_19 = arith.constant 0.000000e+00 : f32
    %79 = vector.broadcast %cst_19 : f32 to vector<2x512xf32>
    %80 = arith.maximumf %78, %79 : vector<2x512xf32>
    %c0_20 = arith.constant 0 : index
    %c0_21 = arith.constant 0 : index
    %81 = vector.load %arg9[%c0_20, %c0_21] : memref<512x32xf32, #tpu.memory_space<vmem>>, vector<512x32xf32>
    %cst_22 = arith.constant dense<0.000000e+00> : vector<2x32xf32>
    %82 = tpu.matmul %80, %81, %cst_22 {dimension_numbers = #tpu.dot_dimension_numbers<[1], [0], [0], [1], [0, 0, 1, 1], [], []>} : vector<2x512xf32>, vector<512x32xf32>, vector<2x32xf32> -> vector<2x32xf32>
    %c0_23 = arith.constant 0 : index
    %c0_24 = arith.constant 0 : index
    %83 = vector.load %arg10[%c0_23, %c0_24] : memref<1x32xf32, #tpu.memory_space<vmem>>, vector<1x32xf32>
    %84 = vector.broadcast %83 : vector<1x32xf32> to vector<2x32xf32>
    %85 = arith.addf %82, %84 : vector<2x32xf32>
    %cst_25 = arith.constant 0.000000e+00 : f32
    %86 = vector.broadcast %cst_25 : f32 to vector<2x32xf32>
    %87 = arith.maximumf %85, %86 : vector<2x32xf32>
    %c0_26 = arith.constant 0 : index
    %c0_27 = arith.constant 0 : index
    %88 = vector.load %arg11[%c0_26, %c0_27] : memref<32x128xf32, #tpu.memory_space<vmem>>, vector<32x128xf32>
    %cst_28 = arith.constant dense<0.000000e+00> : vector<2x128xf32>
    %89 = tpu.matmul %87, %88, %cst_28 {dimension_numbers = #tpu.dot_dimension_numbers<[1], [0], [0], [1], [0, 0, 1, 1], [], []>} : vector<2x32xf32>, vector<32x128xf32>, vector<2x128xf32> -> vector<2x128xf32>
    %c0_29 = arith.constant 0 : index
    %c0_30 = arith.constant 0 : index
    %90 = vector.load %arg12[%c0_29, %c0_30] : memref<1x128xf32, #tpu.memory_space<vmem>>, vector<1x128xf32>
    %91 = vector.broadcast %90 : vector<1x128xf32> to vector<2x128xf32>
    %92 = arith.addf %89, %91 : vector<2x128xf32>
    %c0_31 = arith.constant 0 : index
    %c0_32 = arith.constant 0 : index
    %93 = vector.load %arg13[%c0_31, %c0_32] : memref<2x128xf32, #tpu.memory_space<vmem>>, vector<2x128xf32>
    tpu.vector_store %arg13[%c0_31, %c0_32], %92 {strides = array<i32>} : memref<2x128xf32, #tpu.memory_space<vmem>>, vector<2x128xf32>,
    return
  }
  func.func @transform_0(%arg0: i32) -> (i32, i32) {
    %c0_i32 = arith.constant 0 : i32
    %c0_i32_0 = arith.constant 0 : i32
    %c0_i32_1 = arith.constant 0 : i32
    return %c0_i32, %c0_i32_0 : i32, i32
  }
  func.func @transform_1(%arg0: i32) -> (i32, i32) {
    %c0_i32 = arith.constant 0 : i32
    %c0_i32_0 = arith.constant 0 : i32
    %c0_i32_1 = arith.constant 0 : i32
    return %c0_i32, %c0_i32_0 : i32, i32
  }
  func.func @transform_2(%arg0: i32) -> (i32, i32) {
    %c0_i32 = arith.constant 0 : i32
    %c0_i32_0 = arith.constant 0 : i32
    %c0_i32_1 = arith.constant 0 : i32
    return %c0_i32, %c0_i32_0 : i32, i32
  }
  func.func @transform_3(%arg0: i32) -> (i32, i32) {
    %c0_i32 = arith.constant 0 : i32
    %c0_i32_0 = arith.constant 0 : i32
    %c0_i32_1 = arith.constant 0 : i32
    return %c0_i32, %c0_i32_0 : i32, i32
  }
  func.func @transform_4(%arg0: i32) -> (i32, i32) {
    %c0_i32 = arith.constant 0 : i32
    %c0_i32_0 = arith.constant 0 : i32
    %c0_i32_1 = arith.constant 0 : i32
    return %c0_i32, %c0_i32_0 : i32, i32
  }
  func.func @transform_5(%arg0: i32) -> (i32, i32) {
    %c0_i32 = arith.constant 0 : i32
    %c0_i32_0 = arith.constant 0 : i32
    %c0_i32_1 = arith.constant 0 : i32
    return %c0_i32, %c0_i32_0 : i32, i32
  }
  func.func @transform_6(%arg0: i32) -> (i32, i32) {
    %c0_i32 = arith.constant 0 : i32
    %c0_i32_0 = arith.constant 0 : i32
    %c0_i32_1 = arith.constant 0 : i32
    return %c0_i32, %c0_i32_0 : i32, i32
  }
  func.func @transform_7(%arg0: i32) -> (i32, i32) {
    %c0_i32 = arith.constant 0 : i32
    %c0_i32_0 = arith.constant 0 : i32
    %c0_i32_1 = arith.constant 0 : i32
    return %c0_i32, %c0_i32_0 : i32, i32
  }
  func.func @transform_8(%arg0: i32) -> (i32, i32) {
    %c0_i32 = arith.constant 0 : i32
    %c0_i32_0 = arith.constant 0 : i32
    %c0_i32_1 = arith.constant 0 : i32
    return %c0_i32, %c0_i32_0 : i32, i32
  }
  func.func @transform_9(%arg0: i32) -> (i32, i32) {
    %c0_i32 = arith.constant 0 : i32
    %c0_i32_0 = arith.constant 0 : i32
    %c0_i32_1 = arith.constant 0 : i32
    return %c0_i32, %c0_i32_0 : i32, i32
  }
  func.func @transform_10(%arg0: i32) -> (i32, i32) {
    %c0_i32 = arith.constant 0 : i32
    %c0_i32_0 = arith.constant 0 : i32
    %c0_i32_1 = arith.constant 0 : i32
    return %c0_i32, %c0_i32_0 : i32, i32
  }
  func.func @transform_11(%arg0: i32) -> (i32, i32) {
    %c0_i32 = arith.constant 0 : i32
    %c0_i32_0 = arith.constant 0 : i32
    %c0_i32_1 = arith.constant 0 : i32
    return %c0_i32, %c0_i32_0 : i32, i32
  }
  func.func @transform_12(%arg0: i32) -> (i32, i32) {
    %c0_i32 = arith.constant 0 : i32
    %c0_i32_0 = arith.constant 0 : i32
    %c0_i32_1 = arith.constant 0 : i32
    return %c0_i32, %c0_i32_0 : i32, i32
  }
}

</mosaic_0001>

<llo_original>
// kernel: tpu_custom_call.1
$region0: #{tpu_custom_call.1}
  #allocation0 [shape = 'u32[]', space=smem, size = 0x4, offset = 0x4, fixed_abs, tag = 'smem constant byte address 0x4 - core index']
  #allocation1 [shape = 'u32[72,128]{1,0:T(1,128)}', space=vmem, size = 0x9000, scoped, tag = 'internal scratch']
  %s0 = inlined_call_operand.vmem [shape: s32[72,1], index: 0, kind: input, shape index: {}]
  %s1 = inlined_call_operand.vmem [shape: f32[72,1], index: 1, kind: input, shape index: {}]
  %s2 = inlined_call_operand.hbm [shape: f32[12,32], index: 2, kind: input, shape index: {}]
  %s3 = inlined_call_operand.hbm [shape: f32[1,32], index: 3, kind: input, shape index: {}]
  %s4 = inlined_call_operand.vmem [shape: f32[96,64], index: 4, kind: input, shape index: {}]
  %s5 = inlined_call_operand.hbm [shape: f32[1,64], index: 5, kind: input, shape index: {}]
  %s6 = inlined_call_operand.hbm [shape: bf16[2112,512], index: 6, kind: input, shape index: {}]
  %s7 = inlined_call_operand.hbm [shape: f32[1,512], index: 7, kind: input, shape index: {}]
  %s8 = inlined_call_operand.vmem [shape: f32[512,32], index: 8, kind: input, shape index: {}]
  %s9 = inlined_call_operand.hbm [shape: f32[1,32], index: 9, kind: input, shape index: {}]
  %s10 = inlined_call_operand.hbm [shape: f32[32,128], index: 10, kind: input, shape index: {}]
  %s11 = inlined_call_operand.hbm [shape: f32[1,128], index: 11, kind: input, shape index: {}]
  %s12 = inlined_call_operand.hbm [shape: f32[2,128], index: 12, kind: output, shape index: {}]
  %s13 = sld [smem:[#allocation0]]
  $region90: #{tpu_custom_call.1} parent=0
    _
  %s15 = ssub.s32 1, %s13
  %s16 = scalar_select 0, %s15, %s13
  $region1: #{tpu_custom_call.1} parent=0
    #allocation2 [shape = 'u8[8192]{0}', space=vmem, size = 0x2000, scoped, tag = 'input window, operand 2, single buffered']
    #allocation3 [shape = 's32[1]{0}', space=sflag, size = 0x4, scoped, tag = 'scoped memory for tpu_custom_call.1']
    #allocation4 [shape = 's32[1]{0}', space=sflag, size = 0x4, scoped, tag = 'scoped memory for tpu_custom_call.1']
    #allocation5 [shape = 'u8[512]{0}', space=vmem, size = 0x400, scoped, tag = 'input window, operand 3, single buffered']
    #allocation6 [shape = 's32[1]{0}', space=sflag, size = 0x4, scoped, tag = 'scoped memory for tpu_custom_call.1']
    #allocation7 [shape = 'u8[512]{0}', space=vmem, size = 0x400, scoped, tag = 'input window, operand 5, single buffered']
    #allocation8 [shape = 'u8[2162688]{0}', space=vmem, size = 0x210000, scoped, tag = 'input window, operand 6, single buffered']
    #allocation9 [shape = 's32[1]{0}', space=sflag, size = 0x4, scoped, tag = 'scoped memory for tpu_custom_call.1']
    #allocation10 [shape = 'u8[2048]{0}', space=vmem, size = 0x800, scoped, tag = 'input window, operand 7, single buffered']
    #allocation11 [shape = 'u8[512]{0}', space=vmem, size = 0x400, scoped, tag = 'input window, operand 9, single buffered']
    #allocation12 [shape = 's32[1]{0}', space=sflag, size = 0x4, scoped, tag = 'scoped memory for tpu_custom_call.1']
    #allocation13 [shape = 'u8[16384]{0}', space=vmem, size = 0x4000, scoped, tag = 'input window, operand 10, single buffered']
    #allocation14 [shape = 'u8[512]{0}', space=vmem, size = 0x400, scoped, tag = 'input window, operand 11, single buffered']
    #allocation15 [shape = 's32[1]{0}', space=sflag, size = 0x4, scoped, tag = 'scoped memory for tpu_custom_call.1']
    #allocation16 [shape = 'u8[1024]{0}', space=vmem, size = 0x400, scoped, tag = 'output window, operand 0, single buffered']
    %17 = vsyncpa [#allocation3], 0
    %18 = vsyncpa [#allocation6], 0
    %19 = vsyncpa [#allocation9], 0
    %20 = vsyncpa [#allocation12], 0
    %21 = vsyncpa [#allocation15], 0
    %22 = vsyncpa [#allocation4], 0
    // Predicated region
    $region2: #{tpu_custom_call.1} parent=1 // pred_check
      _
    $region3: #{tpu_custom_call.1} parent=1 // pred_check_branch
      %24 = sbr.rel (0) target = $region5
    $region4: #{tpu_custom_call.1} parent=1 // pred_region
      _
    $region5: #{tpu_custom_call.1} parent=1 // pred_fallthru
      _
    // Predicated region
    $region6: #{tpu_custom_call.1} parent=1 // pred_check
      _
    $region7: #{tpu_custom_call.1} parent=1 // pred_check_branch
      %26 = sbr.rel (0) target = $region9
    $region8: #{tpu_custom_call.1} parent=1 // pred_region
      _
    $region9: #{tpu_custom_call.1} parent=1 // pred_fallthru
      _
    // Predicated region
    $region10: #{tpu_custom_call.1} parent=1 // pred_check
      _
    $region11: #{tpu_custom_call.1} parent=1 // pred_check_branch
      %28 = sbr.rel (0) target = $region13
    $region12: #{tpu_custom_call.1} parent=1 // pred_region
      %30 = vsyncadd [#allocation3], 0
      %s31 = sshll.u32 %s2, 4
      %s32 = int_to_ptr.hbm [resolvable:$true] %s31
      %s33 = sshll.u32 [#allocation2], 4
      %s34 = int_to_ptr.vmem [resolvable:$true] %s33
      %39 = dma.hbm_to_vmem [thread:$0]  %s32, 256, %s34, [#allocation3], 128, 128, 8
    $region13: #{tpu_custom_call.1} parent=1 // pred_fallthru
      _
    // Predicated region
    $region14: #{tpu_custom_call.1} parent=1 // pred_check
      _
    $region15: #{tpu_custom_call.1} parent=1 // pred_check_branch
      %41 = sbr.rel (0) target = $region17
    $region16: #{tpu_custom_call.1} parent=1 // pred_region
      %43 = vsyncadd [#allocation6], 0
      %s45 = sshll.u32 %s3, 4
      %s46 = int_to_ptr.hbm [resolvable:$true] %s45
      %s47 = sshll.u32 [#allocation5], 4
      %s48 = int_to_ptr.vmem [resolvable:$true] %s47
      %50 = dma.hbm_to_vmem [thread:$0]  %s46, 16, %s48, [#allocation6]
    $region17: #{tpu_custom_call.1} parent=1 // pred_fallthru
      _
    // Predicated region
    $region18: #{tpu_custom_call.1} parent=1 // pred_check
      _
    $region19: #{tpu_custom_call.1} parent=1 // pred_check_branch
      %52 = sbr.rel (0) target = $region21
    $region20: #{tpu_custom_call.1} parent=1 // pred_region
      _
    $region21: #{tpu_custom_call.1} parent=1 // pred_fallthru
      _
    // Predicated region
    $region22: #{tpu_custom_call.1} parent=1 // pred_check
      _
    $region23: #{tpu_custom_call.1} parent=1 // pred_check_branch
      %54 = sbr.rel (0) target = $region25
    $region24: #{tpu_custom_call.1} parent=1 // pred_region
      %56 = vsyncadd [#allocation6], 0
      %s58 = sshll.u32 %s5, 4
      %s59 = int_to_ptr.hbm [resolvable:$true] %s58
      %s60 = sshll.u32 [#allocation7], 4
      %s61 = int_to_ptr.vmem [resolvable:$true] %s60
      %63 = dma.hbm_to_vmem [thread:$0]  %s59, 16, %s61, [#allocation6]
    $region25: #{tpu_custom_call.1} parent=1 // pred_fallthru
      _
    // Predicated region
    $region26: #{tpu_custom_call.1} parent=1 // pred_check
      _
    $region27: #{tpu_custom_call.1} parent=1 // pred_check_branch
      %65 = sbr.rel (0) target = $region29
    $region28: #{tpu_custom_call.1} parent=1 // pred_region
      %67 = vsyncadd [#allocation9], 0
      %s68 = sshll.u32 %s6, 4
      %s69 = int_to_ptr.hbm [resolvable:$true] %s68
      %s70 = sshll.u32 [#allocation8], 4
      %s71 = int_to_ptr.vmem [resolvable:$true] %s70
      %76 = dma.hbm_to_vmem [thread:$0]  %s69, 67584, %s71, [#allocation9], 256, 256, 16
    $region29: #{tpu_custom_call.1} parent=1 // pred_fallthru
      _
    // Predicated region
    $region30: #{tpu_custom_call.1} parent=1 // pred_check
      _
    $region31: #{tpu_custom_call.1} parent=1 // pred_check_branch
      %78 = sbr.rel (0) target = $region33
    $region32: #{tpu_custom_call.1} parent=1 // pred_region
      %80 = vsyncadd [#allocation9], 0
      %s82 = sshll.u32 %s7, 4
      %s83 = int_to_ptr.hbm [resolvable:$true] %s82
      %s84 = sshll.u32 [#allocation10], 4
      %s85 = int_to_ptr.vmem [resolvable:$true] %s84
      %87 = dma.hbm_to_vmem [thread:$0]  %s83, 64, %s85, [#allocation9]
    $region33: #{tpu_custom_call.1} parent=1 // pred_fallthru
      _
    // Predicated region
    $region34: #{tpu_custom_call.1} parent=1 // pred_check
      _
    $region35: #{tpu_custom_call.1} parent=1 // pred_check_branch
      %89 = sbr.rel (0) target = $region37
    $region36: #{tpu_custom_call.1} parent=1 // pred_region
      _
    $region37: #{tpu_custom_call.1} parent=1 // pred_fallthru
      _
    // Predicated region
    $region38: #{tpu_custom_call.1} parent=1 // pred_check
      _
    $region39: #{tpu_custom_call.1} parent=1 // pred_check_branch
      %91 = sbr.rel (0) target = $region41
    $region40: #{tpu_custom_call.1} parent=1 // pred_region
      %93 = vsyncadd [#allocation12], 0
      %s95 = sshll.u32 %s9, 4
      %s96 = int_to_ptr.hbm [resolvable:$true] %s95
      %s97 = sshll.u32 [#allocation11], 4
      %s98 = int_to_ptr.vmem [resolvable:$true] %s97
      %100 = dma.hbm_to_vmem [thread:$0]  %s96, 16, %s98, [#allocation12]
    $region41: #{tpu_custom_call.1} parent=1 // pred_fallthru
      _
    // Predicated region
    $region42: #{tpu_custom_call.1} parent=1 // pred_check
      _
    $region43: #{tpu_custom_call.1} parent=1 // pred_check_branch
      %102 = sbr.rel (0) target = $region45
    $region44: #{tpu_custom_call.1} parent=1 // pred_region
      %104 = vsyncadd [#allocation12], 0
      %s105 = sshll.u32 %s10, 4
      %s106 = int_to_ptr.hbm [resolvable:$true] %s105
      %s107 = sshll.u32 [#allocation13], 4
      %s108 = int_to_ptr.vmem [resolvable:$true] %s107
      %113 = dma.hbm_to_vmem [thread:$0]  %s106, 512, %s108, [#allocation12], 128, 128, 8
    $region45: #{tpu_custom_call.1} parent=1 // pred_fallthru
      _
    // Predicated region
    $region46: #{tpu_custom_call.1} parent=1 // pred_check
      _
    $region47: #{tpu_custom_call.1} parent=1 // pred_check_branch
      %115 = sbr.rel (0) target = $region49
    $region48: #{tpu_custom_call.1} parent=1 // pred_region
      %117 = vsyncadd [#allocation15], 0
      %s119 = sshll.u32 %s11, 4
      %s120 = int_to_ptr.hbm [resolvable:$true] %s119
      %s121 = sshll.u32 [#allocation14], 4
      %s122 = int_to_ptr.vmem [resolvable:$true] %s121
      %124 = dma.hbm_to_vmem [thread:$0]  %s120, 16, %s122, [#allocation15]
    $region49: #{tpu_custom_call.1} parent=1 // pred_fallthru
      _
    // Predicated region
    $region50: #{tpu_custom_call.1} parent=1 // pred_check
      _
    $region51: #{tpu_custom_call.1} parent=1 // pred_check_branch
      %126 = sbr.rel (0) target = $region53
    $region52: #{tpu_custom_call.1} parent=1 // pred_region
      %128 = dma.done [#allocation3], 256
    $region53: #{tpu_custom_call.1} parent=1 // pred_fallthru
      _
    // Predicated region
    $region54: #{tpu_custom_call.1} parent=1 // pred_check
      _
    $region55: #{tpu_custom_call.1} parent=1 // pred_check_branch
      %130 = sbr.rel (0) target = $region57
    $region56: #{tpu_custom_call.1} parent=1 // pred_region
      %132 = dma.done [#allocation6], 16
    $region57: #{tpu_custom_call.1} parent=1 // pred_fallthru
      _
    // Predicated region
    $region58: #{tpu_custom_call.1} parent=1 // pred_check
      _
    $region59: #{tpu_custom_call.1} parent=1 // pred_check_branch
      %134 = sbr.rel (0) target = $region61
    $region60: #{tpu_custom_call.1} parent=1 // pred_region
      %136 = dma.done [#allocation6], 16
    $region61: #{tpu_custom_call.1} parent=1 // pred_fallthru
      _
    // Predicated region
    $region62: #{tpu_custom_call.1} parent=1 // pred_check
      _
    $region63: #{tpu_custom_call.1} parent=1 // pred_check_branch
      %138 = sbr.rel (0) target = $region65
    $region64: #{tpu_custom_call.1} parent=1 // pred_region
      %140 = dma.done [#allocation9], 67584
    $region65: #{tpu_custom_call.1} parent=1 // pred_fallthru
      _
    // Predicated region
    $region66: #{tpu_custom_call.1} parent=1 // pred_check
      _
    $region67: #{tpu_custom_call.1} parent=1 // pred_check_branch
      %142 = sbr.rel (0) target = $region69
    $region68: #{tpu_custom_call.1} parent=1 // pred_region
      %144 = dma.done [#allocation9], 64
    $region69: #{tpu_custom_call.1} parent=1 // pred_fallthru
      _
    // Predicated region
    $region70: #{tpu_custom_call.1} parent=1 // pred_check
      _
    $region71: #{tpu_custom_call.1} parent=1 // pred_check_branch
      %146 = sbr.rel (0) target = $region73
    $region72: #{tpu_custom_call.1} parent=1 // pred_region
      %148 = dma.done [#allocation12], 16
    $region73: #{tpu_custom_call.1} parent=1 // pred_fallthru
      _
    // Predicated region
    $region74: #{tpu_custom_call.1} parent=1 // pred_check
      _
    $region75: #{tpu_custom_call.1} parent=1 // pred_check_branch
      %150 = sbr.rel (0) target = $region77
    $region76: #{tpu_custom_call.1} parent=1 // pred_region
      %152 = dma.done [#allocation12], 512
    $region77: #{tpu_custom_call.1} parent=1 // pred_fallthru
      _
    // Predicated region
    $region78: #{tpu_custom_call.1} parent=1 // pred_check
      _
    $region79: #{tpu_custom_call.1} parent=1 // pred_check_branch
      %154 = sbr.rel (0) target = $region81
    $region80: #{tpu_custom_call.1} parent=1 // pred_region
      %156 = dma.done [#allocation15], 16
    $region81: #{tpu_custom_call.1} parent=1 // pred_fallthru
      _
    %v158 = vld [vmem:[%s0] sm:$0xff]
    %v159 = vld [vmem:[%s0 + $0x8] sm:$0xff]
    %v160 = vld [vmem:[%s0 + $0x10] sm:$0xff]
    %v161 = vld [vmem:[%s0 + $0x18] sm:$0xff]
    %v162 = vld [vmem:[%s0 + $0x20] sm:$0xff]
    %v163 = vld [vmem:[%s0 + $0x28] sm:$0xff]
    %v164 = vld [vmem:[%s0 + $0x30] sm:$0xff]
    %v165 = vld [vmem:[%s0 + $0x38] sm:$0xff]
    %v166 = vld [vmem:[%s0 + $0x40] sm:$0xff]
    %v167 = vlaneseq
    %v168 = vand.u32 %v167, 127
    %169 = vset.pattern.permute.xlu0 0
    %170 = vperm.xlu0 %169, %v158
    %v171 = vpop.permute.xlu0 %170
    %172 = vset.pattern.permute.xlu0 0
    %173 = vperm.xlu0 %172, %v159
    %v174 = vpop.permute.xlu0 %173
    %175 = vset.pattern.permute.xlu0 0
    %176 = vperm.xlu0 %175, %v160
    %v177 = vpop.permute.xlu0 %176
    %178 = vset.pattern.permute.xlu0 0
    %179 = vperm.xlu0 %178, %v161
    %v180 = vpop.permute.xlu0 %179
    %181 = vset.pattern.permute.xlu0 0
    %182 = vperm.xlu0 %181, %v162
    %v183 = vpop.permute.xlu0 %182
    %184 = vset.pattern.permute.xlu0 0
    %185 = vperm.xlu0 %184, %v163
    %v186 = vpop.permute.xlu0 %185
    %187 = vset.pattern.permute.xlu0 0
    %188 = vperm.xlu0 %187, %v164
    %v189 = vpop.permute.xlu0 %188
    %190 = vset.pattern.permute.xlu0 0
    %191 = vperm.xlu0 %190, %v165
    %v192 = vpop.permute.xlu0 %191
    %193 = vset.pattern.permute.xlu0 0
    %194 = vperm.xlu0 %193, %v166
    %v195 = vpop.permute.xlu0 %194
    %vm196 = vcmp.eq.s32.totalorder %v171, %v168
    %vm197 = vcmp.eq.s32.totalorder %v174, %v168
    %vm198 = vcmp.eq.s32.totalorder %v177, %v168
    %vm199 = vcmp.eq.s32.totalorder %v180, %v168
    %vm200 = vcmp.eq.s32.totalorder %v183, %v168
    %vm201 = vcmp.eq.s32.totalorder %v186, %v168
    %vm202 = vcmp.eq.s32.totalorder %v189, %v168
    %vm203 = vcmp.eq.s32.totalorder %v192, %v168
    %vm204 = vcmp.eq.s32.totalorder %v195, %v168
    %v205 = vsel %vm196, 1, 0
    %v206 = vsel %vm197, 1, 0
    %v207 = vsel %vm198, 1, 0
    %v208 = vsel %vm199, 1, 0
    %v209 = vsel %vm200, 1, 0
    %v210 = vsel %vm201, 1, 0
    %v211 = vsel %vm202, 1, 0
    %v212 = vsel %vm203, 1, 0
    %v213 = vsel %vm204, 1, 0
    %v214 = vcvt.s32.f32 %v205
    %v215 = vcvt.s32.f32 %v206
    %v216 = vcvt.s32.f32 %v207
    %v217 = vcvt.s32.f32 %v208
    %v218 = vcvt.s32.f32 %v209
    %v219 = vcvt.s32.f32 %v210
    %v220 = vcvt.s32.f32 %v211
    %v221 = vcvt.s32.f32 %v212
    %v222 = vcvt.s32.f32 %v213
    %v224 = vrot.slane %v222, 6
    %vm234 = vcmask 1041408
    %v235 = vrot.slane %v214, 6
    %v236 = vrot.slane %v215, 6
    %v237 = vsel %vm234, %v235, %v236
    %v238 = vrot.slane %v216, 6
    %v239 = vsel %vm234, %v236, %v238
    %v240 = vrot.slane %v217, 6
    %v241 = vsel %vm234, %v238, %v240
    %v242 = vrot.slane %v218, 6
    %v243 = vsel %vm234, %v240, %v242
    %v244 = vrot.slane %v219, 6
    %v245 = vsel %vm234, %v242, %v244
    %v246 = vrot.slane %v220, 6
    %v247 = vsel %vm234, %v244, %v246
    %v248 = vrot.slane %v221, 6
    %v249 = vsel %vm234, %v246, %v248
    %v250 = vsel %vm234, %v248, %v224
    %v260 = vsel %vm234, %v224, %v235
    %vm261 = vcmask 1045504
    %v262 = vrot.slane %v214, 2
    %v263 = vrot.slane %v215, 2
    %v264 = vsel %vm261, %v262, %v263
    %v265 = vrot.slane %v216, 2
    %v266 = vsel %vm261, %v263, %v265
    %v267 = vrot.slane %v217, 2
    %v268 = vsel %vm261, %v265, %v267
    %v269 = vrot.slane %v218, 2
    %v270 = vsel %vm261, %v267, %v269
    %v271 = vrot.slane %v219, 2
    %v272 = vsel %vm261, %v269, %v271
    %v273 = vrot.slane %v220, 2
    %v274 = vsel %vm261, %v271, %v273
    %v275 = vrot.slane %v221, 2
    %v276 = vsel %vm261, %v273, %v275
    %v277 = vrot.slane %v222, 2
    %v278 = vsel %vm261, %v275, %v277
    %v281 = vsel %vm261, %v277, %v262
    %282 = vrot.lane.b32.xlu0 %v214, 4
    %v283 = vpop.permute.xlu0 %282
    %284 = vrot.lane.b32.xlu0 %v215, 4
    %v285 = vpop.permute.xlu0 %284
    %286 = vrot.lane.b32.xlu0 %v216, 4
    %v287 = vpop.permute.xlu0 %286
    %288 = vrot.lane.b32.xlu0 %v217, 4
    %v289 = vpop.permute.xlu0 %288
    %290 = vrot.lane.b32.xlu0 %v218, 4
    %v291 = vpop.permute.xlu0 %290
    %292 = vrot.lane.b32.xlu0 %v219, 4
    %v293 = vpop.permute.xlu0 %292
    %294 = vrot.lane.b32.xlu0 %v220, 4
    %v295 = vpop.permute.xlu0 %294
    %296 = vrot.lane.b32.xlu0 %v221, 4
    %v297 = vpop.permute.xlu0 %296
    %298 = vrot.lane.b32.xlu0 %v222, 4
    %v299 = vpop.permute.xlu0 %298
    %310 = vrot.lane.b32.xlu0 %v264, 8
    %v311 = vpop.permute.xlu0 %310
    %312 = vrot.lane.b32.xlu0 %v266, 8
    %v313 = vpop.permute.xlu0 %312
    %314 = vrot.lane.b32.xlu0 %v268, 8
    %v315 = vpop.permute.xlu0 %314
    %316 = vrot.lane.b32.xlu0 %v270, 8
    %v317 = vpop.permute.xlu0 %316
    %318 = vrot.lane.b32.xlu0 %v272, 8
    %v319 = vpop.permute.xlu0 %318
    %320 = vrot.lane.b32.xlu0 %v274, 8
    %v321 = vpop.permute.xlu0 %320
    %322 = vrot.lane.b32.xlu0 %v276, 8
    %v323 = vpop.permute.xlu0 %322
    %324 = vrot.lane.b32.xlu0 %v278, 8
    %v325 = vpop.permute.xlu0 %324
    %326 = vrot.lane.b32.xlu0 %v281, 8
    %v327 = vpop.permute.xlu0 %326
    %vm337 = vcmask 31744
    %v338 = vsel %vm337, %v260, %v283
    %v339 = vsel %vm337, %v237, %v285
    %v340 = vsel %vm337, %v239, %v287
    %v341 = vsel %vm337, %v241, %v289
    %v342 = vsel %vm337, %v243, %v291
    %v343 = vsel %vm337, %v245, %v293
    %v344 = vsel %vm337, %v247, %v295
    %v345 = vsel %vm337, %v249, %v297
    %v346 = vsel %vm337, %v250, %v299
    %vm347 = vcmask 64512
    %v348 = vsel %vm347, %v338, %v311
    %v349 = vsel %vm347, %v339, %v313
    %v350 = vsel %vm347, %v340, %v315
    %v351 = vsel %vm347, %v341, %v317
    %v352 = vsel %vm347, %v342, %v319
    %v353 = vsel %vm347, %v343, %v321
    %v354 = vsel %vm347, %v344, %v323
    %v355 = vsel %vm347, %v345, %v325
    %v356 = vsel %vm347, %v346, %v327
    %v357 = vld [vmem:[#allocation2] sm:$0xff]
    %v358 = vld [vmem:[#allocation2 + $0x8] sm:$0xf]
    %v359 = vld [vmem:[#allocation5] sm:$0x1]
    %v361 = vperm.slane %v359, 0
    %vm363 = vcmask 97280
    %v365 = vsel %vm363, %v348, 0
    %v368 = vsel %vm363, %v349, 0
    %v371 = vsel %vm363, %v350, 0
    %v374 = vsel %vm363, %v351, 0
    %v377 = vsel %vm363, %v352, 0
    %v380 = vsel %vm363, %v353, 0
    %v383 = vsel %vm363, %v354, 0
    %v386 = vsel %vm363, %v355, 0
    %v389 = vsel %vm363, %v356, 0
    %vm391 = vcmask 1043456
    %v393 = vsel %vm391, %v358, 0
    %395 = vmatpush.msra.mxu0 0.0
    %396 = vmatpush.msra.mxu0 0.0
    %397 = vmatpush.msra.mxu0 0.0
    %398 = vmatpush.msra.mxu0 0.0
    %399 = vmatpush.msra.mxu0 0.0
    %400 = vmatpush.msra.mxu0 0.0
    %401 = vmatpush.msra.mxu0 0.0
    %402 = vmatpush.msra.mxu0 0.0
    %403 = vmatpush.msra.mxu0 0.0
    %404 = vmatpush.msra.mxu0 0.0
    %405 = vmatpush.msra.mxu0 0.0
    %406 = vmatpush.msra.mxu0 0.0
    %407 = vmatpush.msra.mxu0 0.0
    %408 = vmatpush.msra.mxu0 0.0
    %409 = vmatpush.msra.mxu0 %v393
    %410 = vmatpush.msra.mxu0 %v357
    %411 = vmatmul.f32.gmra.mxu0 %v365
    %v412 = vpop.f32.mrf.mxu0
    %v413 = vadd.f32 %v361, %v412
    %414 = vmatmul.f32.gmra.mxu0 %v368
    %v415 = vpop.f32.mrf.mxu0
    %v416 = vadd.f32 %v361, %v415
    %417 = vmatmul.f32.gmra.mxu0 %v371
    %v418 = vpop.f32.mrf.mxu0
    %v419 = vadd.f32 %v361, %v418
    %420 = vmatmul.f32.gmra.mxu0 %v374
    %v421 = vpop.f32.mrf.mxu0
    %v422 = vadd.f32 %v361, %v421
    %423 = vmatmul.f32.gmra.mxu0 %v377
    %v424 = vpop.f32.mrf.mxu0
    %v425 = vadd.f32 %v361, %v424
    %426 = vmatmul.f32.gmra.mxu0 %v380
    %v427 = vpop.f32.mrf.mxu0
    %v428 = vadd.f32 %v361, %v427
    %429 = vmatmul.f32.gmra.mxu0 %v383
    %v430 = vpop.f32.mrf.mxu0
    %v431 = vadd.f32 %v361, %v430
    %432 = vmatmul.f32.gmra.mxu0 %v386
    %v433 = vpop.f32.mrf.mxu0
    %v434 = vadd.f32 %v361, %v433
    %435 = vmatmul.f32.gmra.mxu0 %v389
    %v436 = vpop.f32.mrf.mxu0
    %v437 = vadd.f32 %v361, %v436
    %438 = vdwg.mxu0
    %v439 = vmax.f32 %v413, 0.0
    %v440 = vmax.f32 %v416, 0.0
    %v441 = vmax.f32 %v419, 0.0
    %v442 = vmax.f32 %v422, 0.0
    %v443 = vmax.f32 %v425, 0.0
    %v444 = vmax.f32 %v428, 0.0
    %v445 = vmax.f32 %v431, 0.0
    %v446 = vmax.f32 %v434, 0.0
    %v447 = vmax.f32 %v437, 0.0
    %v448 = vld [vmem:[%s1] sm:$0xff]
    %v449 = vld [vmem:[%s1 + $0x8] sm:$0xff]
    %v450 = vld [vmem:[%s1 + $0x10] sm:$0xff]
    %v451 = vld [vmem:[%s1 + $0x18] sm:$0xff]
    %v452 = vld [vmem:[%s1 + $0x20] sm:$0xff]
    %v453 = vld [vmem:[%s1 + $0x28] sm:$0xff]
    %v454 = vld [vmem:[%s1 + $0x30] sm:$0xff]
    %v455 = vld [vmem:[%s1 + $0x38] sm:$0xff]
    %v456 = vld [vmem:[%s1 + $0x40] sm:$0xff]
    %458 = vset.pattern.permute.xlu0 0
    %459 = vperm.xlu0 %458, %v448
    %v460 = vpop.permute.xlu0 %459
    %463 = vset.pattern.permute.xlu0 0
    %464 = vperm.xlu0 %463, %v449
    %v465 = vpop.permute.xlu0 %464
    %468 = vset.pattern.permute.xlu0 0
    %469 = vperm.xlu0 %468, %v450
    %v470 = vpop.permute.xlu0 %469
    %473 = vset.pattern.permute.xlu0 0
    %474 = vperm.xlu0 %473, %v451
    %v475 = vpop.permute.xlu0 %474
    %478 = vset.pattern.permute.xlu0 0
    %479 = vperm.xlu0 %478, %v452
    %v480 = vpop.permute.xlu0 %479
    %483 = vset.pattern.permute.xlu0 0
    %484 = vperm.xlu0 %483, %v453
    %v485 = vpop.permute.xlu0 %484
    %488 = vset.pattern.permute.xlu0 0
    %489 = vperm.xlu0 %488, %v454
    %v490 = vpop.permute.xlu0 %489
    %493 = vset.pattern.permute.xlu0 0
    %494 = vperm.xlu0 %493, %v455
    %v495 = vpop.permute.xlu0 %494
    %498 = vset.pattern.permute.xlu0 0
    %499 = vperm.xlu0 %498, %v456
    %v500 = vpop.permute.xlu0 %499
    %v502 = vmul.f32 %v439, %v460
    %v503 = vmul.f32 %v440, %v465
    %v504 = vmul.f32 %v441, %v470
    %v505 = vmul.f32 %v442, %v475
    %v506 = vmul.f32 %v443, %v480
    %v507 = vmul.f32 %v444, %v485
    %v508 = vmul.f32 %v445, %v490
    %v509 = vmul.f32 %v446, %v495
    %v510 = vmul.f32 %v447, %v500
    %v512 = vrot.slane %v510, 6
    %v522 = vrot.slane %v502, 6
    %v523 = vrot.slane %v503, 6
    %v524 = vsel %vm234, %v522, %v523
    %v525 = vrot.slane %v504, 6
    %v526 = vsel %vm234, %v523, %v525
    %v527 = vrot.slane %v505, 6
    %v528 = vsel %vm234, %v525, %v527
    %v529 = vrot.slane %v506, 6
    %v530 = vsel %vm234, %v527, %v529
    %v531 = vrot.slane %v507, 6
    %v532 = vsel %vm234, %v529, %v531
    %v533 = vrot.slane %v508, 6
    %v534 = vsel %vm234, %v531, %v533
    %v535 = vrot.slane %v509, 6
    %v536 = vsel %vm234, %v533, %v535
    %v537 = vsel %vm234, %v535, %v512
    %v547 = vsel %vm234, %v512, %v522
    %v548 = vrot.slane %v502, 2
    %v549 = vrot.slane %v503, 2
    %v550 = vsel %vm261, %v548, %v549
    %v551 = vrot.slane %v504, 2
    %v552 = vsel %vm261, %v549, %v551
    %v553 = vrot.slane %v505, 2
    %v554 = vsel %vm261, %v551, %v553
    %v555 = vrot.slane %v506, 2
    %v556 = vsel %vm261, %v553, %v555
    %v557 = vrot.slane %v507, 2
    %v558 = vsel %vm261, %v555, %v557
    %v559 = vrot.slane %v508, 2
    %v560 = vsel %vm261, %v557, %v559
    %v561 = vrot.slane %v509, 2
    %v562 = vsel %vm261, %v559, %v561
    %v563 = vrot.slane %v510, 2
    %v564 = vsel %vm261, %v561, %v563
    %v567 = vsel %vm261, %v563, %v548
    %568 = vrot.lane.b32.xlu0 %v502, 32
    %v569 = vpop.permute.xlu0 %568
    %570 = vrot.lane.b32.xlu0 %v503, 32
    %v571 = vpop.permute.xlu0 %570
    %572 = vrot.lane.b32.xlu0 %v504, 32
    %v573 = vpop.permute.xlu0 %572
    %574 = vrot.lane.b32.xlu0 %v505, 32
    %v575 = vpop.permute.xlu0 %574
    %576 = vrot.lane.b32.xlu0 %v506, 32
    %v577 = vpop.permute.xlu0 %576
    %578 = vrot.lane.b32.xlu0 %v507, 32
    %v579 = vpop.permute.xlu0 %578
    %580 = vrot.lane.b32.xlu0 %v508, 32
    %v581 = vpop.permute.xlu0 %580
    %582 = vrot.lane.b32.xlu0 %v509, 32
    %v583 = vpop.permute.xlu0 %582
    %584 = vrot.lane.b32.xlu0 %v510, 32
    %v585 = vpop.permute.xlu0 %584
    %596 = vrot.lane.b32.xlu0 %v550, 64
    %v597 = vpop.permute.xlu0 %596
    %598 = vrot.lane.b32.xlu0 %v552, 64
    %v599 = vpop.permute.xlu0 %598
    %600 = vrot.lane.b32.xlu0 %v554, 64
    %v601 = vpop.permute.xlu0 %600
    %602 = vrot.lane.b32.xlu0 %v556, 64
    %v603 = vpop.permute.xlu0 %602
    %604 = vrot.lane.b32.xlu0 %v558, 64
    %v605 = vpop.permute.xlu0 %604
    %606 = vrot.lane.b32.xlu0 %v560, 64
    %v607 = vpop.permute.xlu0 %606
    %608 = vrot.lane.b32.xlu0 %v562, 64
    %v609 = vpop.permute.xlu0 %608
    %610 = vrot.lane.b32.xlu0 %v564, 64
    %v611 = vpop.permute.xlu0 %610
    %612 = vrot.lane.b32.xlu0 %v567, 64
    %v613 = vpop.permute.xlu0 %612
    %vm623 = vcmask 261120
    %v624 = vsel %vm623, %v547, %v569
    %v625 = vsel %vm623, %v524, %v571
    %v626 = vsel %vm623, %v526, %v573
    %v627 = vsel %vm623, %v528, %v575
    %v628 = vsel %vm623, %v530, %v577
    %v629 = vsel %vm623, %v532, %v579
    %v630 = vsel %vm623, %v534, %v581
    %v631 = vsel %vm623, %v536, %v583
    %v632 = vsel %vm623, %v537, %v585
    %vm633 = vcmask 523264
    %v634 = vsel %vm633, %v624, %v597
    %v635 = vsel %vm633, %v625, %v599
    %v636 = vsel %vm633, %v626, %v601
    %v637 = vsel %vm633, %v627, %v603
    %v638 = vsel %vm633, %v628, %v605
    %v639 = vsel %vm633, %v629, %v607
    %v640 = vsel %vm633, %v630, %v609
    %v641 = vsel %vm633, %v631, %v611
    %v642 = vsel %vm633, %v632, %v613
    %v643 = vld [vmem:[%s4] sm:$0xff]
    %v644 = vld [vmem:[%s4 + $0x8] sm:$0xff]
    %v645 = vld [vmem:[%s4 + $0x10] sm:$0xff]
    %v646 = vld [vmem:[%s4 + $0x18] sm:$0xff]
    %v647 = vld [vmem:[%s4 + $0x20] sm:$0xff]
    %v648 = vld [vmem:[%s4 + $0x28] sm:$0xff]
    %v649 = vld [vmem:[%s4 + $0x30] sm:$0xff]
    %v650 = vld [vmem:[%s4 + $0x38] sm:$0xff]
    %v651 = vld [vmem:[%s4 + $0x40] sm:$0xff]
    %v652 = vld [vmem:[%s4 + $0x48] sm:$0xff]
    %v653 = vld [vmem:[%s4 + $0x50] sm:$0xff]
    %v654 = vld [vmem:[%s4 + $0x58] sm:$0xff]
    %v655 = vld [vmem:[#allocation7] sm:$0x1]
    %v657 = vperm.slane %v655, 0
    %vm659 = vcmask 785408
    %v661 = vsel %vm659, %v634, 0
    %v664 = vsel %vm659, %v635, 0
    %v667 = vsel %vm659, %v636, 0
    %v670 = vsel %vm659, %v637, 0
    %v673 = vsel %vm659, %v638, 0
    %v676 = vsel %vm659, %v639, 0
    %v679 = vsel %vm659, %v640, 0
    %v682 = vsel %vm659, %v641, 0
    %v685 = vsel %vm659, %v642, 0
    %687 = vmatpush.msra.mxu0 0.0
    %688 = vmatpush.msra.mxu0 0.0
    %689 = vmatpush.msra.mxu0 0.0
    %690 = vmatpush.msra.mxu0 0.0
    %691 = vmatpush.msra.mxu0 %v654
    %692 = vmatpush.msra.mxu0 %v653
    %693 = vmatpush.msra.mxu0 %v652
    %694 = vmatpush.msra.mxu0 %v651
    %695 = vmatpush.msra.mxu0 %v650
    %696 = vmatpush.msra.mxu0 %v649
    %697 = vmatpush.msra.mxu0 %v648
    %698 = vmatpush.msra.mxu0 %v647
    %699 = vmatpush.msra.mxu0 %v646
    %700 = vmatpush.msra.mxu0 %v645
    %701 = vmatpush.msra.mxu0 %v644
    %702 = vmatpush.msra.mxu0 %v643
    %703 = vmatmul.f32.gmra.mxu0 %v661
    %v704 = vpop.f32.mrf.mxu0
    %v705 = vadd.f32 %v657, %v704
    %706 = vmatmul.f32.gmra.mxu0 %v664
    %v707 = vpop.f32.mrf.mxu0
    %v708 = vadd.f32 %v657, %v707
    %709 = vmatmul.f32.gmra.mxu0 %v667
    %v710 = vpop.f32.mrf.mxu0
    %v711 = vadd.f32 %v657, %v710
    %712 = vmatmul.f32.gmra.mxu0 %v670
    %v713 = vpop.f32.mrf.mxu0
    %v714 = vadd.f32 %v657, %v713
    %715 = vmatmul.f32.gmra.mxu0 %v673
    %v716 = vpop.f32.mrf.mxu0
    %v717 = vadd.f32 %v657, %v716
    %718 = vmatmul.f32.gmra.mxu0 %v676
    %v719 = vpop.f32.mrf.mxu0
    %v720 = vadd.f32 %v657, %v719
    %721 = vmatmul.f32.gmra.mxu0 %v679
    %v722 = vpop.f32.mrf.mxu0
    %v723 = vadd.f32 %v657, %v722
    %724 = vmatmul.f32.gmra.mxu0 %v682
    %v725 = vpop.f32.mrf.mxu0
    %v726 = vadd.f32 %v657, %v725
    %727 = vmatmul.f32.gmra.mxu0 %v685
    %v728 = vpop.f32.mrf.mxu0
    %v729 = vadd.f32 %v657, %v728
    %730 = vdwg.mxu0
    %v731 = vmax.f32 %v705, 0.0
    %v732 = vmax.f32 %v708, 0.0
    %v733 = vmax.f32 %v711, 0.0
    %v734 = vmax.f32 %v714, 0.0
    %v735 = vmax.f32 %v717, 0.0
    %v736 = vmax.f32 %v720, 0.0
    %v737 = vmax.f32 %v723, 0.0
    %v738 = vmax.f32 %v726, 0.0
    %v739 = vmax.f32 %v729, 0.0
    %v741 = vrot.slane %v731, 2
    %742 = vrot.lane.b32.xlu0 %v741, 64
    %v743 = vpop.permute.xlu0 %742
    %v745 = vrot.slane %v731, 4
    %v748 = vrot.slane %v732, 6
    %749 = vrot.lane.b32.xlu0 %v748, 64
    %v750 = vpop.permute.xlu0 %749
    %v752 = vrot.slane %v732, 2
    %753 = vrot.lane.b32.xlu0 %v752, 64
    %v754 = vpop.permute.xlu0 %753
    %v756 = vrot.slane %v732, 4
    %v759 = vrot.slane %v733, 6
    %760 = vrot.lane.b32.xlu0 %v759, 64
    %v761 = vpop.permute.xlu0 %760
    %v763 = vrot.slane %v733, 2
    %764 = vrot.lane.b32.xlu0 %v763, 64
    %v765 = vpop.permute.xlu0 %764
    %v767 = vrot.slane %v733, 4
    %v770 = vrot.slane %v734, 6
    %771 = vrot.lane.b32.xlu0 %v770, 64
    %v772 = vpop.permute.xlu0 %771
    %v774 = vrot.slane %v734, 2
    %775 = vrot.lane.b32.xlu0 %v774, 64
    %v776 = vpop.permute.xlu0 %775
    %v778 = vrot.slane %v734, 4
    %v781 = vrot.slane %v735, 6
    %782 = vrot.lane.b32.xlu0 %v781, 64
    %v783 = vpop.permute.xlu0 %782
    %v785 = vsel %vm633, %v731, %v743
    %v786 = vsel %vm633, %v745, %v750
    %v787 = vsel %vm633, %v732, %v754
    %v788 = vsel %vm633, %v756, %v761
    %v789 = vsel %vm633, %v733, %v765
    %v790 = vsel %vm633, %v767, %v772
    %v791 = vsel %vm633, %v734, %v776
    %v792 = vsel %vm633, %v778, %v783
    %v793 = vrot.slane %v735, 2
    %794 = vrot.lane.b32.xlu0 %v793, 64
    %v795 = vpop.permute.xlu0 %794
    %v797 = vrot.slane %v735, 4
    %v800 = vrot.slane %v736, 6
    %801 = vrot.lane.b32.xlu0 %v800, 64
    %v802 = vpop.permute.xlu0 %801
    %v804 = vrot.slane %v736, 2
    %805 = vrot.lane.b32.xlu0 %v804, 64
    %v806 = vpop.permute.xlu0 %805
    %v808 = vrot.slane %v736, 4
    %v811 = vrot.slane %v737, 6
    %812 = vrot.lane.b32.xlu0 %v811, 64
    %v813 = vpop.permute.xlu0 %812
    %v815 = vrot.slane %v737, 2
    %816 = vrot.lane.b32.xlu0 %v815, 64
    %v817 = vpop.permute.xlu0 %816
    %v819 = vrot.slane %v737, 4
    %v822 = vrot.slane %v738, 6
    %823 = vrot.lane.b32.xlu0 %v822, 64
    %v824 = vpop.permute.xlu0 %823
    %v826 = vrot.slane %v738, 2
    %827 = vrot.lane.b32.xlu0 %v826, 64
    %v828 = vpop.permute.xlu0 %827
    %v830 = vrot.slane %v738, 4
    %v833 = vrot.slane %v739, 6
    %834 = vrot.lane.b32.xlu0 %v833, 64
    %v835 = vpop.permute.xlu0 %834
    %v837 = vsel %vm633, %v735, %v795
    %v838 = vsel %vm633, %v797, %v802
    %v839 = vsel %vm633, %v736, %v806
    %v840 = vsel %vm633, %v808, %v813
    %v841 = vsel %vm633, %v737, %v817
    %v842 = vsel %vm633, %v819, %v824
    %v843 = vsel %vm633, %v738, %v828
    %v844 = vsel %vm633, %v830, %v835
    %v845 = vpack.c.bf16 %v785, %v785
    %v846 = vpack.c.bf16 %v786, %v786
    %v847 = vpack.c.bf16 %v787, %v787
    %v848 = vpack.c.bf16 %v788, %v788
    %v849 = vpack.c.bf16 %v789, %v789
    %v850 = vpack.c.bf16 %v790, %v790
    %v851 = vpack.c.bf16 %v791, %v791
    %v852 = vpack.c.bf16 %v792, %v792
    %v853 = vpack.c.bf16 %v837, %v837
    %v854 = vpack.c.bf16 %v838, %v838
    %v855 = vpack.c.bf16 %v839, %v839
    %v856 = vpack.c.bf16 %v840, %v840
    %v857 = vpack.c.bf16 %v841, %v841
    %v858 = vpack.c.bf16 %v842, %v842
    %v859 = vpack.c.bf16 %v843, %v843
    %v860 = vpack.c.bf16 %v844, %v844
    %v861 = vpack.c.bf16 %v739, %v739
    %v862 = vld [vmem:[#allocation8] sm:$0xff]
    %v863 = vld [vmem:[#allocation8 + $0x8] sm:$0xff]
    %v864 = vld [vmem:[#allocation8 + $0x10] sm:$0xff]
    %v865 = vld [vmem:[#allocation8 + $0x18] sm:$0xff]
    %v866 = vld [vmem:[#allocation8 + $0x20] sm:$0xff]
    %v867 = vld [vmem:[#allocation8 + $0x28] sm:$0xff]
    %v868 = vld [vmem:[#allocation8 + $0x30] sm:$0xff]
    %v869 = vld [vmem:[#allocation8 + $0x38] sm:$0xff]
    %v870 = vld [vmem:[#allocation8 + $0x40] sm:$0xff]
    %v871 = vld [vmem:[#allocation8 + $0x48] sm:$0xff]
    %v872 = vld [vmem:[#allocation8 + $0x50] sm:$0xff]
    %v873 = vld [vmem:[#allocation8 + $0x58] sm:$0xff]
    %v874 = vld [vmem:[#allocation8 + $0x60] sm:$0xff]
    %v875 = vld [vmem:[#allocation8 + $0x68] sm:$0xff]
    %v876 = vld [vmem:[#allocation8 + $0x70] sm:$0xff]
    %v877 = vld [vmem:[#allocation8 + $0x78] sm:$0xff]
    %v878 = vld [vmem:[#allocation8 + $0x80] sm:$0xff]
    %v879 = vld [vmem:[#allocation8 + $0x88] sm:$0xff]
    %v880 = vld [vmem:[#allocation8 + $0x90] sm:$0xff]
    %v881 = vld [vmem:[#allocation8 + $0x98] sm:$0xff]
    %v882 = vld [vmem:[#allocation8 + $0xa0] sm:$0xff]
    %v883 = vld [vmem:[#allocation8 + $0xa8] sm:$0xff]
    %v884 = vld [vmem:[#allocation8 + $0xb0] sm:$0xff]
    %v885 = vld [vmem:[#allocation8 + $0xb8] sm:$0xff]
    %v886 = vld [vmem:[#allocation8 + $0xc0] sm:$0xff]
    %v887 = vld [vmem:[#allocation8 + $0xc8] sm:$0xff]
    %v888 = vld [vmem:[#allocation8 + $0xd0] sm:$0xff]
    %v889 = vld [vmem:[#allocation8 + $0xd8] sm:$0xff]
    %v890 = vld [vmem:[#allocation8 + $0xe0] sm:$0xff]
    %v891 = vld [vmem:[#allocation8 + $0xe8] sm:$0xff]
    %v892 = vld [vmem:[#allocation8 + $0xf0] sm:$0xff]
    %v893 = vld [vmem:[#allocation8 + $0xf8] sm:$0xff]
    %v894 = vld [vmem:[#allocation8 + $0x100] sm:$0xff]
    %v895 = vld [vmem:[#allocation8 + $0x108] sm:$0xff]
    %v896 = vld [vmem:[#allocation8 + $0x110] sm:$0xff]
    %v897 = vld [vmem:[#allocation8 + $0x118] sm:$0xff]
    %v898 = vld [vmem:[#allocation8 + $0x120] sm:$0xff]
    %v899 = vld [vmem:[#allocation8 + $0x128] sm:$0xff]
    %v900 = vld [vmem:[#allocation8 + $0x130] sm:$0xff]
    %v901 = vld [vmem:[#allocation8 + $0x138] sm:$0xff]
    %v902 = vld [vmem:[#allocation8 + $0x140] sm:$0xff]
    %v903 = vld [vmem:[#allocation8 + $0x148] sm:$0xff]
    %v904 = vld [vmem:[#allocation8 + $0x150] sm:$0xff]
    %v905 = vld [vmem:[#allocation8 + $0x158] sm:$0xff]
    %v906 = vld [vmem:[#allocation8 + $0x160] sm:$0xff]
    %v907 = vld [vmem:[#allocation8 + $0x168] sm:$0xff]
    %v908 = vld [vmem:[#allocation8 + $0x170] sm:$0xff]
    %v909 = vld [vmem:[#allocation8 + $0x178] sm:$0xff]
    %v910 = vld [vmem:[#allocation8 + $0x180] sm:$0xff]
    %v911 = vld [vmem:[#allocation8 + $0x188] sm:$0xff]
    %v912 = vld [vmem:[#allocation8 + $0x190] sm:$0xff]
    %v913 = vld [vmem:[#allocation8 + $0x198] sm:$0xff]
    %v914 = vld [vmem:[#allocation8 + $0x1a0] sm:$0xff]
    %v915 = vld [vmem:[#allocation8 + $0x1a8] sm:$0xff]
    %v916 = vld [vmem:[#allocation8 + $0x1b0] sm:$0xff]
    %v917 = vld [vmem:[#allocation8 + $0x1b8] sm:$0xff]
    %v918 = vld [vmem:[#allocation8 + $0x1c0] sm:$0xff]
    %v919 = vld [vmem:[#allocation8 + $0x1c8] sm:$0xff]
    %v920 = vld [vmem:[#allocation8 + $0x1d0] sm:$0xff]
    %v921 = vld [vmem:[#allocation8 + $0x1d8] sm:$0xff]
    %v922 = vld [vmem:[#allocation8 + $0x1e0] sm:$0xff]
    %v923 = vld [vmem:[#allocation8 + $0x1e8] sm:$0xff]
    %v924 = vld [vmem:[#allocation8 + $0x1f0] sm:$0xff]
    %v925 = vld [vmem:[#allocation8 + $0x1f8] sm:$0xff]
    %v926 = vld [vmem:[#allocation8 + $0x200] sm:$0xff]
    %v927 = vld [vmem:[#allocation8 + $0x208] sm:$0xff]
    %v928 = vld [vmem:[#allocation8 + $0x210] sm:$0xff]
    %v929 = vld [vmem:[#allocation8 + $0x218] sm:$0xff]
    %v930 = vld [vmem:[#allocation8 + $0x220] sm:$0xff]
    %v931 = vld [vmem:[#allocation8 + $0x228] sm:$0xff]
    %v932 = vld [vmem:[#allocation8 + $0x230] sm:$0xff]
    %v933 = vld [vmem:[#allocation8 + $0x238] sm:$0xff]
    %v934 = vld [vmem:[#allocation8 + $0x240] sm:$0xff]
    %v935 = vld [vmem:[#allocation8 + $0x248] sm:$0xff]
    %v936 = vld [vmem:[#allocation8 + $0x250] sm:$0xff]
    %v937 = vld [vmem:[#allocation8 + $0x258] sm:$0xff]
    %v938 = vld [vmem:[#allocation8 + $0x260] sm:$0xff]
    %v939 = vld [vmem:[#allocation8 + $0x268] sm:$0xff]
    %v940 = vld [vmem:[#allocation8 + $0x270] sm:$0xff]
    %v941 = vld [vmem:[#allocation8 + $0x278] sm:$0xff]
    %v942 = vld [vmem:[#allocation8 + $0x280] sm:$0xff]
    %v943 = vld [vmem:[#allocation8 + $0x288] sm:$0xff]
    %v944 = vld [vmem:[#allocation8 + $0x290] sm:$0xff]
    %v945 = vld [vmem:[#allocation8 + $0x298] sm:$0xff]
    %v946 = vld [vmem:[#allocation8 + $0x2a0] sm:$0xff]
    %v947 = vld [vmem:[#allocation8 + $0x2a8] sm:$0xff]
    %v948 = vld [vmem:[#allocation8 + $0x2b0] sm:$0xff]
    %v949 = vld [vmem:[#allocation8 + $0x2b8] sm:$0xff]
    %v950 = vld [vmem:[#allocation8 + $0x2c0] sm:$0xff]
    %v951 = vld [vmem:[#allocation8 + $0x2c8] sm:$0xff]
    %v952 = vld [vmem:[#allocation8 + $0x2d0] sm:$0xff]
    %v953 = vld [vmem:[#allocation8 + $0x2d8] sm:$0xff]
    %v954 = vld [vmem:[#allocation8 + $0x2e0] sm:$0xff]
    %v955 = vld [vmem:[#allocation8 + $0x2e8] sm:$0xff]
    %v956 = vld [vmem:[#allocation8 + $0x2f0] sm:$0xff]
    %v957 = vld [vmem:[#allocation8 + $0x2f8] sm:$0xff]
    %v958 = vld [vmem:[#allocation8 + $0x300] sm:$0xff]
    %v959 = vld [vmem:[#allocation8 + $0x308] sm:$0xff]
    %v960 = vld [vmem:[#allocation8 + $0x310] sm:$0xff]
    %v961 = vld [vmem:[#allocation8 + $0x318] sm:$0xff]
    %v962 = vld [vmem:[#allocation8 + $0x320] sm:$0xff]
    %v963 = vld [vmem:[#allocation8 + $0x328] sm:$0xff]
    %v964 = vld [vmem:[#allocation8 + $0x330] sm:$0xff]
    %v965 = vld [vmem:[#allocation8 + $0x338] sm:$0xff]
    %v966 = vld [vmem:[#allocation8 + $0x340] sm:$0xff]
    %v967 = vld [vmem:[#allocation8 + $0x348] sm:$0xff]
    %v968 = vld [vmem:[#allocation8 + $0x350] sm:$0xff]
    %v969 = vld [vmem:[#allocation8 + $0x358] sm:$0xff]
    %v970 = vld [vmem:[#allocation8 + $0x360] sm:$0xff]
    %v971 = vld [vmem:[#allocation8 + $0x368] sm:$0xff]
    %v972 = vld [vmem:[#allocation8 + $0x370] sm:$0xff]
    %v973 = vld [vmem:[#allocation8 + $0x378] sm:$0xff]
    %v974 = vld [vmem:[#allocation8 + $0x380] sm:$0xff]
    %v975 = vld [vmem:[#allocation8 + $0x388] sm:$0xff]
    %v976 = vld [vmem:[#allocation8 + $0x390] sm:$0xff]
    %v977 = vld [vmem:[#allocation8 + $0x398] sm:$0xff]
    %v978 = vld [vmem:[#allocation8 + $0x3a0] sm:$0xff]
    %v979 = vld [vmem:[#allocation8 + $0x3a8] sm:$0xff]
    %v980 = vld [vmem:[#allocation8 + $0x3b0] sm:$0xff]
    %v981 = vld [vmem:[#allocation8 + $0x3b8] sm:$0xff]
    %v982 = vld [vmem:[#allocation8 + $0x3c0] sm:$0xff]
    %v983 = vld [vmem:[#allocation8 + $0x3c8] sm:$0xff]
    %v984 = vld [vmem:[#allocation8 + $0x3d0] sm:$0xff]
    %v985 = vld [vmem:[#allocation8 + $0x3d8] sm:$0xff]
    %v986 = vld [vmem:[#allocation8 + $0x3e0] sm:$0xff]
    %v987 = vld [vmem:[#allocation8 + $0x3e8] sm:$0xff]
    %v988 = vld [vmem:[#allocation8 + $0x3f0] sm:$0xff]
    %v989 = vld [vmem:[#allocation8 + $0x3f8] sm:$0xff]
    %v990 = vld [vmem:[#allocation8 + $0x400] sm:$0xff]
    %v991 = vld [vmem:[#allocation8 + $0x408] sm:$0xff]
    %v992 = vld [vmem:[#allocation8 + $0x410] sm:$0xff]
    %v993 = vld [vmem:[#allocation8 + $0x418] sm:$0xff]
    %v994 = vld [vmem:[#allocation8 + $0x420] sm:$0xff]
    %v995 = vld [vmem:[#allocation8 + $0x428] sm:$0xff]
    %v996 = vld [vmem:[#allocation8 + $0x430] sm:$0xff]
    %v997 = vld [vmem:[#allocation8 + $0x438] sm:$0xff]
    %v998 = vld [vmem:[#allocation8 + $0x440] sm:$0xff]
    %v999 = vld [vmem:[#allocation8 + $0x448] sm:$0xff]
    %v1000 = vld [vmem:[#allocation8 + $0x450] sm:$0xff]
    %v1001 = vld [vmem:[#allocation8 + $0x458] sm:$0xff]
    %v1002 = vld [vmem:[#allocation8 + $0x460] sm:$0xff]
    %v1003 = vld [vmem:[#allocation8 + $0x468] sm:$0xff]
    %v1004 = vld [vmem:[#allocation8 + $0x470] sm:$0xff]
    %v1005 = vld [vmem:[#allocation8 + $0x478] sm:$0xff]
    %v1006 = vld [vmem:[#allocation8 + $0x480] sm:$0xff]
    %v1007 = vld [vmem:[#allocation8 + $0x488] sm:$0xff]
    %v1008 = vld [vmem:[#allocation8 + $0x490] sm:$0xff]
    %v1009 = vld [vmem:[#allocation8 + $0x498] sm:$0xff]
    %v1010 = vld [vmem:[#allocation8 + $0x4a0] sm:$0xff]
    %v1011 = vld [vmem:[#allocation8 + $0x4a8] sm:$0xff]
    %v1012 = vld [vmem:[#allocation8 + $0x4b0] sm:$0xff]
    %v1013 = vld [vmem:[#allocation8 + $0x4b8] sm:$0xff]
    %v1014 = vld [vmem:[#allocation8 + $0x4c0] sm:$0xff]
    %v1015 = vld [vmem:[#allocation8 + $0x4c8] sm:$0xff]
    %v1016 = vld [vmem:[#allocation8 + $0x4d0] sm:$0xff]
    %v1017 = vld [vmem:[#allocation8 + $0x4d8] sm:$0xff]
    %v1018 = vld [vmem:[#allocation8 + $0x4e0] sm:$0xff]
    %v1019 = vld [vmem:[#allocation8 + $0x4e8] sm:$0xff]
    %v1020 = vld [vmem:[#allocation8 + $0x4f0] sm:$0xff]
    %v1021 = vld [vmem:[#allocation8 + $0x4f8] sm:$0xff]
    %v1022 = vld [vmem:[#allocation8 + $0x500] sm:$0xff]
    %v1023 = vld [vmem:[#allocation8 + $0x508] sm:$0xff]
    %v1024 = vld [vmem:[#allocation8 + $0x510] sm:$0xff]
    %v1025 = vld [vmem:[#allocation8 + $0x518] sm:$0xff]
    %v1026 = vld [vmem:[#allocation8 + $0x520] sm:$0xff]
    %v1027 = vld [vmem:[#allocation8 + $0x528] sm:$0xff]
    %v1028 = vld [vmem:[#allocation8 + $0x530] sm:$0xff]
    %v1029 = vld [vmem:[#allocation8 + $0x538] sm:$0xff]
    %v1030 = vld [vmem:[#allocation8 + $0x540] sm:$0xff]
    %v1031 = vld [vmem:[#allocation8 + $0x548] sm:$0xff]
    %v1032 = vld [vmem:[#allocation8 + $0x550] sm:$0xff]
    %v1033 = vld [vmem:[#allocation8 + $0x558] sm:$0xff]
    %v1034 = vld [vmem:[#allocation8 + $0x560] sm:$0xff]
    %v1035 = vld [vmem:[#allocation8 + $0x568] sm:$0xff]
    %v1036 = vld [vmem:[#allocation8 + $0x570] sm:$0xff]
    %v1037 = vld [vmem:[#allocation8 + $0x578] sm:$0xff]
    %v1038 = vld [vmem:[#allocation8 + $0x580] sm:$0xff]
    %v1039 = vld [vmem:[#allocation8 + $0x588] sm:$0xff]
    %v1040 = vld [vmem:[#allocation8 + $0x590] sm:$0xff]
    %v1041 = vld [vmem:[#allocation8 + $0x598] sm:$0xff]
    %v1042 = vld [vmem:[#allocation8 + $0x5a0] sm:$0xff]
    %v1043 = vld [vmem:[#allocation8 + $0x5a8] sm:$0xff]
    %v1044 = vld [vmem:[#allocation8 + $0x5b0] sm:$0xff]
    %v1045 = vld [vmem:[#allocation8 + $0x5b8] sm:$0xff]
    %v1046 = vld [vmem:[#allocation8 + $0x5c0] sm:$0xff]
    %v1047 = vld [vmem:[#allocation8 + $0x5c8] sm:$0xff]
    %v1048 = vld [vmem:[#allocation8 + $0x5d0] sm:$0xff]
    %v1049 = vld [vmem:[#allocation8 + $0x5d8] sm:$0xff]
    %v1050 = vld [vmem:[#allocation8 + $0x5e0] sm:$0xff]
    %v1051 = vld [vmem:[#allocation8 + $0x5e8] sm:$0xff]
    %v1052 = vld [vmem:[#allocation8 + $0x5f0] sm:$0xff]
    %v1053 = vld [vmem:[#allocation8 + $0x5f8] sm:$0xff]
    %v1054 = vld [vmem:[#allocation8 + $0x600] sm:$0xff]
    %v1055 = vld [vmem:[#allocation8 + $0x608] sm:$0xff]
    %v1056 = vld [vmem:[#allocation8 + $0x610] sm:$0xff]
    %v1057 = vld [vmem:[#allocation8 + $0x618] sm:$0xff]
    %v1058 = vld [vmem:[#allocation8 + $0x620] sm:$0xff]
    %v1059 = vld [vmem:[#allocation8 + $0x628] sm:$0xff]
    %v1060 = vld [vmem:[#allocation8 + $0x630] sm:$0xff]
    %v1061 = vld [vmem:[#allocation8 + $0x638] sm:$0xff]
    %v1062 = vld [vmem:[#allocation8 + $0x640] sm:$0xff]
    %v1063 = vld [vmem:[#allocation8 + $0x648] sm:$0xff]
    %v1064 = vld [vmem:[#allocation8 + $0x650] sm:$0xff]
    %v1065 = vld [vmem:[#allocation8 + $0x658] sm:$0xff]
    %v1066 = vld [vmem:[#allocation8 + $0x660] sm:$0xff]
    %v1067 = vld [vmem:[#allocation8 + $0x668] sm:$0xff]
    %v1068 = vld [vmem:[#allocation8 + $0x670] sm:$0xff]
    %v1069 = vld [vmem:[#allocation8 + $0x678] sm:$0xff]
    %v1070 = vld [vmem:[#allocation8 + $0x680] sm:$0xff]
    %v1071 = vld [vmem:[#allocation8 + $0x688] sm:$0xff]
    %v1072 = vld [vmem:[#allocation8 + $0x690] sm:$0xff]
    %v1073 = vld [vmem:[#allocation8 + $0x698] sm:$0xff]
    %v1074 = vld [vmem:[#allocation8 + $0x6a0] sm:$0xff]
    %v1075 = vld [vmem:[#allocation8 + $0x6a8] sm:$0xff]
    %v1076 = vld [vmem:[#allocation8 + $0x6b0] sm:$0xff]
    %v1077 = vld [vmem:[#allocation8 + $0x6b8] sm:$0xff]
    %v1078 = vld [vmem:[#allocation8 + $0x6c0] sm:$0xff]
    %v1079 = vld [vmem:[#allocation8 + $0x6c8] sm:$0xff]
    %v1080 = vld [vmem:[#allocation8 + $0x6d0] sm:$0xff]
    %v1081 = vld [vmem:[#allocation8 + $0x6d8] sm:$0xff]
    %v1082 = vld [vmem:[#allocation8 + $0x6e0] sm:$0xff]
    %v1083 = vld [vmem:[#allocation8 + $0x6e8] sm:$0xff]
    %v1084 = vld [vmem:[#allocation8 + $0x6f0] sm:$0xff]
    %v1085 = vld [vmem:[#allocation8 + $0x6f8] sm:$0xff]
    %v1086 = vld [vmem:[#allocation8 + $0x700] sm:$0xff]
    %v1087 = vld [vmem:[#allocation8 + $0x708] sm:$0xff]
    %v1088 = vld [vmem:[#allocation8 + $0x710] sm:$0xff]
    %v1089 = vld [vmem:[#allocation8 + $0x718] sm:$0xff]
    %v1090 = vld [vmem:[#allocation8 + $0x720] sm:$0xff]
    %v1091 = vld [vmem:[#allocation8 + $0x728] sm:$0xff]
    %v1092 = vld [vmem:[#allocation8 + $0x730] sm:$0xff]
    %v1093 = vld [vmem:[#allocation8 + $0x738] sm:$0xff]
    %v1094 = vld [vmem:[#allocation8 + $0x740] sm:$0xff]
    %v1095 = vld [vmem:[#allocation8 + $0x748] sm:$0xff]
    %v1096 = vld [vmem:[#allocation8 + $0x750] sm:$0xff]
    %v1097 = vld [vmem:[#allocation8 + $0x758] sm:$0xff]
    %v1098 = vld [vmem:[#allocation8 + $0x760] sm:$0xff]
    %v1099 = vld [vmem:[#allocation8 + $0x768] sm:$0xff]
    %v1100 = vld [vmem:[#allocation8 + $0x770] sm:$0xff]
    %v1101 = vld [vmem:[#allocation8 + $0x778] sm:$0xff]
    %v1102 = vld [vmem:[#allocation8 + $0x780] sm:$0xff]
    %v1103 = vld [vmem:[#allocation8 + $0x788] sm:$0xff]
    %v1104 = vld [vmem:[#allocation8 + $0x790] sm:$0xff]
    %v1105 = vld [vmem:[#allocation8 + $0x798] sm:$0xff]
    %v1106 = vld [vmem:[#allocation8 + $0x7a0] sm:$0xff]
    %v1107 = vld [vmem:[#allocation8 + $0x7a8] sm:$0xff]
    %v1108 = vld [vmem:[#allocation8 + $0x7b0] sm:$0xff]
    %v1109 = vld [vmem:[#allocation8 + $0x7b8] sm:$0xff]
    %v1110 = vld [vmem:[#allocation8 + $0x7c0] sm:$0xff]
    %v1111 = vld [vmem:[#allocation8 + $0x7c8] sm:$0xff]
    %v1112 = vld [vmem:[#allocation8 + $0x7d0] sm:$0xff]
    %v1113 = vld [vmem:[#allocation8 + $0x7d8] sm:$0xff]
    %v1114 = vld [vmem:[#allocation8 + $0x7e0] sm:$0xff]
    %v1115 = vld [vmem:[#allocation8 + $0x7e8] sm:$0xff]
    %v1116 = vld [vmem:[#allocation8 + $0x7f0] sm:$0xff]
    %v1117 = vld [vmem:[#allocation8 + $0x7f8] sm:$0xff]
    %v1118 = vld [vmem:[#allocation8 + $0x800] sm:$0xff]
    %v1119 = vld [vmem:[#allocation8 + $0x808] sm:$0xff]
    %v1120 = vld [vmem:[#allocation8 + $0x810] sm:$0xff]
    %v1121 = vld [vmem:[#allocation8 + $0x818] sm:$0xff]
    %v1122 = vld [vmem:[#allocation8 + $0x820] sm:$0xff]
    %v1123 = vld [vmem:[#allocation8 + $0x828] sm:$0xff]
    %v1124 = vld [vmem:[#allocation8 + $0x830] sm:$0xff]
    %v1125 = vld [vmem:[#allocation8 + $0x838] sm:$0xff]
    %v1126 = vld [vmem:[#allocation8 + $0x840] sm:$0xff]
    %v1127 = vld [vmem:[#allocation8 + $0x848] sm:$0xff]
    %v1128 = vld [vmem:[#allocation8 + $0x850] sm:$0xff]
    %v1129 = vld [vmem:[#allocation8 + $0x858] sm:$0xff]
    %v1130 = vld [vmem:[#allocation8 + $0x860] sm:$0xff]
    %v1131 = vld [vmem:[#allocation8 + $0x868] sm:$0xff]
    %v1132 = vld [vmem:[#allocation8 + $0x870] sm:$0xff]
    %v1133 = vld [vmem:[#allocation8 + $0x878] sm:$0xff]
    %v1134 = vld [vmem:[#allocation8 + $0x880] sm:$0xff]
    %v1135 = vld [vmem:[#allocation8 + $0x888] sm:$0xff]
    %v1136 = vld [vmem:[#allocation8 + $0x890] sm:$0xff]
    %v1137 = vld [vmem:[#allocation8 + $0x898] sm:$0xff]
    %v1138 = vld [vmem:[#allocation8 + $0x8a0] sm:$0xff]
    %v1139 = vld [vmem:[#allocation8 + $0x8a8] sm:$0xff]
    %v1140 = vld [vmem:[#allocation8 + $0x8b0] sm:$0xff]
    %v1141 = vld [vmem:[#allocation8 + $0x8b8] sm:$0xff]
    %v1142 = vld [vmem:[#allocation8 + $0x8c0] sm:$0xff]
    %v1143 = vld [vmem:[#allocation8 + $0x8c8] sm:$0xff]
    %v1144 = vld [vmem:[#allocation8 + $0x8d0] sm:$0xff]
    %v1145 = vld [vmem:[#allocation8 + $0x8d8] sm:$0xff]
    %v1146 = vld [vmem:[#allocation8 + $0x8e0] sm:$0xff]
    %v1147 = vld [vmem:[#allocation8 + $0x8e8] sm:$0xff]
    %v1148 = vld [vmem:[#allocation8 + $0x8f0] sm:$0xff]
    %v1149 = vld [vmem:[#allocation8 + $0x8f8] sm:$0xff]
    %v1150 = vld [vmem:[#allocation8 + $0x900] sm:$0xff]
    %v1151 = vld [vmem:[#allocation8 + $0x908] sm:$0xff]
    %v1152 = vld [vmem:[#allocation8 + $0x910] sm:$0xff]
    %v1153 = vld [vmem:[#allocation8 + $0x918] sm:$0xff]
    %v1154 = vld [vmem:[#allocation8 + $0x920] sm:$0xff]
    %v1155 = vld [vmem:[#allocation8 + $0x928] sm:$0xff]
    %v1156 = vld [vmem:[#allocation8 + $0x930] sm:$0xff]
    %v1157 = vld [vmem:[#allocation8 + $0x938] sm:$0xff]
    %v1158 = vld [vmem:[#allocation8 + $0x940] sm:$0xff]
    %v1159 = vld [vmem:[#allocation8 + $0x948] sm:$0xff]
    %v1160 = vld [vmem:[#allocation8 + $0x950] sm:$0xff]
    %v1161 = vld [vmem:[#allocation8 + $0x958] sm:$0xff]
    %v1162 = vld [vmem:[#allocation8 + $0x960] sm:$0xff]
    %v1163 = vld [vmem:[#allocation8 + $0x968] sm:$0xff]
    %v1164 = vld [vmem:[#allocation8 + $0x970] sm:$0xff]
    %v1165 = vld [vmem:[#allocation8 + $0x978] sm:$0xff]
    %v1166 = vld [vmem:[#allocation8 + $0x980] sm:$0xff]
    %v1167 = vld [vmem:[#allocation8 + $0x988] sm:$0xff]
    %v1168 = vld [vmem:[#allocation8 + $0x990] sm:$0xff]
    %v1169 = vld [vmem:[#allocation8 + $0x998] sm:$0xff]
    %v1170 = vld [vmem:[#allocation8 + $0x9a0] sm:$0xff]
    %v1171 = vld [vmem:[#allocation8 + $0x9a8] sm:$0xff]
    %v1172 = vld [vmem:[#allocation8 + $0x9b0] sm:$0xff]
    %v1173 = vld [vmem:[#allocation8 + $0x9b8] sm:$0xff]
    %v1174 = vld [vmem:[#allocation8 + $0x9c0] sm:$0xff]
    %v1175 = vld [vmem:[#allocation8 + $0x9c8] sm:$0xff]
    %v1176 = vld [vmem:[#allocation8 + $0x9d0] sm:$0xff]
    %v1177 = vld [vmem:[#allocation8 + $0x9d8] sm:$0xff]
    %v1178 = vld [vmem:[#allocation8 + $0x9e0] sm:$0xff]
    %v1179 = vld [vmem:[#allocation8 + $0x9e8] sm:$0xff]
    %v1180 = vld [vmem:[#allocation8 + $0x9f0] sm:$0xff]
    %v1181 = vld [vmem:[#allocation8 + $0x9f8] sm:$0xff]
    %v1182 = vld [vmem:[#allocation8 + $0xa00] sm:$0xff]
    %v1183 = vld [vmem:[#allocation8 + $0xa08] sm:$0xff]
    %v1184 = vld [vmem:[#allocation8 + $0xa10] sm:$0xff]
    %v1185 = vld [vmem:[#allocation8 + $0xa18] sm:$0xff]
    %v1186 = vld [vmem:[#allocation8 + $0xa20] sm:$0xff]
    %v1187 = vld [vmem:[#allocation8 + $0xa28] sm:$0xff]
    %v1188 = vld [vmem:[#allocation8 + $0xa30] sm:$0xff]
    %v1189 = vld [vmem:[#allocation8 + $0xa38] sm:$0xff]
    %v1190 = vld [vmem:[#allocation8 + $0xa40] sm:$0xff]
    %v1191 = vld [vmem:[#allocation8 + $0xa48] sm:$0xff]
    %v1192 = vld [vmem:[#allocation8 + $0xa50] sm:$0xff]
    %v1193 = vld [vmem:[#allocation8 + $0xa58] sm:$0xff]
    %v1194 = vld [vmem:[#allocation8 + $0xa60] sm:$0xff]
    %v1195 = vld [vmem:[#allocation8 + $0xa68] sm:$0xff]
    %v1196 = vld [vmem:[#allocation8 + $0xa70] sm:$0xff]
    %v1197 = vld [vmem:[#allocation8 + $0xa78] sm:$0xff]
    %v1198 = vld [vmem:[#allocation8 + $0xa80] sm:$0xff]
    %v1199 = vld [vmem:[#allocation8 + $0xa88] sm:$0xff]
    %v1200 = vld [vmem:[#allocation8 + $0xa90] sm:$0xff]
    %v1201 = vld [vmem:[#allocation8 + $0xa98] sm:$0xff]
    %v1202 = vld [vmem:[#allocation8 + $0xaa0] sm:$0xff]
    %v1203 = vld [vmem:[#allocation8 + $0xaa8] sm:$0xff]
    %v1204 = vld [vmem:[#allocation8 + $0xab0] sm:$0xff]
    %v1205 = vld [vmem:[#allocation8 + $0xab8] sm:$0xff]
    %v1206 = vld [vmem:[#allocation8 + $0xac0] sm:$0xff]
    %v1207 = vld [vmem:[#allocation8 + $0xac8] sm:$0xff]
    %v1208 = vld [vmem:[#allocation8 + $0xad0] sm:$0xff]
    %v1209 = vld [vmem:[#allocation8 + $0xad8] sm:$0xff]
    %v1210 = vld [vmem:[#allocation8 + $0xae0] sm:$0xff]
    %v1211 = vld [vmem:[#allocation8 + $0xae8] sm:$0xff]
    %v1212 = vld [vmem:[#allocation8 + $0xaf0] sm:$0xff]
    %v1213 = vld [vmem:[#allocation8 + $0xaf8] sm:$0xff]
    %v1214 = vld [vmem:[#allocation8 + $0xb00] sm:$0xff]
    %v1215 = vld [vmem:[#allocation8 + $0xb08] sm:$0xff]
    %v1216 = vld [vmem:[#allocation8 + $0xb10] sm:$0xff]
    %v1217 = vld [vmem:[#allocation8 + $0xb18] sm:$0xff]
    %v1218 = vld [vmem:[#allocation8 + $0xb20] sm:$0xff]
    %v1219 = vld [vmem:[#allocation8 + $0xb28] sm:$0xff]
    %v1220 = vld [vmem:[#allocation8 + $0xb30] sm:$0xff]
    %v1221 = vld [vmem:[#allocation8 + $0xb38] sm:$0xff]
    %v1222 = vld [vmem:[#allocation8 + $0xb40] sm:$0xff]
    %v1223 = vld [vmem:[#allocation8 + $0xb48] sm:$0xff]
    %v1224 = vld [vmem:[#allocation8 + $0xb50] sm:$0xff]
    %v1225 = vld [vmem:[#allocation8 + $0xb58] sm:$0xff]
    %v1226 = vld [vmem:[#allocation8 + $0xb60] sm:$0xff]
    %v1227 = vld [vmem:[#allocation8 + $0xb68] sm:$0xff]
    %v1228 = vld [vmem:[#allocation8 + $0xb70] sm:$0xff]
    %v1229 = vld [vmem:[#allocation8 + $0xb78] sm:$0xff]
    %v1230 = vld [vmem:[#allocation8 + $0xb80] sm:$0xff]
    %v1231 = vld [vmem:[#allocation8 + $0xb88] sm:$0xff]
    %v1232 = vld [vmem:[#allocation8 + $0xb90] sm:$0xff]
    %v1233 = vld [vmem:[#allocation8 + $0xb98] sm:$0xff]
    %v1234 = vld [vmem:[#allocation8 + $0xba0] sm:$0xff]
    %v1235 = vld [vmem:[#allocation8 + $0xba8] sm:$0xff]
    %v1236 = vld [vmem:[#allocation8 + $0xbb0] sm:$0xff]
    %v1237 = vld [vmem:[#allocation8 + $0xbb8] sm:$0xff]
    %v1238 = vld [vmem:[#allocation8 + $0xbc0] sm:$0xff]
    %v1239 = vld [vmem:[#allocation8 + $0xbc8] sm:$0xff]
    %v1240 = vld [vmem:[#allocation8 + $0xbd0] sm:$0xff]
    %v1241 = vld [vmem:[#allocation8 + $0xbd8] sm:$0xff]
    %v1242 = vld [vmem:[#allocation8 + $0xbe0] sm:$0xff]
    %v1243 = vld [vmem:[#allocation8 + $0xbe8] sm:$0xff]
    %v1244 = vld [vmem:[#allocation8 + $0xbf0] sm:$0xff]
    %v1245 = vld [vmem:[#allocation8 + $0xbf8] sm:$0xff]
    %v1246 = vld [vmem:[#allocation8 + $0xc00] sm:$0xff]
    %v1247 = vld [vmem:[#allocation8 + $0xc08] sm:$0xff]
    %v1248 = vld [vmem:[#allocation8 + $0xc10] sm:$0xff]
    %v1249 = vld [vmem:[#allocation8 + $0xc18] sm:$0xff]
    %v1250 = vld [vmem:[#allocation8 + $0xc20] sm:$0xff]
    %v1251 = vld [vmem:[#allocation8 + $0xc28] sm:$0xff]
    %v1252 = vld [vmem:[#allocation8 + $0xc30] sm:$0xff]
    %v1253 = vld [vmem:[#allocation8 + $0xc38] sm:$0xff]
    %v1254 = vld [vmem:[#allocation8 + $0xc40] sm:$0xff]
    %v1255 = vld [vmem:[#allocation8 + $0xc48] sm:$0xff]
    %v1256 = vld [vmem:[#allocation8 + $0xc50] sm:$0xff]
    %v1257 = vld [vmem:[#allocation8 + $0xc58] sm:$0xff]
    %v1258 = vld [vmem:[#allocation8 + $0xc60] sm:$0xff]
    %v1259 = vld [vmem:[#allocation8 + $0xc68] sm:$0xff]
    %v1260 = vld [vmem:[#allocation8 + $0xc70] sm:$0xff]
    %v1261 = vld [vmem:[#allocation8 + $0xc78] sm:$0xff]
    %v1262 = vld [vmem:[#allocation8 + $0xc80] sm:$0xff]
    %v1263 = vld [vmem:[#allocation8 + $0xc88] sm:$0xff]
    %v1264 = vld [vmem:[#allocation8 + $0xc90] sm:$0xff]
    %v1265 = vld [vmem:[#allocation8 + $0xc98] sm:$0xff]
    %v1266 = vld [vmem:[#allocation8 + $0xca0] sm:$0xff]
    %v1267 = vld [vmem:[#allocation8 + $0xca8] sm:$0xff]
    %v1268 = vld [vmem:[#allocation8 + $0xcb0] sm:$0xff]
    %v1269 = vld [vmem:[#allocation8 + $0xcb8] sm:$0xff]
    %v1270 = vld [vmem:[#allocation8 + $0xcc0] sm:$0xff]
    %v1271 = vld [vmem:[#allocation8 + $0xcc8] sm:$0xff]
    %v1272 = vld [vmem:[#allocation8 + $0xcd0] sm:$0xff]
    %v1273 = vld [vmem:[#allocation8 + $0xcd8] sm:$0xff]
    %v1274 = vld [vmem:[#allocation8 + $0xce0] sm:$0xff]
    %v1275 = vld [vmem:[#allocation8 + $0xce8] sm:$0xff]
    %v1276 = vld [vmem:[#allocation8 + $0xcf0] sm:$0xff]
    %v1277 = vld [vmem:[#allocation8 + $0xcf8] sm:$0xff]
    %v1278 = vld [vmem:[#allocation8 + $0xd00] sm:$0xff]
    %v1279 = vld [vmem:[#allocation8 + $0xd08] sm:$0xff]
    %v1280 = vld [vmem:[#allocation8 + $0xd10] sm:$0xff]
    %v1281 = vld [vmem:[#allocation8 + $0xd18] sm:$0xff]
    %v1282 = vld [vmem:[#allocation8 + $0xd20] sm:$0xff]
    %v1283 = vld [vmem:[#allocation8 + $0xd28] sm:$0xff]
    %v1284 = vld [vmem:[#allocation8 + $0xd30] sm:$0xff]
    %v1285 = vld [vmem:[#allocation8 + $0xd38] sm:$0xff]
    %v1286 = vld [vmem:[#allocation8 + $0xd40] sm:$0xff]
    %v1287 = vld [vmem:[#allocation8 + $0xd48] sm:$0xff]
    %v1288 = vld [vmem:[#allocation8 + $0xd50] sm:$0xff]
    %v1289 = vld [vmem:[#allocation8 + $0xd58] sm:$0xff]
    %v1290 = vld [vmem:[#allocation8 + $0xd60] sm:$0xff]
    %v1291 = vld [vmem:[#allocation8 + $0xd68] sm:$0xff]
    %v1292 = vld [vmem:[#allocation8 + $0xd70] sm:$0xff]
    %v1293 = vld [vmem:[#allocation8 + $0xd78] sm:$0xff]
    %v1294 = vld [vmem:[#allocation8 + $0xd80] sm:$0xff]
    %v1295 = vld [vmem:[#allocation8 + $0xd88] sm:$0xff]
    %v1296 = vld [vmem:[#allocation8 + $0xd90] sm:$0xff]
    %v1297 = vld [vmem:[#allocation8 + $0xd98] sm:$0xff]
    %v1298 = vld [vmem:[#allocation8 + $0xda0] sm:$0xff]
    %v1299 = vld [vmem:[#allocation8 + $0xda8] sm:$0xff]
    %v1300 = vld [vmem:[#allocation8 + $0xdb0] sm:$0xff]
    %v1301 = vld [vmem:[#allocation8 + $0xdb8] sm:$0xff]
    %v1302 = vld [vmem:[#allocation8 + $0xdc0] sm:$0xff]
    %v1303 = vld [vmem:[#allocation8 + $0xdc8] sm:$0xff]
    %v1304 = vld [vmem:[#allocation8 + $0xdd0] sm:$0xff]
    %v1305 = vld [vmem:[#allocation8 + $0xdd8] sm:$0xff]
    %v1306 = vld [vmem:[#allocation8 + $0xde0] sm:$0xff]
    %v1307 = vld [vmem:[#allocation8 + $0xde8] sm:$0xff]
    %v1308 = vld [vmem:[#allocation8 + $0xdf0] sm:$0xff]
    %v1309 = vld [vmem:[#allocation8 + $0xdf8] sm:$0xff]
    %v1310 = vld [vmem:[#allocation8 + $0xe00] sm:$0xff]
    %v1311 = vld [vmem:[#allocation8 + $0xe08] sm:$0xff]
    %v1312 = vld [vmem:[#allocation8 + $0xe10] sm:$0xff]
    %v1313 = vld [vmem:[#allocation8 + $0xe18] sm:$0xff]
    %v1314 = vld [vmem:[#allocation8 + $0xe20] sm:$0xff]
    %v1315 = vld [vmem:[#allocation8 + $0xe28] sm:$0xff]
    %v1316 = vld [vmem:[#allocation8 + $0xe30] sm:$0xff]
    %v1317 = vld [vmem:[#allocation8 + $0xe38] sm:$0xff]
    %v1318 = vld [vmem:[#allocation8 + $0xe40] sm:$0xff]
    %v1319 = vld [vmem:[#allocation8 + $0xe48] sm:$0xff]
    %v1320 = vld [vmem:[#allocation8 + $0xe50] sm:$0xff]
    %v1321 = vld [vmem:[#allocation8 + $0xe58] sm:$0xff]
    %v1322 = vld [vmem:[#allocation8 + $0xe60] sm:$0xff]
    %v1323 = vld [vmem:[#allocation8 + $0xe68] sm:$0xff]
    %v1324 = vld [vmem:[#allocation8 + $0xe70] sm:$0xff]
    %v1325 = vld [vmem:[#allocation8 + $0xe78] sm:$0xff]
    %v1326 = vld [vmem:[#allocation8 + $0xe80] sm:$0xff]
    %v1327 = vld [vmem:[#allocation8 + $0xe88] sm:$0xff]
    %v1328 = vld [vmem:[#allocation8 + $0xe90] sm:$0xff]
    %v1329 = vld [vmem:[#allocation8 + $0xe98] sm:$0xff]
    %v1330 = vld [vmem:[#allocation8 + $0xea0] sm:$0xff]
    %v1331 = vld [vmem:[#allocation8 + $0xea8] sm:$0xff]
    %v1332 = vld [vmem:[#allocation8 + $0xeb0] sm:$0xff]
    %v1333 = vld [vmem:[#allocation8 + $0xeb8] sm:$0xff]
    %v1334 = vld [vmem:[#allocation8 + $0xec0] sm:$0xff]
    %v1335 = vld [vmem:[#allocation8 + $0xec8] sm:$0xff]
    %v1336 = vld [vmem:[#allocation8 + $0xed0] sm:$0xff]
    %v1337 = vld [vmem:[#allocation8 + $0xed8] sm:$0xff]
    %v1338 = vld [vmem:[#allocation8 + $0xee0] sm:$0xff]
    %v1339 = vld [vmem:[#allocation8 + $0xee8] sm:$0xff]
    %v1340 = vld [vmem:[#allocation8 + $0xef0] sm:$0xff]
    %v1341 = vld [vmem:[#allocation8 + $0xef8] sm:$0xff]
    %v1342 = vld [vmem:[#allocation8 + $0xf00] sm:$0xff]
    %v1343 = vld [vmem:[#allocation8 + $0xf08] sm:$0xff]
    %v1344 = vld [vmem:[#allocation8 + $0xf10] sm:$0xff]
    %v1345 = vld [vmem:[#allocation8 + $0xf18] sm:$0xff]
    %v1346 = vld [vmem:[#allocation8 + $0xf20] sm:$0xff]
    %v1347 = vld [vmem:[#allocation8 + $0xf28] sm:$0xff]
    %v1348 = vld [vmem:[#allocation8 + $0xf30] sm:$0xff]
    %v1349 = vld [vmem:[#allocation8 + $0xf38] sm:$0xff]
    %v1350 = vld [vmem:[#allocation8 + $0xf40] sm:$0xff]
    %v1351 = vld [vmem:[#allocation8 + $0xf48] sm:$0xff]
    %v1352 = vld [vmem:[#allocation8 + $0xf50] sm:$0xff]
    %v1353 = vld [vmem:[#allocation8 + $0xf58] sm:$0xff]
    %v1354 = vld [vmem:[#allocation8 + $0xf60] sm:$0xff]
    %v1355 = vld [vmem:[#allocation8 + $0xf68] sm:$0xff]
    %v1356 = vld [vmem:[#allocation8 + $0xf70] sm:$0xff]
    %v1357 = vld [vmem:[#allocation8 + $0xf78] sm:$0xff]
    %v1358 = vld [vmem:[#allocation8 + $0xf80] sm:$0xff]
    %v1359 = vld [vmem:[#allocation8 + $0xf88] sm:$0xff]
    %v1360 = vld [vmem:[#allocation8 + $0xf90] sm:$0xff]
    %v1361 = vld [vmem:[#allocation8 + $0xf98] sm:$0xff]
    %v1362 = vld [vmem:[#allocation8 + $0xfa0] sm:$0xff]
    %v1363 = vld [vmem:[#allocation8 + $0xfa8] sm:$0xff]
    %v1364 = vld [vmem:[#allocation8 + $0xfb0] sm:$0xff]
    %v1365 = vld [vmem:[#allocation8 + $0xfb8] sm:$0xff]
    %v1366 = vld [vmem:[#allocation8 + $0xfc0] sm:$0xff]
    %v1367 = vld [vmem:[#allocation8 + $0xfc8] sm:$0xff]
    %v1368 = vld [vmem:[#allocation8 + $0xfd0] sm:$0xff]
    %v1369 = vld [vmem:[#allocation8 + $0xfd8] sm:$0xff]
    %v1370 = vld [vmem:[#allocation8 + $0xfe0] sm:$0xff]
    %v1371 = vld [vmem:[#allocation8 + $0xfe8] sm:$0xff]
    %v1372 = vld [vmem:[#allocation8 + $0xff0] sm:$0xff]
    %v1373 = vld [vmem:[#allocation8 + $0xff8] sm:$0xff]
    %v1374 = vld [vmem:[#allocation8 + $0x1000] sm:$0xff]
    %v1375 = vld [vmem:[#allocation8 + $0x1008] sm:$0xff]
    %v1376 = vld [vmem:[#allocation8 + $0x1010] sm:$0xff]
    %v1377 = vld [vmem:[#allocation8 + $0x1018] sm:$0xff]
    %v1378 = vld [vmem:[#allocation8 + $0x1020] sm:$0xff]
    %v1379 = vld [vmem:[#allocation8 + $0x1028] sm:$0xff]
    %v1380 = vld [vmem:[#allocation8 + $0x1030] sm:$0xff]
    %v1381 = vld [vmem:[#allocation8 + $0x1038] sm:$0xff]
    %v1382 = vld [vmem:[#allocation8 + $0x1040] sm:$0xff]
    %v1383 = vld [vmem:[#allocation8 + $0x1048] sm:$0xff]
    %v1384 = vld [vmem:[#allocation8 + $0x1050] sm:$0xff]
    %v1385 = vld [vmem:[#allocation8 + $0x1058] sm:$0xff]
    %v1386 = vld [vmem:[#allocation8 + $0x1060] sm:$0xff]
    %v1387 = vld [vmem:[#allocation8 + $0x1068] sm:$0xff]
    %v1388 = vld [vmem:[#allocation8 + $0x1070] sm:$0xff]
    %v1389 = vld [vmem:[#allocation8 + $0x1078] sm:$0xff]
    %v1390 = vld [vmem:[#allocation10] sm:$0xf]
    %v1392 = vperm.slane %v1390, 0
    %v1393 = vperm.slane %v1390, 1
    %v1394 = vperm.slane %v1390, 2
    %v1395 = vperm.slane %v1390, 3
    %v1417 = vrot.slane %v845, 1
    %v1418 = vrot.slane %v846, 1
    %v1419 = vrot.slane %v847, 1
    %v1420 = vrot.slane %v848, 1
    %v1421 = vrot.slane %v849, 1
    %v1422 = vrot.slane %v850, 1
    %v1423 = vrot.slane %v851, 1
    %v1424 = vrot.slane %v852, 1
    %v1425 = vrot.slane %v853, 1
    %v1426 = vrot.slane %v854, 1
    %v1427 = vrot.slane %v855, 1
    %v1428 = vrot.slane %v856, 1
    %v1429 = vrot.slane %v857, 1
    %v1430 = vrot.slane %v858, 1
    %v1431 = vrot.slane %v859, 1
    %v1432 = vrot.slane %v860, 1
    %v1433 = vrot.slane %v861, 1
    %v1978 = vunpack.c.l.b16 %v862
    %v1979 = vunpack.c.h.b16 %v862
    %v1980 = vunpack.c.l.b16 %v863
    %v1981 = vunpack.c.h.b16 %v863
    %v1982 = vunpack.c.l.b16 %v864
    %v1983 = vunpack.c.h.b16 %v864
    %v1984 = vunpack.c.l.b16 %v865
    %v1985 = vunpack.c.h.b16 %v865
    %v1986 = vunpack.c.l.b16 %v866
    %v1987 = vunpack.c.h.b16 %v866
    %v1988 = vunpack.c.l.b16 %v867
    %v1989 = vunpack.c.h.b16 %v867
    %v1990 = vunpack.c.l.b16 %v868
    %v1991 = vunpack.c.h.b16 %v868
    %v1992 = vunpack.c.l.b16 %v869
    %v1993 = vunpack.c.h.b16 %v869
    %v1994 = vunpack.c.l.b16 %v870
    %v1995 = vunpack.c.h.b16 %v870
    %v1996 = vunpack.c.l.b16 %v871
    %v1997 = vunpack.c.h.b16 %v871
    %v1998 = vunpack.c.l.b16 %v872
    %v1999 = vunpack.c.h.b16 %v872
    %v2000 = vunpack.c.l.b16 %v873
    %v2001 = vunpack.c.h.b16 %v873
    %v2002 = vunpack.c.l.b16 %v874
    %v2003 = vunpack.c.h.b16 %v874
    %v2004 = vunpack.c.l.b16 %v875
    %v2005 = vunpack.c.h.b16 %v875
    %v2006 = vunpack.c.l.b16 %v876
    %v2007 = vunpack.c.h.b16 %v876
    %v2008 = vunpack.c.l.b16 %v877
    %v2009 = vunpack.c.h.b16 %v877
    %v2010 = vunpack.c.l.b16 %v878
    %v2011 = vunpack.c.h.b16 %v878
    %v2012 = vunpack.c.l.b16 %v879
    %v2013 = vunpack.c.h.b16 %v879
    %v2014 = vunpack.c.l.b16 %v880
    %v2015 = vunpack.c.h.b16 %v880
    %v2016 = vunpack.c.l.b16 %v881
    %v2017 = vunpack.c.h.b16 %v881
    %v2018 = vunpack.c.l.b16 %v882
    %v2019 = vunpack.c.h.b16 %v882
    %v2020 = vunpack.c.l.b16 %v883
    %v2021 = vunpack.c.h.b16 %v883
    %v2022 = vunpack.c.l.b16 %v884
    %v2023 = vunpack.c.h.b16 %v884
    %v2024 = vunpack.c.l.b16 %v885
    %v2025 = vunpack.c.h.b16 %v885
    %v2026 = vunpack.c.l.b16 %v886
    %v2027 = vunpack.c.h.b16 %v886
    %v2028 = vunpack.c.l.b16 %v887
    %v2029 = vunpack.c.h.b16 %v887
    %v2030 = vunpack.c.l.b16 %v888
    %v2031 = vunpack.c.h.b16 %v888
    %v2032 = vunpack.c.l.b16 %v889
    %v2033 = vunpack.c.h.b16 %v889
    %v2034 = vunpack.c.l.b16 %v890
    %v2035 = vunpack.c.h.b16 %v890
    %v2036 = vunpack.c.l.b16 %v891
    %v2037 = vunpack.c.h.b16 %v891
    %v2038 = vunpack.c.l.b16 %v892
    %v2039 = vunpack.c.h.b16 %v892
    %v2040 = vunpack.c.l.b16 %v893
    %v2041 = vunpack.c.h.b16 %v893
    %v2042 = vunpack.c.l.b16 %v894
    %v2043 = vunpack.c.h.b16 %v894
    %v2044 = vunpack.c.l.b16 %v895
    %v2045 = vunpack.c.h.b16 %v895
    %v2046 = vunpack.c.l.b16 %v896
    %v2047 = vunpack.c.h.b16 %v896
    %v2048 = vunpack.c.l.b16 %v897
    %v2049 = vunpack.c.h.b16 %v897
    %v2050 = vunpack.c.l.b16 %v898
    %v2051 = vunpack.c.h.b16 %v898
    %v2052 = vunpack.c.l.b16 %v899
    %v2053 = vunpack.c.h.b16 %v899
    %v2054 = vunpack.c.l.b16 %v900
    %v2055 = vunpack.c.h.b16 %v900
    %v2056 = vunpack.c.l.b16 %v901
    %v2057 = vunpack.c.h.b16 %v901
    %v2058 = vunpack.c.l.b16 %v902
    %v2059 = vunpack.c.h.b16 %v902
    %v2060 = vunpack.c.l.b16 %v903
    %v2061 = vunpack.c.h.b16 %v903
    %v2062 = vunpack.c.l.b16 %v904
    %v2063 = vunpack.c.h.b16 %v904
    %v2064 = vunpack.c.l.b16 %v905
    %v2065 = vunpack.c.h.b16 %v905
    %v2066 = vunpack.c.l.b16 %v906
    %v2067 = vunpack.c.h.b16 %v906
    %v2068 = vunpack.c.l.b16 %v907
    %v2069 = vunpack.c.h.b16 %v907
    %v2070 = vunpack.c.l.b16 %v908
    %v2071 = vunpack.c.h.b16 %v908
    %v2072 = vunpack.c.l.b16 %v909
    %v2073 = vunpack.c.h.b16 %v909
    %v2074 = vunpack.c.l.b16 %v910
    %v2075 = vunpack.c.h.b16 %v910
    %v2076 = vunpack.c.l.b16 %v911
    %v2077 = vunpack.c.h.b16 %v911
    %v2078 = vunpack.c.l.b16 %v912
    %v2079 = vunpack.c.h.b16 %v912
    %v2080 = vunpack.c.l.b16 %v913
    %v2081 = vunpack.c.h.b16 %v913
    %v2082 = vunpack.c.l.b16 %v914
    %v2083 = vunpack.c.h.b16 %v914
    %v2084 = vunpack.c.l.b16 %v915
    %v2085 = vunpack.c.h.b16 %v915
    %v2086 = vunpack.c.l.b16 %v916
    %v2087 = vunpack.c.h.b16 %v916
    %v2088 = vunpack.c.l.b16 %v917
    %v2089 = vunpack.c.h.b16 %v917
    %v2090 = vunpack.c.l.b16 %v918
    %v2091 = vunpack.c.h.b16 %v918
    %v2092 = vunpack.c.l.b16 %v919
    %v2093 = vunpack.c.h.b16 %v919
    %v2094 = vunpack.c.l.b16 %v920
    %v2095 = vunpack.c.h.b16 %v920
    %v2096 = vunpack.c.l.b16 %v921
    %v2097 = vunpack.c.h.b16 %v921
    %v2098 = vunpack.c.l.b16 %v922
    %v2099 = vunpack.c.h.b16 %v922
    %v2100 = vunpack.c.l.b16 %v923
    %v2101 = vunpack.c.h.b16 %v923
    %v2102 = vunpack.c.l.b16 %v924
    %v2103 = vunpack.c.h.b16 %v924
    %v2104 = vunpack.c.l.b16 %v925
    %v2105 = vunpack.c.h.b16 %v925
    %v2106 = vunpack.c.l.b16 %v926
    %v2107 = vunpack.c.h.b16 %v926
    %v2108 = vunpack.c.l.b16 %v927
    %v2109 = vunpack.c.h.b16 %v927
    %v2110 = vunpack.c.l.b16 %v928
    %v2111 = vunpack.c.h.b16 %v928
    %v2112 = vunpack.c.l.b16 %v929
    %v2113 = vunpack.c.h.b16 %v929
    %v2114 = vunpack.c.l.b16 %v930
    %v2115 = vunpack.c.h.b16 %v930
    %v2116 = vunpack.c.l.b16 %v931
    %v2117 = vunpack.c.h.b16 %v931
    %v2118 = vunpack.c.l.b16 %v932
    %v2119 = vunpack.c.h.b16 %v932
    %v2120 = vunpack.c.l.b16 %v933
    %v2121 = vunpack.c.h.b16 %v933
    %v2122 = vunpack.c.l.b16 %v934
    %v2123 = vunpack.c.h.b16 %v934
    %v2124 = vunpack.c.l.b16 %v935
    %v2125 = vunpack.c.h.b16 %v935
    %v2126 = vunpack.c.l.b16 %v936
    %v2127 = vunpack.c.h.b16 %v936
    %v2128 = vunpack.c.l.b16 %v937
    %v2129 = vunpack.c.h.b16 %v937
    %v2130 = vunpack.c.l.b16 %v938
    %v2131 = vunpack.c.h.b16 %v938
    %v2132 = vunpack.c.l.b16 %v939
    %v2133 = vunpack.c.h.b16 %v939
    %v2134 = vunpack.c.l.b16 %v940
    %v2135 = vunpack.c.h.b16 %v940
    %v2136 = vunpack.c.l.b16 %v941
    %v2137 = vunpack.c.h.b16 %v941
    %v2138 = vunpack.c.l.b16 %v942
    %v2139 = vunpack.c.h.b16 %v942
    %v2140 = vunpack.c.l.b16 %v943
    %v2141 = vunpack.c.h.b16 %v943
    %v2142 = vunpack.c.l.b16 %v944
    %v2143 = vunpack.c.h.b16 %v944
    %v2144 = vunpack.c.l.b16 %v945
    %v2145 = vunpack.c.h.b16 %v945
    %v2146 = vunpack.c.l.b16 %v946
    %v2147 = vunpack.c.h.b16 %v946
    %v2148 = vunpack.c.l.b16 %v947
    %v2149 = vunpack.c.h.b16 %v947
    %v2150 = vunpack.c.l.b16 %v948
    %v2151 = vunpack.c.h.b16 %v948
    %v2152 = vunpack.c.l.b16 %v949
    %v2153 = vunpack.c.h.b16 %v949
    %v2154 = vunpack.c.l.b16 %v950
    %v2155 = vunpack.c.h.b16 %v950
    %v2156 = vunpack.c.l.b16 %v951
    %v2157 = vunpack.c.h.b16 %v951
    %v2158 = vunpack.c.l.b16 %v952
    %v2159 = vunpack.c.h.b16 %v952
    %v2160 = vunpack.c.l.b16 %v953
    %v2161 = vunpack.c.h.b16 %v953
    %v2162 = vunpack.c.l.b16 %v954
    %v2163 = vunpack.c.h.b16 %v954
    %v2164 = vunpack.c.l.b16 %v955
    %v2165 = vunpack.c.h.b16 %v955
    %v2166 = vunpack.c.l.b16 %v956
    %v2167 = vunpack.c.h.b16 %v956
    %v2168 = vunpack.c.l.b16 %v957
    %v2169 = vunpack.c.h.b16 %v957
    %v2170 = vunpack.c.l.b16 %v958
    %v2171 = vunpack.c.h.b16 %v958
    %v2172 = vunpack.c.l.b16 %v959
    %v2173 = vunpack.c.h.b16 %v959
    %v2174 = vunpack.c.l.b16 %v960
    %v2175 = vunpack.c.h.b16 %v960
    %v2176 = vunpack.c.l.b16 %v961
    %v2177 = vunpack.c.h.b16 %v961
    %v2178 = vunpack.c.l.b16 %v962
    %v2179 = vunpack.c.h.b16 %v962
    %v2180 = vunpack.c.l.b16 %v963
    %v2181 = vunpack.c.h.b16 %v963
    %v2182 = vunpack.c.l.b16 %v964
    %v2183 = vunpack.c.h.b16 %v964
    %v2184 = vunpack.c.l.b16 %v965
    %v2185 = vunpack.c.h.b16 %v965
    %v2186 = vunpack.c.l.b16 %v966
    %v2187 = vunpack.c.h.b16 %v966
    %v2188 = vunpack.c.l.b16 %v967
    %v2189 = vunpack.c.h.b16 %v967
    %v2190 = vunpack.c.l.b16 %v968
    %v2191 = vunpack.c.h.b16 %v968
    %v2192 = vunpack.c.l.b16 %v969
    %v2193 = vunpack.c.h.b16 %v969
    %v2194 = vunpack.c.l.b16 %v970
    %v2195 = vunpack.c.h.b16 %v970
    %v2196 = vunpack.c.l.b16 %v971
    %v2197 = vunpack.c.h.b16 %v971
    %v2198 = vunpack.c.l.b16 %v972
    %v2199 = vunpack.c.h.b16 %v972
    %v2200 = vunpack.c.l.b16 %v973
    %v2201 = vunpack.c.h.b16 %v973
    %v2202 = vunpack.c.l.b16 %v974
    %v2203 = vunpack.c.h.b16 %v974
    %v2204 = vunpack.c.l.b16 %v975
    %v2205 = vunpack.c.h.b16 %v975
    %v2206 = vunpack.c.l.b16 %v976
    %v2207 = vunpack.c.h.b16 %v976
    %v2208 = vunpack.c.l.b16 %v977
    %v2209 = vunpack.c.h.b16 %v977
    %v2210 = vunpack.c.l.b16 %v978
    %v2211 = vunpack.c.h.b16 %v978
    %v2212 = vunpack.c.l.b16 %v979
    %v2213 = vunpack.c.h.b16 %v979
    %v2214 = vunpack.c.l.b16 %v980
    %v2215 = vunpack.c.h.b16 %v980
    %v2216 = vunpack.c.l.b16 %v981
    %v2217 = vunpack.c.h.b16 %v981
    %v2218 = vunpack.c.l.b16 %v982
    %v2219 = vunpack.c.h.b16 %v982
    %v2220 = vunpack.c.l.b16 %v983
    %v2221 = vunpack.c.h.b16 %v983
    %v2222 = vunpack.c.l.b16 %v984
    %v2223 = vunpack.c.h.b16 %v984
    %v2224 = vunpack.c.l.b16 %v985
    %v2225 = vunpack.c.h.b16 %v985
    %v2226 = vunpack.c.l.b16 %v986
    %v2227 = vunpack.c.h.b16 %v986
    %v2228 = vunpack.c.l.b16 %v987
    %v2229 = vunpack.c.h.b16 %v987
    %v2230 = vunpack.c.l.b16 %v988
    %v2231 = vunpack.c.h.b16 %v988
    %v2232 = vunpack.c.l.b16 %v989
    %v2233 = vunpack.c.h.b16 %v989
    %v2234 = vunpack.c.l.b16 %v990
    %v2235 = vunpack.c.h.b16 %v990
    %v2236 = vunpack.c.l.b16 %v991
    %v2237 = vunpack.c.h.b16 %v991
    %v2238 = vunpack.c.l.b16 %v992
    %v2239 = vunpack.c.h.b16 %v992
    %v2240 = vunpack.c.l.b16 %v993
    %v2241 = vunpack.c.h.b16 %v993
    %v2242 = vunpack.c.l.b16 %v994
    %v2243 = vunpack.c.h.b16 %v994
    %v2244 = vunpack.c.l.b16 %v995
    %v2245 = vunpack.c.h.b16 %v995
    %v2246 = vunpack.c.l.b16 %v996
    %v2247 = vunpack.c.h.b16 %v996
    %v2248 = vunpack.c.l.b16 %v997
    %v2249 = vunpack.c.h.b16 %v997
    %v2250 = vunpack.c.l.b16 %v998
    %v2251 = vunpack.c.h.b16 %v998
    %v2252 = vunpack.c.l.b16 %v999
    %v2253 = vunpack.c.h.b16 %v999
    %v2254 = vunpack.c.l.b16 %v1000
    %v2255 = vunpack.c.h.b16 %v1000
    %v2256 = vunpack.c.l.b16 %v1001
    %v2257 = vunpack.c.h.b16 %v1001
    %v2258 = vunpack.c.l.b16 %v1002
    %v2259 = vunpack.c.h.b16 %v1002
    %v2260 = vunpack.c.l.b16 %v1003
    %v2261 = vunpack.c.h.b16 %v1003
    %v2262 = vunpack.c.l.b16 %v1004
    %v2263 = vunpack.c.h.b16 %v1004
    %v2264 = vunpack.c.l.b16 %v1005
    %v2265 = vunpack.c.h.b16 %v1005
    %v2266 = vunpack.c.l.b16 %v1006
    %v2267 = vunpack.c.h.b16 %v1006
    %v2268 = vunpack.c.l.b16 %v1007
    %v2269 = vunpack.c.h.b16 %v1007
    %v2270 = vunpack.c.l.b16 %v1008
    %v2271 = vunpack.c.h.b16 %v1008
    %v2272 = vunpack.c.l.b16 %v1009
    %v2273 = vunpack.c.h.b16 %v1009
    %v2274 = vunpack.c.l.b16 %v1010
    %v2275 = vunpack.c.h.b16 %v1010
    %v2276 = vunpack.c.l.b16 %v1011
    %v2277 = vunpack.c.h.b16 %v1011
    %v2278 = vunpack.c.l.b16 %v1012
    %v2279 = vunpack.c.h.b16 %v1012
    %v2280 = vunpack.c.l.b16 %v1013
    %v2281 = vunpack.c.h.b16 %v1013
    %v2282 = vunpack.c.l.b16 %v1014
    %v2283 = vunpack.c.h.b16 %v1014
    %v2284 = vunpack.c.l.b16 %v1015
    %v2285 = vunpack.c.h.b16 %v1015
    %v2286 = vunpack.c.l.b16 %v1016
    %v2287 = vunpack.c.h.b16 %v1016
    %v2288 = vunpack.c.l.b16 %v1017
    %v2289 = vunpack.c.h.b16 %v1017
    %v2290 = vunpack.c.l.b16 %v1018
    %v2291 = vunpack.c.h.b16 %v1018
    %v2292 = vunpack.c.l.b16 %v1019
    %v2293 = vunpack.c.h.b16 %v1019
    %v2294 = vunpack.c.l.b16 %v1020
    %v2295 = vunpack.c.h.b16 %v1020
    %v2296 = vunpack.c.l.b16 %v1021
    %v2297 = vunpack.c.h.b16 %v1021
    %v2298 = vunpack.c.l.b16 %v1022
    %v2299 = vunpack.c.h.b16 %v1022
    %v2300 = vunpack.c.l.b16 %v1023
    %v2301 = vunpack.c.h.b16 %v1023
    %v2302 = vunpack.c.l.b16 %v1024
    %v2303 = vunpack.c.h.b16 %v1024
    %v2304 = vunpack.c.l.b16 %v1025
    %v2305 = vunpack.c.h.b16 %v1025
    %v2306 = vunpack.c.l.b16 %v1026
    %v2307 = vunpack.c.h.b16 %v1026
    %v2308 = vunpack.c.l.b16 %v1027
    %v2309 = vunpack.c.h.b16 %v1027
    %v2310 = vunpack.c.l.b16 %v1028
    %v2311 = vunpack.c.h.b16 %v1028
    %v2312 = vunpack.c.l.b16 %v1029
    %v2313 = vunpack.c.h.b16 %v1029
    %v2314 = vunpack.c.l.b16 %v1030
    %v2315 = vunpack.c.h.b16 %v1030
    %v2316 = vunpack.c.l.b16 %v1031
    %v2317 = vunpack.c.h.b16 %v1031
    %v2318 = vunpack.c.l.b16 %v1032
    %v2319 = vunpack.c.h.b16 %v1032
    %v2320 = vunpack.c.l.b16 %v1033
    %v2321 = vunpack.c.h.b16 %v1033
    %v2322 = vunpack.c.l.b16 %v1034
    %v2323 = vunpack.c.h.b16 %v1034
    %v2324 = vunpack.c.l.b16 %v1035
    %v2325 = vunpack.c.h.b16 %v1035
    %v2326 = vunpack.c.l.b16 %v1036
    %v2327 = vunpack.c.h.b16 %v1036
    %v2328 = vunpack.c.l.b16 %v1037
    %v2329 = vunpack.c.h.b16 %v1037
    %v2330 = vunpack.c.l.b16 %v1038
    %v2331 = vunpack.c.h.b16 %v1038
    %v2332 = vunpack.c.l.b16 %v1039
    %v2333 = vunpack.c.h.b16 %v1039
    %v2334 = vunpack.c.l.b16 %v1040
    %v2335 = vunpack.c.h.b16 %v1040
    %v2336 = vunpack.c.l.b16 %v1041
    %v2337 = vunpack.c.h.b16 %v1041
    %v2338 = vunpack.c.l.b16 %v1042
    %v2339 = vunpack.c.h.b16 %v1042
    %v2340 = vunpack.c.l.b16 %v1043
    %v2341 = vunpack.c.h.b16 %v1043
    %v2342 = vunpack.c.l.b16 %v1044
    %v2343 = vunpack.c.h.b16 %v1044
    %v2344 = vunpack.c.l.b16 %v1045
    %v2345 = vunpack.c.h.b16 %v1045
    %v2346 = vunpack.c.l.b16 %v1046
    %v2347 = vunpack.c.h.b16 %v1046
    %v2348 = vunpack.c.l.b16 %v1047
    %v2349 = vunpack.c.h.b16 %v1047
    %v2350 = vunpack.c.l.b16 %v1048
    %v2351 = vunpack.c.h.b16 %v1048
    %v2352 = vunpack.c.l.b16 %v1049
    %v2353 = vunpack.c.h.b16 %v1049
    %v2354 = vunpack.c.l.b16 %v1050
    %v2355 = vunpack.c.h.b16 %v1050
    %v2356 = vunpack.c.l.b16 %v1051
    %v2357 = vunpack.c.h.b16 %v1051
    %v2358 = vunpack.c.l.b16 %v1052
    %v2359 = vunpack.c.h.b16 %v1052
    %v2360 = vunpack.c.l.b16 %v1053
    %v2361 = vunpack.c.h.b16 %v1053
    %v2362 = vunpack.c.l.b16 %v1054
    %v2363 = vunpack.c.h.b16 %v1054
    %v2364 = vunpack.c.l.b16 %v1055
    %v2365 = vunpack.c.h.b16 %v1055
    %v2366 = vunpack.c.l.b16 %v1056
    %v2367 = vunpack.c.h.b16 %v1056
    %v2368 = vunpack.c.l.b16 %v1057
    %v2369 = vunpack.c.h.b16 %v1057
    %v2370 = vunpack.c.l.b16 %v1058
    %v2371 = vunpack.c.h.b16 %v1058
    %v2372 = vunpack.c.l.b16 %v1059
    %v2373 = vunpack.c.h.b16 %v1059
    %v2374 = vunpack.c.l.b16 %v1060
    %v2375 = vunpack.c.h.b16 %v1060
    %v2376 = vunpack.c.l.b16 %v1061
    %v2377 = vunpack.c.h.b16 %v1061
    %v2378 = vunpack.c.l.b16 %v1062
    %v2379 = vunpack.c.h.b16 %v1062
    %v2380 = vunpack.c.l.b16 %v1063
    %v2381 = vunpack.c.h.b16 %v1063
    %v2382 = vunpack.c.l.b16 %v1064
    %v2383 = vunpack.c.h.b16 %v1064
    %v2384 = vunpack.c.l.b16 %v1065
    %v2385 = vunpack.c.h.b16 %v1065
    %v2386 = vunpack.c.l.b16 %v1066
    %v2387 = vunpack.c.h.b16 %v1066
    %v2388 = vunpack.c.l.b16 %v1067
    %v2389 = vunpack.c.h.b16 %v1067
    %v2390 = vunpack.c.l.b16 %v1068
    %v2391 = vunpack.c.h.b16 %v1068
    %v2392 = vunpack.c.l.b16 %v1069
    %v2393 = vunpack.c.h.b16 %v1069
    %v2394 = vunpack.c.l.b16 %v1070
    %v2395 = vunpack.c.h.b16 %v1070
    %v2396 = vunpack.c.l.b16 %v1071
    %v2397 = vunpack.c.h.b16 %v1071
    %v2398 = vunpack.c.l.b16 %v1072
    %v2399 = vunpack.c.h.b16 %v1072
    %v2400 = vunpack.c.l.b16 %v1073
    %v2401 = vunpack.c.h.b16 %v1073
    %v2402 = vunpack.c.l.b16 %v1074
    %v2403 = vunpack.c.h.b16 %v1074
    %v2404 = vunpack.c.l.b16 %v1075
    %v2405 = vunpack.c.h.b16 %v1075
    %v2406 = vunpack.c.l.b16 %v1076
    %v2407 = vunpack.c.h.b16 %v1076
    %v2408 = vunpack.c.l.b16 %v1077
    %v2409 = vunpack.c.h.b16 %v1077
    %v2410 = vunpack.c.l.b16 %v1078
    %v2411 = vunpack.c.h.b16 %v1078
    %v2412 = vunpack.c.l.b16 %v1079
    %v2413 = vunpack.c.h.b16 %v1079
    %v2414 = vunpack.c.l.b16 %v1080
    %v2415 = vunpack.c.h.b16 %v1080
    %v2416 = vunpack.c.l.b16 %v1081
    %v2417 = vunpack.c.h.b16 %v1081
    %v2418 = vunpack.c.l.b16 %v1082
    %v2419 = vunpack.c.h.b16 %v1082
    %v2420 = vunpack.c.l.b16 %v1083
    %v2421 = vunpack.c.h.b16 %v1083
    %v2422 = vunpack.c.l.b16 %v1084
    %v2423 = vunpack.c.h.b16 %v1084
    %v2424 = vunpack.c.l.b16 %v1085
    %v2425 = vunpack.c.h.b16 %v1085
    %v2426 = vunpack.c.l.b16 %v1086
    %v2427 = vunpack.c.h.b16 %v1086
    %v2428 = vunpack.c.l.b16 %v1087
    %v2429 = vunpack.c.h.b16 %v1087
    %v2430 = vunpack.c.l.b16 %v1088
    %v2431 = vunpack.c.h.b16 %v1088
    %v2432 = vunpack.c.l.b16 %v1089
    %v2433 = vunpack.c.h.b16 %v1089
    %v2434 = vunpack.c.l.b16 %v1090
    %v2435 = vunpack.c.h.b16 %v1090
    %v2436 = vunpack.c.l.b16 %v1091
    %v2437 = vunpack.c.h.b16 %v1091
    %v2438 = vunpack.c.l.b16 %v1092
    %v2439 = vunpack.c.h.b16 %v1092
    %v2440 = vunpack.c.l.b16 %v1093
    %v2441 = vunpack.c.h.b16 %v1093
    %v2442 = vunpack.c.l.b16 %v1094
    %v2443 = vunpack.c.h.b16 %v1094
    %v2444 = vunpack.c.l.b16 %v1095
    %v2445 = vunpack.c.h.b16 %v1095
    %v2446 = vunpack.c.l.b16 %v1096
    %v2447 = vunpack.c.h.b16 %v1096
    %v2448 = vunpack.c.l.b16 %v1097
    %v2449 = vunpack.c.h.b16 %v1097
    %v2450 = vunpack.c.l.b16 %v1098
    %v2451 = vunpack.c.h.b16 %v1098
    %v2452 = vunpack.c.l.b16 %v1099
    %v2453 = vunpack.c.h.b16 %v1099
    %v2454 = vunpack.c.l.b16 %v1100
    %v2455 = vunpack.c.h.b16 %v1100
    %v2456 = vunpack.c.l.b16 %v1101
    %v2457 = vunpack.c.h.b16 %v1101
    %v2458 = vunpack.c.l.b16 %v1102
    %v2459 = vunpack.c.h.b16 %v1102
    %v2460 = vunpack.c.l.b16 %v1103
    %v2461 = vunpack.c.h.b16 %v1103
    %v2462 = vunpack.c.l.b16 %v1104
    %v2463 = vunpack.c.h.b16 %v1104
    %v2464 = vunpack.c.l.b16 %v1105
    %v2465 = vunpack.c.h.b16 %v1105
    %v2466 = vunpack.c.l.b16 %v1106
    %v2467 = vunpack.c.h.b16 %v1106
    %v2468 = vunpack.c.l.b16 %v1107
    %v2469 = vunpack.c.h.b16 %v1107
    %v2470 = vunpack.c.l.b16 %v1108
    %v2471 = vunpack.c.h.b16 %v1108
    %v2472 = vunpack.c.l.b16 %v1109
    %v2473 = vunpack.c.h.b16 %v1109
    %v2474 = vunpack.c.l.b16 %v1110
    %v2475 = vunpack.c.h.b16 %v1110
    %v2476 = vunpack.c.l.b16 %v1111
    %v2477 = vunpack.c.h.b16 %v1111
    %v2478 = vunpack.c.l.b16 %v1112
    %v2479 = vunpack.c.h.b16 %v1112
    %v2480 = vunpack.c.l.b16 %v1113
    %v2481 = vunpack.c.h.b16 %v1113
    %v2482 = vunpack.c.l.b16 %v1114
    %v2483 = vunpack.c.h.b16 %v1114
    %v2484 = vunpack.c.l.b16 %v1115
    %v2485 = vunpack.c.h.b16 %v1115
    %v2486 = vunpack.c.l.b16 %v1116
    %v2487 = vunpack.c.h.b16 %v1116
    %v2488 = vunpack.c.l.b16 %v1117
    %v2489 = vunpack.c.h.b16 %v1117
    %v2490 = vunpack.c.l.b16 %v1118
    %v2491 = vunpack.c.h.b16 %v1118
    %v2492 = vunpack.c.l.b16 %v1119
    %v2493 = vunpack.c.h.b16 %v1119
    %v2494 = vunpack.c.l.b16 %v1120
    %v2495 = vunpack.c.h.b16 %v1120
    %v2496 = vunpack.c.l.b16 %v1121
    %v2497 = vunpack.c.h.b16 %v1121
    %v2498 = vunpack.c.l.b16 %v1122
    %v2499 = vunpack.c.h.b16 %v1122
    %v2500 = vunpack.c.l.b16 %v1123
    %v2501 = vunpack.c.h.b16 %v1123
    %v2502 = vunpack.c.l.b16 %v1124
    %v2503 = vunpack.c.h.b16 %v1124
    %v2504 = vunpack.c.l.b16 %v1125
    %v2505 = vunpack.c.h.b16 %v1125
    %v2506 = vunpack.c.l.b16 %v1126
    %v2507 = vunpack.c.h.b16 %v1126
    %v2508 = vunpack.c.l.b16 %v1127
    %v2509 = vunpack.c.h.b16 %v1127
    %v2510 = vunpack.c.l.b16 %v1128
    %v2511 = vunpack.c.h.b16 %v1128
    %v2512 = vunpack.c.l.b16 %v1129
    %v2513 = vunpack.c.h.b16 %v1129
    %v2514 = vunpack.c.l.b16 %v1130
    %v2515 = vunpack.c.h.b16 %v1130
    %v2516 = vunpack.c.l.b16 %v1131
    %v2517 = vunpack.c.h.b16 %v1131
    %v2518 = vunpack.c.l.b16 %v1132
    %v2519 = vunpack.c.h.b16 %v1132
    %v2520 = vunpack.c.l.b16 %v1133
    %v2521 = vunpack.c.h.b16 %v1133
    %v2522 = vunpack.c.l.b16 %v1134
    %v2523 = vunpack.c.h.b16 %v1134
    %v2524 = vunpack.c.l.b16 %v1135
    %v2525 = vunpack.c.h.b16 %v1135
    %v2526 = vunpack.c.l.b16 %v1136
    %v2527 = vunpack.c.h.b16 %v1136
    %v2528 = vunpack.c.l.b16 %v1137
    %v2529 = vunpack.c.h.b16 %v1137
    %v2530 = vunpack.c.l.b16 %v1138
    %v2531 = vunpack.c.h.b16 %v1138
    %v2532 = vunpack.c.l.b16 %v1139
    %v2533 = vunpack.c.h.b16 %v1139
    %v2534 = vunpack.c.l.b16 %v1140
    %v2535 = vunpack.c.h.b16 %v1140
    %v2536 = vunpack.c.l.b16 %v1141
    %v2537 = vunpack.c.h.b16 %v1141
    %v2538 = vunpack.c.l.b16 %v1142
    %v2539 = vunpack.c.h.b16 %v1142
    %v2540 = vunpack.c.l.b16 %v1143
    %v2541 = vunpack.c.h.b16 %v1143
    %v2542 = vunpack.c.l.b16 %v1144
    %v2543 = vunpack.c.h.b16 %v1144
    %v2544 = vunpack.c.l.b16 %v1145
    %v2545 = vunpack.c.h.b16 %v1145
    %v2546 = vunpack.c.l.b16 %v1146
    %v2547 = vunpack.c.h.b16 %v1146
    %v2548 = vunpack.c.l.b16 %v1147
    %v2549 = vunpack.c.h.b16 %v1147
    %v2550 = vunpack.c.l.b16 %v1148
    %v2551 = vunpack.c.h.b16 %v1148
    %v2552 = vunpack.c.l.b16 %v1149
    %v2553 = vunpack.c.h.b16 %v1149
    %v2554 = vunpack.c.l.b16 %v1150
    %v2555 = vunpack.c.h.b16 %v1150
    %v2556 = vunpack.c.l.b16 %v1151
    %v2557 = vunpack.c.h.b16 %v1151
    %v2558 = vunpack.c.l.b16 %v1152
    %v2559 = vunpack.c.h.b16 %v1152
    %v2560 = vunpack.c.l.b16 %v1153
    %v2561 = vunpack.c.h.b16 %v1153
    %v2562 = vunpack.c.l.b16 %v1154
    %v2563 = vunpack.c.h.b16 %v1154
    %v2564 = vunpack.c.l.b16 %v1155
    %v2565 = vunpack.c.h.b16 %v1155
    %v2566 = vunpack.c.l.b16 %v1156
    %v2567 = vunpack.c.h.b16 %v1156
    %v2568 = vunpack.c.l.b16 %v1157
    %v2569 = vunpack.c.h.b16 %v1157
    %v2570 = vunpack.c.l.b16 %v1158
    %v2571 = vunpack.c.h.b16 %v1158
    %v2572 = vunpack.c.l.b16 %v1159
    %v2573 = vunpack.c.h.b16 %v1159
    %v2574 = vunpack.c.l.b16 %v1160
    %v2575 = vunpack.c.h.b16 %v1160
    %v2576 = vunpack.c.l.b16 %v1161
    %v2577 = vunpack.c.h.b16 %v1161
    %v2578 = vunpack.c.l.b16 %v1162
    %v2579 = vunpack.c.h.b16 %v1162
    %v2580 = vunpack.c.l.b16 %v1163
    %v2581 = vunpack.c.h.b16 %v1163
    %v2582 = vunpack.c.l.b16 %v1164
    %v2583 = vunpack.c.h.b16 %v1164
    %v2584 = vunpack.c.l.b16 %v1165
    %v2585 = vunpack.c.h.b16 %v1165
    %v2586 = vunpack.c.l.b16 %v1166
    %v2587 = vunpack.c.h.b16 %v1166
    %v2588 = vunpack.c.l.b16 %v1167
    %v2589 = vunpack.c.h.b16 %v1167
    %v2590 = vunpack.c.l.b16 %v1168
    %v2591 = vunpack.c.h.b16 %v1168
    %v2592 = vunpack.c.l.b16 %v1169
    %v2593 = vunpack.c.h.b16 %v1169
    %v2594 = vunpack.c.l.b16 %v1170
    %v2595 = vunpack.c.h.b16 %v1170
    %v2596 = vunpack.c.l.b16 %v1171
    %v2597 = vunpack.c.h.b16 %v1171
    %v2598 = vunpack.c.l.b16 %v1172
    %v2599 = vunpack.c.h.b16 %v1172
    %v2600 = vunpack.c.l.b16 %v1173
    %v2601 = vunpack.c.h.b16 %v1173
    %v2602 = vunpack.c.l.b16 %v1174
    %v2603 = vunpack.c.h.b16 %v1174
    %v2604 = vunpack.c.l.b16 %v1175
    %v2605 = vunpack.c.h.b16 %v1175
    %v2606 = vunpack.c.l.b16 %v1176
    %v2607 = vunpack.c.h.b16 %v1176
    %v2608 = vunpack.c.l.b16 %v1177
    %v2609 = vunpack.c.h.b16 %v1177
    %v2610 = vunpack.c.l.b16 %v1178
    %v2611 = vunpack.c.h.b16 %v1178
    %v2612 = vunpack.c.l.b16 %v1179
    %v2613 = vunpack.c.h.b16 %v1179
    %v2614 = vunpack.c.l.b16 %v1180
    %v2615 = vunpack.c.h.b16 %v1180
    %v2616 = vunpack.c.l.b16 %v1181
    %v2617 = vunpack.c.h.b16 %v1181
    %v2618 = vunpack.c.l.b16 %v1182
    %v2619 = vunpack.c.h.b16 %v1182
    %v2620 = vunpack.c.l.b16 %v1183
    %v2621 = vunpack.c.h.b16 %v1183
    %v2622 = vunpack.c.l.b16 %v1184
    %v2623 = vunpack.c.h.b16 %v1184
    %v2624 = vunpack.c.l.b16 %v1185
    %v2625 = vunpack.c.h.b16 %v1185
    %v2626 = vunpack.c.l.b16 %v1186
    %v2627 = vunpack.c.h.b16 %v1186
    %v2628 = vunpack.c.l.b16 %v1187
    %v2629 = vunpack.c.h.b16 %v1187
    %v2630 = vunpack.c.l.b16 %v1188
    %v2631 = vunpack.c.h.b16 %v1188
    %v2632 = vunpack.c.l.b16 %v1189
    %v2633 = vunpack.c.h.b16 %v1189
    %v2634 = vunpack.c.l.b16 %v1190
    %v2635 = vunpack.c.h.b16 %v1190
    %v2636 = vunpack.c.l.b16 %v1191
    %v2637 = vunpack.c.h.b16 %v1191
    %v2638 = vunpack.c.l.b16 %v1192
    %v2639 = vunpack.c.h.b16 %v1192
    %v2640 = vunpack.c.l.b16 %v1193
    %v2641 = vunpack.c.h.b16 %v1193
    %v2642 = vunpack.c.l.b16 %v1194
    %v2643 = vunpack.c.h.b16 %v1194
    %v2644 = vunpack.c.l.b16 %v1195
    %v2645 = vunpack.c.h.b16 %v1195
    %v2646 = vunpack.c.l.b16 %v1196
    %v2647 = vunpack.c.h.b16 %v1196
    %v2648 = vunpack.c.l.b16 %v1197
    %v2649 = vunpack.c.h.b16 %v1197
    %v2650 = vunpack.c.l.b16 %v1198
    %v2651 = vunpack.c.h.b16 %v1198
    %v2652 = vunpack.c.l.b16 %v1199
    %v2653 = vunpack.c.h.b16 %v1199
    %v2654 = vunpack.c.l.b16 %v1200
    %v2655 = vunpack.c.h.b16 %v1200
    %v2656 = vunpack.c.l.b16 %v1201
    %v2657 = vunpack.c.h.b16 %v1201
    %v2658 = vunpack.c.l.b16 %v1202
    %v2659 = vunpack.c.h.b16 %v1202
    %v2660 = vunpack.c.l.b16 %v1203
    %v2661 = vunpack.c.h.b16 %v1203
    %v2662 = vunpack.c.l.b16 %v1204
    %v2663 = vunpack.c.h.b16 %v1204
    %v2664 = vunpack.c.l.b16 %v1205
    %v2665 = vunpack.c.h.b16 %v1205
    %v2666 = vunpack.c.l.b16 %v1206
    %v2667 = vunpack.c.h.b16 %v1206
    %v2668 = vunpack.c.l.b16 %v1207
    %v2669 = vunpack.c.h.b16 %v1207
    %v2670 = vunpack.c.l.b16 %v1208
    %v2671 = vunpack.c.h.b16 %v1208
    %v2672 = vunpack.c.l.b16 %v1209
    %v2673 = vunpack.c.h.b16 %v1209
    %v2674 = vunpack.c.l.b16 %v1210
    %v2675 = vunpack.c.h.b16 %v1210
    %v2676 = vunpack.c.l.b16 %v1211
    %v2677 = vunpack.c.h.b16 %v1211
    %v2678 = vunpack.c.l.b16 %v1212
    %v2679 = vunpack.c.h.b16 %v1212
    %v2680 = vunpack.c.l.b16 %v1213
    %v2681 = vunpack.c.h.b16 %v1213
    %v2682 = vunpack.c.l.b16 %v1214
    %v2683 = vunpack.c.h.b16 %v1214
    %v2684 = vunpack.c.l.b16 %v1215
    %v2685 = vunpack.c.h.b16 %v1215
    %v2686 = vunpack.c.l.b16 %v1216
    %v2687 = vunpack.c.h.b16 %v1216
    %v2688 = vunpack.c.l.b16 %v1217
    %v2689 = vunpack.c.h.b16 %v1217
    %v2690 = vunpack.c.l.b16 %v1218
    %v2691 = vunpack.c.h.b16 %v1218
    %v2692 = vunpack.c.l.b16 %v1219
    %v2693 = vunpack.c.h.b16 %v1219
    %v2694 = vunpack.c.l.b16 %v1220
    %v2695 = vunpack.c.h.b16 %v1220
    %v2696 = vunpack.c.l.b16 %v1221
    %v2697 = vunpack.c.h.b16 %v1221
    %v2698 = vunpack.c.l.b16 %v1222
    %v2699 = vunpack.c.h.b16 %v1222
    %v2700 = vunpack.c.l.b16 %v1223
    %v2701 = vunpack.c.h.b16 %v1223
    %v2702 = vunpack.c.l.b16 %v1224
    %v2703 = vunpack.c.h.b16 %v1224
    %v2704 = vunpack.c.l.b16 %v1225
    %v2705 = vunpack.c.h.b16 %v1225
    %v2706 = vunpack.c.l.b16 %v1226
    %v2707 = vunpack.c.h.b16 %v1226
    %v2708 = vunpack.c.l.b16 %v1227
    %v2709 = vunpack.c.h.b16 %v1227
    %v2710 = vunpack.c.l.b16 %v1228
    %v2711 = vunpack.c.h.b16 %v1228
    %v2712 = vunpack.c.l.b16 %v1229
    %v2713 = vunpack.c.h.b16 %v1229
    %v2714 = vunpack.c.l.b16 %v1230
    %v2715 = vunpack.c.h.b16 %v1230
    %v2716 = vunpack.c.l.b16 %v1231
    %v2717 = vunpack.c.h.b16 %v1231
    %v2718 = vunpack.c.l.b16 %v1232
    %v2719 = vunpack.c.h.b16 %v1232
    %v2720 = vunpack.c.l.b16 %v1233
    %v2721 = vunpack.c.h.b16 %v1233
    %v2722 = vunpack.c.l.b16 %v1234
    %v2723 = vunpack.c.h.b16 %v1234
    %v2724 = vunpack.c.l.b16 %v1235
    %v2725 = vunpack.c.h.b16 %v1235
    %v2726 = vunpack.c.l.b16 %v1236
    %v2727 = vunpack.c.h.b16 %v1236
    %v2728 = vunpack.c.l.b16 %v1237
    %v2729 = vunpack.c.h.b16 %v1237
    %v2730 = vunpack.c.l.b16 %v1238
    %v2731 = vunpack.c.h.b16 %v1238
    %v2732 = vunpack.c.l.b16 %v1239
    %v2733 = vunpack.c.h.b16 %v1239
    %v2734 = vunpack.c.l.b16 %v1240
    %v2735 = vunpack.c.h.b16 %v1240
    %v2736 = vunpack.c.l.b16 %v1241
    %v2737 = vunpack.c.h.b16 %v1241
    %v2738 = vunpack.c.l.b16 %v1242
    %v2739 = vunpack.c.h.b16 %v1242
    %v2740 = vunpack.c.l.b16 %v1243
    %v2741 = vunpack.c.h.b16 %v1243
    %v2742 = vunpack.c.l.b16 %v1244
    %v2743 = vunpack.c.h.b16 %v1244
    %v2744 = vunpack.c.l.b16 %v1245
    %v2745 = vunpack.c.h.b16 %v1245
    %v2746 = vunpack.c.l.b16 %v1246
    %v2747 = vunpack.c.h.b16 %v1246
    %v2748 = vunpack.c.l.b16 %v1247
    %v2749 = vunpack.c.h.b16 %v1247
    %v2750 = vunpack.c.l.b16 %v1248
    %v2751 = vunpack.c.h.b16 %v1248
    %v2752 = vunpack.c.l.b16 %v1249
    %v2753 = vunpack.c.h.b16 %v1249
    %v2754 = vunpack.c.l.b16 %v1250
    %v2755 = vunpack.c.h.b16 %v1250
    %v2756 = vunpack.c.l.b16 %v1251
    %v2757 = vunpack.c.h.b16 %v1251
    %v2758 = vunpack.c.l.b16 %v1252
    %v2759 = vunpack.c.h.b16 %v1252
    %v2760 = vunpack.c.l.b16 %v1253
    %v2761 = vunpack.c.h.b16 %v1253
    %v2762 = vunpack.c.l.b16 %v1254
    %v2763 = vunpack.c.h.b16 %v1254
    %v2764 = vunpack.c.l.b16 %v1255
    %v2765 = vunpack.c.h.b16 %v1255
    %v2766 = vunpack.c.l.b16 %v1256
    %v2767 = vunpack.c.h.b16 %v1256
    %v2768 = vunpack.c.l.b16 %v1257
    %v2769 = vunpack.c.h.b16 %v1257
    %v2770 = vunpack.c.l.b16 %v1258
    %v2771 = vunpack.c.h.b16 %v1258
    %v2772 = vunpack.c.l.b16 %v1259
    %v2773 = vunpack.c.h.b16 %v1259
    %v2774 = vunpack.c.l.b16 %v1260
    %v2775 = vunpack.c.h.b16 %v1260
    %v2776 = vunpack.c.l.b16 %v1261
    %v2777 = vunpack.c.h.b16 %v1261
    %v2778 = vunpack.c.l.b16 %v1262
    %v2779 = vunpack.c.h.b16 %v1262
    %v2780 = vunpack.c.l.b16 %v1263
    %v2781 = vunpack.c.h.b16 %v1263
    %v2782 = vunpack.c.l.b16 %v1264
    %v2783 = vunpack.c.h.b16 %v1264
    %v2784 = vunpack.c.l.b16 %v1265
    %v2785 = vunpack.c.h.b16 %v1265
    %v2786 = vunpack.c.l.b16 %v1266
    %v2787 = vunpack.c.h.b16 %v1266
    %v2788 = vunpack.c.l.b16 %v1267
    %v2789 = vunpack.c.h.b16 %v1267
    %v2790 = vunpack.c.l.b16 %v1268
    %v2791 = vunpack.c.h.b16 %v1268
    %v2792 = vunpack.c.l.b16 %v1269
    %v2793 = vunpack.c.h.b16 %v1269
    %v2794 = vunpack.c.l.b16 %v1270
    %v2795 = vunpack.c.h.b16 %v1270
    %v2796 = vunpack.c.l.b16 %v1271
    %v2797 = vunpack.c.h.b16 %v1271
    %v2798 = vunpack.c.l.b16 %v1272
    %v2799 = vunpack.c.h.b16 %v1272
    %v2800 = vunpack.c.l.b16 %v1273
    %v2801 = vunpack.c.h.b16 %v1273
    %v2802 = vunpack.c.l.b16 %v1274
    %v2803 = vunpack.c.h.b16 %v1274
    %v2804 = vunpack.c.l.b16 %v1275
    %v2805 = vunpack.c.h.b16 %v1275
    %v2806 = vunpack.c.l.b16 %v1276
    %v2807 = vunpack.c.h.b16 %v1276
    %v2808 = vunpack.c.l.b16 %v1277
    %v2809 = vunpack.c.h.b16 %v1277
    %v2810 = vunpack.c.l.b16 %v1278
    %v2811 = vunpack.c.h.b16 %v1278
    %v2812 = vunpack.c.l.b16 %v1279
    %v2813 = vunpack.c.h.b16 %v1279
    %v2814 = vunpack.c.l.b16 %v1280
    %v2815 = vunpack.c.h.b16 %v1280
    %v2816 = vunpack.c.l.b16 %v1281
    %v2817 = vunpack.c.h.b16 %v1281
    %v2818 = vunpack.c.l.b16 %v1282
    %v2819 = vunpack.c.h.b16 %v1282
    %v2820 = vunpack.c.l.b16 %v1283
    %v2821 = vunpack.c.h.b16 %v1283
    %v2822 = vunpack.c.l.b16 %v1284
    %v2823 = vunpack.c.h.b16 %v1284
    %v2824 = vunpack.c.l.b16 %v1285
    %v2825 = vunpack.c.h.b16 %v1285
    %v2826 = vunpack.c.l.b16 %v1286
    %v2827 = vunpack.c.h.b16 %v1286
    %v2828 = vunpack.c.l.b16 %v1287
    %v2829 = vunpack.c.h.b16 %v1287
    %v2830 = vunpack.c.l.b16 %v1288
    %v2831 = vunpack.c.h.b16 %v1288
    %v2832 = vunpack.c.l.b16 %v1289
    %v2833 = vunpack.c.h.b16 %v1289
    %v2834 = vunpack.c.l.b16 %v1290
    %v2835 = vunpack.c.h.b16 %v1290
    %v2836 = vunpack.c.l.b16 %v1291
    %v2837 = vunpack.c.h.b16 %v1291
    %v2838 = vunpack.c.l.b16 %v1292
    %v2839 = vunpack.c.h.b16 %v1292
    %v2840 = vunpack.c.l.b16 %v1293
    %v2841 = vunpack.c.h.b16 %v1293
    %v2842 = vunpack.c.l.b16 %v1294
    %v2843 = vunpack.c.h.b16 %v1294
    %v2844 = vunpack.c.l.b16 %v1295
    %v2845 = vunpack.c.h.b16 %v1295
    %v2846 = vunpack.c.l.b16 %v1296
    %v2847 = vunpack.c.h.b16 %v1296
    %v2848 = vunpack.c.l.b16 %v1297
    %v2849 = vunpack.c.h.b16 %v1297
    %v2850 = vunpack.c.l.b16 %v1298
    %v2851 = vunpack.c.h.b16 %v1298
    %v2852 = vunpack.c.l.b16 %v1299
    %v2853 = vunpack.c.h.b16 %v1299
    %v2854 = vunpack.c.l.b16 %v1300
    %v2855 = vunpack.c.h.b16 %v1300
    %v2856 = vunpack.c.l.b16 %v1301
    %v2857 = vunpack.c.h.b16 %v1301
    %v2858 = vunpack.c.l.b16 %v1302
    %v2859 = vunpack.c.h.b16 %v1302
    %v2860 = vunpack.c.l.b16 %v1303
    %v2861 = vunpack.c.h.b16 %v1303
    %v2862 = vunpack.c.l.b16 %v1304
    %v2863 = vunpack.c.h.b16 %v1304
    %v2864 = vunpack.c.l.b16 %v1305
    %v2865 = vunpack.c.h.b16 %v1305
    %v2866 = vunpack.c.l.b16 %v1306
    %v2867 = vunpack.c.h.b16 %v1306
    %v2868 = vunpack.c.l.b16 %v1307
    %v2869 = vunpack.c.h.b16 %v1307
    %v2870 = vunpack.c.l.b16 %v1308
    %v2871 = vunpack.c.h.b16 %v1308
    %v2872 = vunpack.c.l.b16 %v1309
    %v2873 = vunpack.c.h.b16 %v1309
    %v2874 = vunpack.c.l.b16 %v1310
    %v2875 = vunpack.c.h.b16 %v1310
    %v2876 = vunpack.c.l.b16 %v1311
    %v2877 = vunpack.c.h.b16 %v1311
    %v2878 = vunpack.c.l.b16 %v1312
    %v2879 = vunpack.c.h.b16 %v1312
    %v2880 = vunpack.c.l.b16 %v1313
    %v2881 = vunpack.c.h.b16 %v1313
    %v2882 = vunpack.c.l.b16 %v1314
    %v2883 = vunpack.c.h.b16 %v1314
    %v2884 = vunpack.c.l.b16 %v1315
    %v2885 = vunpack.c.h.b16 %v1315
    %v2886 = vunpack.c.l.b16 %v1316
    %v2887 = vunpack.c.h.b16 %v1316
    %v2888 = vunpack.c.l.b16 %v1317
    %v2889 = vunpack.c.h.b16 %v1317
    %v2890 = vunpack.c.l.b16 %v1318
    %v2891 = vunpack.c.h.b16 %v1318
    %v2892 = vunpack.c.l.b16 %v1319
    %v2893 = vunpack.c.h.b16 %v1319
    %v2894 = vunpack.c.l.b16 %v1320
    %v2895 = vunpack.c.h.b16 %v1320
    %v2896 = vunpack.c.l.b16 %v1321
    %v2897 = vunpack.c.h.b16 %v1321
    %v2898 = vunpack.c.l.b16 %v1322
    %v2899 = vunpack.c.h.b16 %v1322
    %v2900 = vunpack.c.l.b16 %v1323
    %v2901 = vunpack.c.h.b16 %v1323
    %v2902 = vunpack.c.l.b16 %v1324
    %v2903 = vunpack.c.h.b16 %v1324
    %v2904 = vunpack.c.l.b16 %v1325
    %v2905 = vunpack.c.h.b16 %v1325
    %v2906 = vunpack.c.l.b16 %v1326
    %v2907 = vunpack.c.h.b16 %v1326
    %v2908 = vunpack.c.l.b16 %v1327
    %v2909 = vunpack.c.h.b16 %v1327
    %v2910 = vunpack.c.l.b16 %v1328
    %v2911 = vunpack.c.h.b16 %v1328
    %v2912 = vunpack.c.l.b16 %v1329
    %v2913 = vunpack.c.h.b16 %v1329
    %v2914 = vunpack.c.l.b16 %v1330
    %v2915 = vunpack.c.h.b16 %v1330
    %v2916 = vunpack.c.l.b16 %v1331
    %v2917 = vunpack.c.h.b16 %v1331
    %v2918 = vunpack.c.l.b16 %v1332
    %v2919 = vunpack.c.h.b16 %v1332
    %v2920 = vunpack.c.l.b16 %v1333
    %v2921 = vunpack.c.h.b16 %v1333
    %v2922 = vunpack.c.l.b16 %v1334
    %v2923 = vunpack.c.h.b16 %v1334
    %v2924 = vunpack.c.l.b16 %v1335
    %v2925 = vunpack.c.h.b16 %v1335
    %v2926 = vunpack.c.l.b16 %v1336
    %v2927 = vunpack.c.h.b16 %v1336
    %v2928 = vunpack.c.l.b16 %v1337
    %v2929 = vunpack.c.h.b16 %v1337
    %v2930 = vunpack.c.l.b16 %v1338
    %v2931 = vunpack.c.h.b16 %v1338
    %v2932 = vunpack.c.l.b16 %v1339
    %v2933 = vunpack.c.h.b16 %v1339
    %v2934 = vunpack.c.l.b16 %v1340
    %v2935 = vunpack.c.h.b16 %v1340
    %v2936 = vunpack.c.l.b16 %v1341
    %v2937 = vunpack.c.h.b16 %v1341
    %v2938 = vunpack.c.l.b16 %v1342
    %v2939 = vunpack.c.h.b16 %v1342
    %v2940 = vunpack.c.l.b16 %v1343
    %v2941 = vunpack.c.h.b16 %v1343
    %v2942 = vunpack.c.l.b16 %v1344
    %v2943 = vunpack.c.h.b16 %v1344
    %v2944 = vunpack.c.l.b16 %v1345
    %v2945 = vunpack.c.h.b16 %v1345
    %v2946 = vunpack.c.l.b16 %v1346
    %v2947 = vunpack.c.h.b16 %v1346
    %v2948 = vunpack.c.l.b16 %v1347
    %v2949 = vunpack.c.h.b16 %v1347
    %v2950 = vunpack.c.l.b16 %v1348
    %v2951 = vunpack.c.h.b16 %v1348
    %v2952 = vunpack.c.l.b16 %v1349
    %v2953 = vunpack.c.h.b16 %v1349
    %v2954 = vunpack.c.l.b16 %v1350
    %v2955 = vunpack.c.h.b16 %v1350
    %v2956 = vunpack.c.l.b16 %v1351
    %v2957 = vunpack.c.h.b16 %v1351
    %v2958 = vunpack.c.l.b16 %v1352
    %v2959 = vunpack.c.h.b16 %v1352
    %v2960 = vunpack.c.l.b16 %v1353
    %v2961 = vunpack.c.h.b16 %v1353
    %v2962 = vunpack.c.l.b16 %v1354
    %v2963 = vunpack.c.h.b16 %v1354
    %v2964 = vunpack.c.l.b16 %v1355
    %v2965 = vunpack.c.h.b16 %v1355
    %v2966 = vunpack.c.l.b16 %v1356
    %v2967 = vunpack.c.h.b16 %v1356
    %v2968 = vunpack.c.l.b16 %v1357
    %v2969 = vunpack.c.h.b16 %v1357
    %v2970 = vunpack.c.l.b16 %v1358
    %v2971 = vunpack.c.h.b16 %v1358
    %v2972 = vunpack.c.l.b16 %v1359
    %v2973 = vunpack.c.h.b16 %v1359
    %v2974 = vunpack.c.l.b16 %v1360
    %v2975 = vunpack.c.h.b16 %v1360
    %v2976 = vunpack.c.l.b16 %v1361
    %v2977 = vunpack.c.h.b16 %v1361
    %v2978 = vunpack.c.l.b16 %v1362
    %v2979 = vunpack.c.h.b16 %v1362
    %v2980 = vunpack.c.l.b16 %v1363
    %v2981 = vunpack.c.h.b16 %v1363
    %v2982 = vunpack.c.l.b16 %v1364
    %v2983 = vunpack.c.h.b16 %v1364
    %v2984 = vunpack.c.l.b16 %v1365
    %v2985 = vunpack.c.h.b16 %v1365
    %v2986 = vunpack.c.l.b16 %v1366
    %v2987 = vunpack.c.h.b16 %v1366
    %v2988 = vunpack.c.l.b16 %v1367
    %v2989 = vunpack.c.h.b16 %v1367
    %v2990 = vunpack.c.l.b16 %v1368
    %v2991 = vunpack.c.h.b16 %v1368
    %v2992 = vunpack.c.l.b16 %v1369
    %v2993 = vunpack.c.h.b16 %v1369
    %v2994 = vunpack.c.l.b16 %v1370
    %v2995 = vunpack.c.h.b16 %v1370
    %v2996 = vunpack.c.l.b16 %v1371
    %v2997 = vunpack.c.h.b16 %v1371
    %v2998 = vunpack.c.l.b16 %v1372
    %v2999 = vunpack.c.h.b16 %v1372
    %v3000 = vunpack.c.l.b16 %v1373
    %v3001 = vunpack.c.h.b16 %v1373
    %v3002 = vunpack.c.l.b16 %v1374
    %v3003 = vunpack.c.h.b16 %v1374
    %v3004 = vunpack.c.l.b16 %v1375
    %v3005 = vunpack.c.h.b16 %v1375
    %v3006 = vunpack.c.l.b16 %v1376
    %v3007 = vunpack.c.h.b16 %v1376
    %v3008 = vunpack.c.l.b16 %v1377
    %v3009 = vunpack.c.h.b16 %v1377
    %v3010 = vunpack.c.l.b16 %v1378
    %v3011 = vunpack.c.h.b16 %v1378
    %v3012 = vunpack.c.l.b16 %v1379
    %v3013 = vunpack.c.h.b16 %v1379
    %v3014 = vunpack.c.l.b16 %v1380
    %v3015 = vunpack.c.h.b16 %v1380
    %v3016 = vunpack.c.l.b16 %v1381
    %v3017 = vunpack.c.h.b16 %v1381
    %v3018 = vunpack.c.l.b16 %v1382
    %v3019 = vunpack.c.h.b16 %v1382
    %v3020 = vunpack.c.l.b16 %v1383
    %v3021 = vunpack.c.h.b16 %v1383
    %v3022 = vunpack.c.l.b16 %v1384
    %v3023 = vunpack.c.h.b16 %v1384
    %v3024 = vunpack.c.l.b16 %v1385
    %v3025 = vunpack.c.h.b16 %v1385
    %v3026 = vunpack.c.l.b16 %v1386
    %v3027 = vunpack.c.h.b16 %v1386
    %v3028 = vunpack.c.l.b16 %v1387
    %v3029 = vunpack.c.h.b16 %v1387
    %v3030 = vunpack.c.l.b16 %v1388
    %v3031 = vunpack.c.h.b16 %v1388
    %v3032 = vunpack.c.l.b16 %v1389
    %v3033 = vunpack.c.h.b16 %v1389
    %v3034 = vpack.c.b16 %v1982, %v1978
    %v3035 = vpack.c.b16 %v1983, %v1979
    %v3036 = vpack.c.b16 %v1984, %v1980
    %v3037 = vpack.c.b16 %v1985, %v1981
    %v3038 = vpack.c.b16 %v1990, %v1986
    %v3039 = vpack.c.b16 %v1991, %v1987
    %v3040 = vpack.c.b16 %v1992, %v1988
    %v3041 = vpack.c.b16 %v1993, %v1989
    %v3042 = vpack.c.b16 %v1998, %v1994
    %v3043 = vpack.c.b16 %v1999, %v1995
    %v3044 = vpack.c.b16 %v2000, %v1996
    %v3045 = vpack.c.b16 %v2001, %v1997
    %v3046 = vpack.c.b16 %v2006, %v2002
    %v3047 = vpack.c.b16 %v2007, %v2003
    %v3048 = vpack.c.b16 %v2008, %v2004
    %v3049 = vpack.c.b16 %v2009, %v2005
    %v3050 = vpack.c.b16 %v2014, %v2010
    %v3051 = vpack.c.b16 %v2015, %v2011
    %v3052 = vpack.c.b16 %v2016, %v2012
    %v3053 = vpack.c.b16 %v2017, %v2013
    %v3054 = vpack.c.b16 %v2022, %v2018
    %v3055 = vpack.c.b16 %v2023, %v2019
    %v3056 = vpack.c.b16 %v2024, %v2020
    %v3057 = vpack.c.b16 %v2025, %v2021
    %v3058 = vpack.c.b16 %v2030, %v2026
    %v3059 = vpack.c.b16 %v2031, %v2027
    %v3060 = vpack.c.b16 %v2032, %v2028
    %v3061 = vpack.c.b16 %v2033, %v2029
    %v3062 = vpack.c.b16 %v2038, %v2034
    %v3063 = vpack.c.b16 %v2039, %v2035
    %v3064 = vpack.c.b16 %v2040, %v2036
    %v3065 = vpack.c.b16 %v2041, %v2037
    %v3066 = vpack.c.b16 %v2046, %v2042
    %v3067 = vpack.c.b16 %v2047, %v2043
    %v3068 = vpack.c.b16 %v2048, %v2044
    %v3069 = vpack.c.b16 %v2049, %v2045
    %v3070 = vpack.c.b16 %v2054, %v2050
    %v3071 = vpack.c.b16 %v2055, %v2051
    %v3072 = vpack.c.b16 %v2056, %v2052
    %v3073 = vpack.c.b16 %v2057, %v2053
    %v3074 = vpack.c.b16 %v2062, %v2058
    %v3075 = vpack.c.b16 %v2063, %v2059
    %v3076 = vpack.c.b16 %v2064, %v2060
    %v3077 = vpack.c.b16 %v2065, %v2061
    %v3078 = vpack.c.b16 %v2070, %v2066
    %v3079 = vpack.c.b16 %v2071, %v2067
    %v3080 = vpack.c.b16 %v2072, %v2068
    %v3081 = vpack.c.b16 %v2073, %v2069
    %v3082 = vpack.c.b16 %v2078, %v2074
    %v3083 = vpack.c.b16 %v2079, %v2075
    %v3084 = vpack.c.b16 %v2080, %v2076
    %v3085 = vpack.c.b16 %v2081, %v2077
    %v3086 = vpack.c.b16 %v2086, %v2082
    %v3087 = vpack.c.b16 %v2087, %v2083
    %v3088 = vpack.c.b16 %v2088, %v2084
    %v3089 = vpack.c.b16 %v2089, %v2085
    %v3090 = vpack.c.b16 %v2094, %v2090
    %v3091 = vpack.c.b16 %v2095, %v2091
    %v3092 = vpack.c.b16 %v2096, %v2092
    %v3093 = vpack.c.b16 %v2097, %v2093
    %v3094 = vpack.c.b16 %v2102, %v2098
    %v3095 = vpack.c.b16 %v2103, %v2099
    %v3096 = vpack.c.b16 %v2104, %v2100
    %v3097 = vpack.c.b16 %v2105, %v2101
    %v3098 = vpack.c.b16 %v2110, %v2106
    %v3099 = vpack.c.b16 %v2111, %v2107
    %v3100 = vpack.c.b16 %v2112, %v2108
    %v3101 = vpack.c.b16 %v2113, %v2109
    %v3102 = vpack.c.b16 %v2118, %v2114
    %v3103 = vpack.c.b16 %v2119, %v2115
    %v3104 = vpack.c.b16 %v2120, %v2116
    %v3105 = vpack.c.b16 %v2121, %v2117
    %v3106 = vpack.c.b16 %v2126, %v2122
    %v3107 = vpack.c.b16 %v2127, %v2123
    %v3108 = vpack.c.b16 %v2128, %v2124
    %v3109 = vpack.c.b16 %v2129, %v2125
    %v3110 = vpack.c.b16 %v2134, %v2130
    %v3111 = vpack.c.b16 %v2135, %v2131
    %v3112 = vpack.c.b16 %v2136, %v2132
    %v3113 = vpack.c.b16 %v2137, %v2133
    %v3114 = vpack.c.b16 %v2142, %v2138
    %v3115 = vpack.c.b16 %v2143, %v2139
    %v3116 = vpack.c.b16 %v2144, %v2140
    %v3117 = vpack.c.b16 %v2145, %v2141
    %v3118 = vpack.c.b16 %v2150, %v2146
    %v3119 = vpack.c.b16 %v2151, %v2147
    %v3120 = vpack.c.b16 %v2152, %v2148
    %v3121 = vpack.c.b16 %v2153, %v2149
    %v3122 = vpack.c.b16 %v2158, %v2154
    %v3123 = vpack.c.b16 %v2159, %v2155
    %v3124 = vpack.c.b16 %v2160, %v2156
    %v3125 = vpack.c.b16 %v2161, %v2157
    %v3126 = vpack.c.b16 %v2166, %v2162
    %v3127 = vpack.c.b16 %v2167, %v2163
    %v3128 = vpack.c.b16 %v2168, %v2164
    %v3129 = vpack.c.b16 %v2169, %v2165
    %v3130 = vpack.c.b16 %v2174, %v2170
    %v3131 = vpack.c.b16 %v2175, %v2171
    %v3132 = vpack.c.b16 %v2176, %v2172
    %v3133 = vpack.c.b16 %v2177, %v2173
    %v3134 = vpack.c.b16 %v2182, %v2178
    %v3135 = vpack.c.b16 %v2183, %v2179
    %v3136 = vpack.c.b16 %v2184, %v2180
    %v3137 = vpack.c.b16 %v2185, %v2181
    %v3138 = vpack.c.b16 %v2190, %v2186
    %v3139 = vpack.c.b16 %v2191, %v2187
    %v3140 = vpack.c.b16 %v2192, %v2188
    %v3141 = vpack.c.b16 %v2193, %v2189
    %v3142 = vpack.c.b16 %v2198, %v2194
    %v3143 = vpack.c.b16 %v2199, %v2195
    %v3144 = vpack.c.b16 %v2200, %v2196
    %v3145 = vpack.c.b16 %v2201, %v2197
    %v3146 = vpack.c.b16 %v2206, %v2202
    %v3147 = vpack.c.b16 %v2207, %v2203
    %v3148 = vpack.c.b16 %v2208, %v2204
    %v3149 = vpack.c.b16 %v2209, %v2205
    %v3150 = vpack.c.b16 %v2214, %v2210
    %v3151 = vpack.c.b16 %v2215, %v2211
    %v3152 = vpack.c.b16 %v2216, %v2212
    %v3153 = vpack.c.b16 %v2217, %v2213
    %v3154 = vpack.c.b16 %v2222, %v2218
    %v3155 = vpack.c.b16 %v2223, %v2219
    %v3156 = vpack.c.b16 %v2224, %v2220
    %v3157 = vpack.c.b16 %v2225, %v2221
    %v3158 = vpack.c.b16 %v2230, %v2226
    %v3159 = vpack.c.b16 %v2231, %v2227
    %v3160 = vpack.c.b16 %v2232, %v2228
    %v3161 = vpack.c.b16 %v2233, %v2229
    %v3162 = vpack.c.b16 %v2238, %v2234
    %v3163 = vpack.c.b16 %v2239, %v2235
    %v3164 = vpack.c.b16 %v2240, %v2236
    %v3165 = vpack.c.b16 %v2241, %v2237
    %v3166 = vpack.c.b16 %v2246, %v2242
    %v3167 = vpack.c.b16 %v2247, %v2243
    %v3168 = vpack.c.b16 %v2248, %v2244
    %v3169 = vpack.c.b16 %v2249, %v2245
    %v3170 = vpack.c.b16 %v2254, %v2250
    %v3171 = vpack.c.b16 %v2255, %v2251
    %v3172 = vpack.c.b16 %v2256, %v2252
    %v3173 = vpack.c.b16 %v2257, %v2253
    %v3174 = vpack.c.b16 %v2262, %v2258
    %v3175 = vpack.c.b16 %v2263, %v2259
    %v3176 = vpack.c.b16 %v2264, %v2260
    %v3177 = vpack.c.b16 %v2265, %v2261
    %v3178 = vpack.c.b16 %v2270, %v2266
    %v3179 = vpack.c.b16 %v2271, %v2267
    %v3180 = vpack.c.b16 %v2272, %v2268
    %v3181 = vpack.c.b16 %v2273, %v2269
    %v3182 = vpack.c.b16 %v2278, %v2274
    %v3183 = vpack.c.b16 %v2279, %v2275
    %v3184 = vpack.c.b16 %v2280, %v2276
    %v3185 = vpack.c.b16 %v2281, %v2277
    %v3186 = vpack.c.b16 %v2286, %v2282
    %v3187 = vpack.c.b16 %v2287, %v2283
    %v3188 = vpack.c.b16 %v2288, %v2284
    %v3189 = vpack.c.b16 %v2289, %v2285
    %v3190 = vpack.c.b16 %v2294, %v2290
    %v3191 = vpack.c.b16 %v2295, %v2291
    %v3192 = vpack.c.b16 %v2296, %v2292
    %v3193 = vpack.c.b16 %v2297, %v2293
    %v3194 = vpack.c.b16 %v2302, %v2298
    %v3195 = vpack.c.b16 %v2303, %v2299
    %v3196 = vpack.c.b16 %v2304, %v2300
    %v3197 = vpack.c.b16 %v2305, %v2301
    %v3198 = vpack.c.b16 %v2310, %v2306
    %v3199 = vpack.c.b16 %v2311, %v2307
    %v3200 = vpack.c.b16 %v2312, %v2308
    %v3201 = vpack.c.b16 %v2313, %v2309
    %v3202 = vpack.c.b16 %v2318, %v2314
    %v3203 = vpack.c.b16 %v2319, %v2315
    %v3204 = vpack.c.b16 %v2320, %v2316
    %v3205 = vpack.c.b16 %v2321, %v2317
    %v3206 = vpack.c.b16 %v2326, %v2322
    %v3207 = vpack.c.b16 %v2327, %v2323
    %v3208 = vpack.c.b16 %v2328, %v2324
    %v3209 = vpack.c.b16 %v2329, %v2325
    %v3210 = vpack.c.b16 %v2334, %v2330
    %v3211 = vpack.c.b16 %v2335, %v2331
    %v3212 = vpack.c.b16 %v2336, %v2332
    %v3213 = vpack.c.b16 %v2337, %v2333
    %v3214 = vpack.c.b16 %v2342, %v2338
    %v3215 = vpack.c.b16 %v2343, %v2339
    %v3216 = vpack.c.b16 %v2344, %v2340
    %v3217 = vpack.c.b16 %v2345, %v2341
    %v3218 = vpack.c.b16 %v2350, %v2346
    %v3219 = vpack.c.b16 %v2351, %v2347
    %v3220 = vpack.c.b16 %v2352, %v2348
    %v3221 = vpack.c.b16 %v2353, %v2349
    %v3222 = vpack.c.b16 %v2358, %v2354
    %v3223 = vpack.c.b16 %v2359, %v2355
    %v3224 = vpack.c.b16 %v2360, %v2356
    %v3225 = vpack.c.b16 %v2361, %v2357
    %v3226 = vpack.c.b16 %v2366, %v2362
    %v3227 = vpack.c.b16 %v2367, %v2363
    %v3228 = vpack.c.b16 %v2368, %v2364
    %v3229 = vpack.c.b16 %v2369, %v2365
    %v3230 = vpack.c.b16 %v2374, %v2370
    %v3231 = vpack.c.b16 %v2375, %v2371
    %v3232 = vpack.c.b16 %v2376, %v2372
    %v3233 = vpack.c.b16 %v2377, %v2373
    %v3234 = vpack.c.b16 %v2382, %v2378
    %v3235 = vpack.c.b16 %v2383, %v2379
    %v3236 = vpack.c.b16 %v2384, %v2380
    %v3237 = vpack.c.b16 %v2385, %v2381
    %v3238 = vpack.c.b16 %v2390, %v2386
    %v3239 = vpack.c.b16 %v2391, %v2387
    %v3240 = vpack.c.b16 %v2392, %v2388
    %v3241 = vpack.c.b16 %v2393, %v2389
    %v3242 = vpack.c.b16 %v2398, %v2394
    %v3243 = vpack.c.b16 %v2399, %v2395
    %v3244 = vpack.c.b16 %v2400, %v2396
    %v3245 = vpack.c.b16 %v2401, %v2397
    %v3246 = vpack.c.b16 %v2406, %v2402
    %v3247 = vpack.c.b16 %v2407, %v2403
    %v3248 = vpack.c.b16 %v2408, %v2404
    %v3249 = vpack.c.b16 %v2409, %v2405
    %v3250 = vpack.c.b16 %v2414, %v2410
    %v3251 = vpack.c.b16 %v2415, %v2411
    %v3252 = vpack.c.b16 %v2416, %v2412
    %v3253 = vpack.c.b16 %v2417, %v2413
    %v3254 = vpack.c.b16 %v2422, %v2418
    %v3255 = vpack.c.b16 %v2423, %v2419
    %v3256 = vpack.c.b16 %v2424, %v2420
    %v3257 = vpack.c.b16 %v2425, %v2421
    %v3258 = vpack.c.b16 %v2430, %v2426
    %v3259 = vpack.c.b16 %v2431, %v2427
    %v3260 = vpack.c.b16 %v2432, %v2428
    %v3261 = vpack.c.b16 %v2433, %v2429
    %v3262 = vpack.c.b16 %v2438, %v2434
    %v3263 = vpack.c.b16 %v2439, %v2435
    %v3264 = vpack.c.b16 %v2440, %v2436
    %v3265 = vpack.c.b16 %v2441, %v2437
    %v3266 = vpack.c.b16 %v2446, %v2442
    %v3267 = vpack.c.b16 %v2447, %v2443
    %v3268 = vpack.c.b16 %v2448, %v2444
    %v3269 = vpack.c.b16 %v2449, %v2445
    %v3270 = vpack.c.b16 %v2454, %v2450
    %v3271 = vpack.c.b16 %v2455, %v2451
    %v3272 = vpack.c.b16 %v2456, %v2452
    %v3273 = vpack.c.b16 %v2457, %v2453
    %v3274 = vpack.c.b16 %v2462, %v2458
    %v3275 = vpack.c.b16 %v2463, %v2459
    %v3276 = vpack.c.b16 %v2464, %v2460
    %v3277 = vpack.c.b16 %v2465, %v2461
    %v3278 = vpack.c.b16 %v2470, %v2466
    %v3279 = vpack.c.b16 %v2471, %v2467
    %v3280 = vpack.c.b16 %v2472, %v2468
    %v3281 = vpack.c.b16 %v2473, %v2469
    %v3282 = vpack.c.b16 %v2478, %v2474
    %v3283 = vpack.c.b16 %v2479, %v2475
    %v3284 = vpack.c.b16 %v2480, %v2476
    %v3285 = vpack.c.b16 %v2481, %v2477
    %v3286 = vpack.c.b16 %v2486, %v2482
    %v3287 = vpack.c.b16 %v2487, %v2483
    %v3288 = vpack.c.b16 %v2488, %v2484
    %v3289 = vpack.c.b16 %v2489, %v2485
    %v3290 = vpack.c.b16 %v2494, %v2490
    %v3291 = vpack.c.b16 %v2495, %v2491
    %v3292 = vpack.c.b16 %v2496, %v2492
    %v3293 = vpack.c.b16 %v2497, %v2493
    %v3294 = vpack.c.b16 %v2502, %v2498
    %v3295 = vpack.c.b16 %v2503, %v2499
    %v3296 = vpack.c.b16 %v2504, %v2500
    %v3297 = vpack.c.b16 %v2505, %v2501
    %v3298 = vpack.c.b16 %v2510, %v2506
    %v3299 = vpack.c.b16 %v2511, %v2507
    %v3300 = vpack.c.b16 %v2512, %v2508
    %v3301 = vpack.c.b16 %v2513, %v2509
    %v3302 = vpack.c.b16 %v2518, %v2514
    %v3303 = vpack.c.b16 %v2519, %v2515
    %v3304 = vpack.c.b16 %v2520, %v2516
    %v3305 = vpack.c.b16 %v2521, %v2517
    %v3306 = vpack.c.b16 %v2526, %v2522
    %v3307 = vpack.c.b16 %v2527, %v2523
    %v3308 = vpack.c.b16 %v2528, %v2524
    %v3309 = vpack.c.b16 %v2529, %v2525
    %v3310 = vpack.c.b16 %v2534, %v2530
    %v3311 = vpack.c.b16 %v2535, %v2531
    %v3312 = vpack.c.b16 %v2536, %v2532
    %v3313 = vpack.c.b16 %v2537, %v2533
    %v3314 = vpack.c.b16 %v2542, %v2538
    %v3315 = vpack.c.b16 %v2543, %v2539
    %v3316 = vpack.c.b16 %v2544, %v2540
    %v3317 = vpack.c.b16 %v2545, %v2541
    %v3318 = vpack.c.b16 %v2550, %v2546
    %v3319 = vpack.c.b16 %v2551, %v2547
    %v3320 = vpack.c.b16 %v2552, %v2548
    %v3321 = vpack.c.b16 %v2553, %v2549
    %v3322 = vpack.c.b16 %v2558, %v2554
    %v3323 = vpack.c.b16 %v2559, %v2555
    %v3324 = vpack.c.b16 %v2560, %v2556
    %v3325 = vpack.c.b16 %v2561, %v2557
    %v3326 = vpack.c.b16 %v2566, %v2562
    %v3327 = vpack.c.b16 %v2567, %v2563
    %v3328 = vpack.c.b16 %v2568, %v2564
    %v3329 = vpack.c.b16 %v2569, %v2565
    %v3330 = vpack.c.b16 %v2574, %v2570
    %v3331 = vpack.c.b16 %v2575, %v2571
    %v3332 = vpack.c.b16 %v2576, %v2572
    %v3333 = vpack.c.b16 %v2577, %v2573
    %v3334 = vpack.c.b16 %v2582, %v2578
    %v3335 = vpack.c.b16 %v2583, %v2579
    %v3336 = vpack.c.b16 %v2584, %v2580
    %v3337 = vpack.c.b16 %v2585, %v2581
    %v3338 = vpack.c.b16 %v2590, %v2586
    %v3339 = vpack.c.b16 %v2591, %v2587
    %v3340 = vpack.c.b16 %v2592, %v2588
    %v3341 = vpack.c.b16 %v2593, %v2589
    %v3342 = vpack.c.b16 %v2598, %v2594
    %v3343 = vpack.c.b16 %v2599, %v2595
    %v3344 = vpack.c.b16 %v2600, %v2596
    %v3345 = vpack.c.b16 %v2601, %v2597
    %v3346 = vpack.c.b16 %v2606, %v2602
    %v3347 = vpack.c.b16 %v2607, %v2603
    %v3348 = vpack.c.b16 %v2608, %v2604
    %v3349 = vpack.c.b16 %v2609, %v2605
    %v3350 = vpack.c.b16 %v2614, %v2610
    %v3351 = vpack.c.b16 %v2615, %v2611
    %v3352 = vpack.c.b16 %v2616, %v2612
    %v3353 = vpack.c.b16 %v2617, %v2613
    %v3354 = vpack.c.b16 %v2622, %v2618
    %v3355 = vpack.c.b16 %v2623, %v2619
    %v3356 = vpack.c.b16 %v2624, %v2620
    %v3357 = vpack.c.b16 %v2625, %v2621
    %v3358 = vpack.c.b16 %v2630, %v2626
    %v3359 = vpack.c.b16 %v2631, %v2627
    %v3360 = vpack.c.b16 %v2632, %v2628
    %v3361 = vpack.c.b16 %v2633, %v2629
    %v3362 = vpack.c.b16 %v2638, %v2634
    %v3363 = vpack.c.b16 %v2639, %v2635
    %v3364 = vpack.c.b16 %v2640, %v2636
    %v3365 = vpack.c.b16 %v2641, %v2637
    %v3366 = vpack.c.b16 %v2646, %v2642
    %v3367 = vpack.c.b16 %v2647, %v2643
    %v3368 = vpack.c.b16 %v2648, %v2644
    %v3369 = vpack.c.b16 %v2649, %v2645
    %v3370 = vpack.c.b16 %v2654, %v2650
    %v3371 = vpack.c.b16 %v2655, %v2651
    %v3372 = vpack.c.b16 %v2656, %v2652
    %v3373 = vpack.c.b16 %v2657, %v2653
    %v3374 = vpack.c.b16 %v2662, %v2658
    %v3375 = vpack.c.b16 %v2663, %v2659
    %v3376 = vpack.c.b16 %v2664, %v2660
    %v3377 = vpack.c.b16 %v2665, %v2661
    %v3378 = vpack.c.b16 %v2670, %v2666
    %v3379 = vpack.c.b16 %v2671, %v2667
    %v3380 = vpack.c.b16 %v2672, %v2668
    %v3381 = vpack.c.b16 %v2673, %v2669
    %v3382 = vpack.c.b16 %v2678, %v2674
    %v3383 = vpack.c.b16 %v2679, %v2675
    %v3384 = vpack.c.b16 %v2680, %v2676
    %v3385 = vpack.c.b16 %v2681, %v2677
    %v3386 = vpack.c.b16 %v2686, %v2682
    %v3387 = vpack.c.b16 %v2687, %v2683
    %v3388 = vpack.c.b16 %v2688, %v2684
    %v3389 = vpack.c.b16 %v2689, %v2685
    %v3390 = vpack.c.b16 %v2694, %v2690
    %v3391 = vpack.c.b16 %v2695, %v2691
    %v3392 = vpack.c.b16 %v2696, %v2692
    %v3393 = vpack.c.b16 %v2697, %v2693
    %v3394 = vpack.c.b16 %v2702, %v2698
    %v3395 = vpack.c.b16 %v2703, %v2699
    %v3396 = vpack.c.b16 %v2704, %v2700
    %v3397 = vpack.c.b16 %v2705, %v2701
    %v3398 = vpack.c.b16 %v2710, %v2706
    %v3399 = vpack.c.b16 %v2711, %v2707
    %v3400 = vpack.c.b16 %v2712, %v2708
    %v3401 = vpack.c.b16 %v2713, %v2709
    %v3402 = vpack.c.b16 %v2718, %v2714
    %v3403 = vpack.c.b16 %v2719, %v2715
    %v3404 = vpack.c.b16 %v2720, %v2716
    %v3405 = vpack.c.b16 %v2721, %v2717
    %v3406 = vpack.c.b16 %v2726, %v2722
    %v3407 = vpack.c.b16 %v2727, %v2723
    %v3408 = vpack.c.b16 %v2728, %v2724
    %v3409 = vpack.c.b16 %v2729, %v2725
    %v3410 = vpack.c.b16 %v2734, %v2730
    %v3411 = vpack.c.b16 %v2735, %v2731
    %v3412 = vpack.c.b16 %v2736, %v2732
    %v3413 = vpack.c.b16 %v2737, %v2733
    %v3414 = vpack.c.b16 %v2742, %v2738
    %v3415 = vpack.c.b16 %v2743, %v2739
    %v3416 = vpack.c.b16 %v2744, %v2740
    %v3417 = vpack.c.b16 %v2745, %v2741
    %v3418 = vpack.c.b16 %v2750, %v2746
    %v3419 = vpack.c.b16 %v2751, %v2747
    %v3420 = vpack.c.b16 %v2752, %v2748
    %v3421 = vpack.c.b16 %v2753, %v2749
    %v3422 = vpack.c.b16 %v2758, %v2754
    %v3423 = vpack.c.b16 %v2759, %v2755
    %v3424 = vpack.c.b16 %v2760, %v2756
    %v3425 = vpack.c.b16 %v2761, %v2757
    %v3426 = vpack.c.b16 %v2766, %v2762
    %v3427 = vpack.c.b16 %v2767, %v2763
    %v3428 = vpack.c.b16 %v2768, %v2764
    %v3429 = vpack.c.b16 %v2769, %v2765
    %v3430 = vpack.c.b16 %v2774, %v2770
    %v3431 = vpack.c.b16 %v2775, %v2771
    %v3432 = vpack.c.b16 %v2776, %v2772
    %v3433 = vpack.c.b16 %v2777, %v2773
    %v3434 = vpack.c.b16 %v2782, %v2778
    %v3435 = vpack.c.b16 %v2783, %v2779
    %v3436 = vpack.c.b16 %v2784, %v2780
    %v3437 = vpack.c.b16 %v2785, %v2781
    %v3438 = vpack.c.b16 %v2790, %v2786
    %v3439 = vpack.c.b16 %v2791, %v2787
    %v3440 = vpack.c.b16 %v2792, %v2788
    %v3441 = vpack.c.b16 %v2793, %v2789
    %v3442 = vpack.c.b16 %v2798, %v2794
    %v3443 = vpack.c.b16 %v2799, %v2795
    %v3444 = vpack.c.b16 %v2800, %v2796
    %v3445 = vpack.c.b16 %v2801, %v2797
    %v3446 = vpack.c.b16 %v2806, %v2802
    %v3447 = vpack.c.b16 %v2807, %v2803
    %v3448 = vpack.c.b16 %v2808, %v2804
    %v3449 = vpack.c.b16 %v2809, %v2805
    %v3450 = vpack.c.b16 %v2814, %v2810
    %v3451 = vpack.c.b16 %v2815, %v2811
    %v3452 = vpack.c.b16 %v2816, %v2812
    %v3453 = vpack.c.b16 %v2817, %v2813
    %v3454 = vpack.c.b16 %v2822, %v2818
    %v3455 = vpack.c.b16 %v2823, %v2819
    %v3456 = vpack.c.b16 %v2824, %v2820
    %v3457 = vpack.c.b16 %v2825, %v2821
    %v3458 = vpack.c.b16 %v2830, %v2826
    %v3459 = vpack.c.b16 %v2831, %v2827
    %v3460 = vpack.c.b16 %v2832, %v2828
    %v3461 = vpack.c.b16 %v2833, %v2829
    %v3462 = vpack.c.b16 %v2838, %v2834
    %v3463 = vpack.c.b16 %v2839, %v2835
    %v3464 = vpack.c.b16 %v2840, %v2836
    %v3465 = vpack.c.b16 %v2841, %v2837
    %v3466 = vpack.c.b16 %v2846, %v2842
    %v3467 = vpack.c.b16 %v2847, %v2843
    %v3468 = vpack.c.b16 %v2848, %v2844
    %v3469 = vpack.c.b16 %v2849, %v2845
    %v3470 = vpack.c.b16 %v2854, %v2850
    %v3471 = vpack.c.b16 %v2855, %v2851
    %v3472 = vpack.c.b16 %v2856, %v2852
    %v3473 = vpack.c.b16 %v2857, %v2853
    %v3474 = vpack.c.b16 %v2862, %v2858
    %v3475 = vpack.c.b16 %v2863, %v2859
    %v3476 = vpack.c.b16 %v2864, %v2860
    %v3477 = vpack.c.b16 %v2865, %v2861
    %v3478 = vpack.c.b16 %v2870, %v2866
    %v3479 = vpack.c.b16 %v2871, %v2867
    %v3480 = vpack.c.b16 %v2872, %v2868
    %v3481 = vpack.c.b16 %v2873, %v2869
    %v3482 = vpack.c.b16 %v2878, %v2874
    %v3483 = vpack.c.b16 %v2879, %v2875
    %v3484 = vpack.c.b16 %v2880, %v2876
    %v3485 = vpack.c.b16 %v2881, %v2877
    %v3486 = vpack.c.b16 %v2886, %v2882
    %v3487 = vpack.c.b16 %v2887, %v2883
    %v3488 = vpack.c.b16 %v2888, %v2884
    %v3489 = vpack.c.b16 %v2889, %v2885
    %v3490 = vpack.c.b16 %v2894, %v2890
    %v3491 = vpack.c.b16 %v2895, %v2891
    %v3492 = vpack.c.b16 %v2896, %v2892
    %v3493 = vpack.c.b16 %v2897, %v2893
    %v3494 = vpack.c.b16 %v2902, %v2898
    %v3495 = vpack.c.b16 %v2903, %v2899
    %v3496 = vpack.c.b16 %v2904, %v2900
    %v3497 = vpack.c.b16 %v2905, %v2901
    %v3498 = vpack.c.b16 %v2910, %v2906
    %v3499 = vpack.c.b16 %v2911, %v2907
    %v3500 = vpack.c.b16 %v2912, %v2908
    %v3501 = vpack.c.b16 %v2913, %v2909
    %v3502 = vpack.c.b16 %v2918, %v2914
    %v3503 = vpack.c.b16 %v2919, %v2915
    %v3504 = vpack.c.b16 %v2920, %v2916
    %v3505 = vpack.c.b16 %v2921, %v2917
    %v3506 = vpack.c.b16 %v2926, %v2922
    %v3507 = vpack.c.b16 %v2927, %v2923
    %v3508 = vpack.c.b16 %v2928, %v2924
    %v3509 = vpack.c.b16 %v2929, %v2925
    %v3510 = vpack.c.b16 %v2934, %v2930
    %v3511 = vpack.c.b16 %v2935, %v2931
    %v3512 = vpack.c.b16 %v2936, %v2932
    %v3513 = vpack.c.b16 %v2937, %v2933
    %v3514 = vpack.c.b16 %v2942, %v2938
    %v3515 = vpack.c.b16 %v2943, %v2939
    %v3516 = vpack.c.b16 %v2944, %v2940
    %v3517 = vpack.c.b16 %v2945, %v2941
    %v3518 = vpack.c.b16 %v2950, %v2946
    %v3519 = vpack.c.b16 %v2951, %v2947
    %v3520 = vpack.c.b16 %v2952, %v2948
    %v3521 = vpack.c.b16 %v2953, %v2949
    %v3522 = vpack.c.b16 %v2958, %v2954
    %v3523 = vpack.c.b16 %v2959, %v2955
    %v3524 = vpack.c.b16 %v2960, %v2956
    %v3525 = vpack.c.b16 %v2961, %v2957
    %v3526 = vpack.c.b16 %v2966, %v2962
    %v3527 = vpack.c.b16 %v2967, %v2963
    %v3528 = vpack.c.b16 %v2968, %v2964
    %v3529 = vpack.c.b16 %v2969, %v2965
    %v3530 = vpack.c.b16 %v2974, %v2970
    %v3531 = vpack.c.b16 %v2975, %v2971
    %v3532 = vpack.c.b16 %v2976, %v2972
    %v3533 = vpack.c.b16 %v2977, %v2973
    %v3534 = vpack.c.b16 %v2982, %v2978
    %v3535 = vpack.c.b16 %v2983, %v2979
    %v3536 = vpack.c.b16 %v2984, %v2980
    %v3537 = vpack.c.b16 %v2985, %v2981
    %v3538 = vpack.c.b16 %v2990, %v2986
    %v3539 = vpack.c.b16 %v2991, %v2987
    %v3540 = vpack.c.b16 %v2992, %v2988
    %v3541 = vpack.c.b16 %v2993, %v2989
    %v3542 = vpack.c.b16 %v2998, %v2994
    %v3543 = vpack.c.b16 %v2999, %v2995
    %v3544 = vpack.c.b16 %v3000, %v2996
    %v3545 = vpack.c.b16 %v3001, %v2997
    %v3546 = vpack.c.b16 %v3006, %v3002
    %v3547 = vpack.c.b16 %v3007, %v3003
    %v3548 = vpack.c.b16 %v3008, %v3004
    %v3549 = vpack.c.b16 %v3009, %v3005
    %v3550 = vpack.c.b16 %v3014, %v3010
    %v3551 = vpack.c.b16 %v3015, %v3011
    %v3552 = vpack.c.b16 %v3016, %v3012
    %v3553 = vpack.c.b16 %v3017, %v3013
    %v3554 = vpack.c.b16 %v3022, %v3018
    %v3555 = vpack.c.b16 %v3023, %v3019
    %v3556 = vpack.c.b16 %v3024, %v3020
    %v3557 = vpack.c.b16 %v3025, %v3021
    %v3558 = vpack.c.b16 %v3030, %v3026
    %v3559 = vpack.c.b16 %v3031, %v3027
    %v3560 = vpack.c.b16 %v3032, %v3028
    %v3561 = vpack.c.b16 %v3033, %v3029
    %v4091 = vsel %vm633, %v1433, 0
    %4093 = vmatpush.bf16.msra.mxu0 %v3062
    %4094 = vmatpush.bf16.msra.mxu0 %v3058
    %4095 = vmatpush.bf16.msra.mxu0 %v3054
    %4096 = vmatpush.bf16.msra.mxu0 %v3050
    %4097 = vmatpush.bf16.msra.mxu0 %v3046
    %4098 = vmatpush.bf16.msra.mxu0 %v3042
    %4099 = vmatpush.bf16.msra.mxu0 %v3038
    %4100 = vmatpush.bf16.msra.mxu0 %v3034
    %4101 = vmatmul.bf16.gmra.mxu0 %v1417
    %v4102 = vpop.f32.mrf.mxu0
    %v4103 = vadd.f32 %v1392, %v4102
    %v4104 = vpop.f32.mrf.mxu0
    %4105 = vdwg.mxu0
    %4106 = vmatpush.bf16.msra.mxu0 %v3094
    %4107 = vmatpush.bf16.msra.mxu0 %v3090
    %4108 = vmatpush.bf16.msra.mxu0 %v3086
    %4109 = vmatpush.bf16.msra.mxu0 %v3082
    %4110 = vmatpush.bf16.msra.mxu0 %v3078
    %4111 = vmatpush.bf16.msra.mxu0 %v3074
    %4112 = vmatpush.bf16.msra.mxu0 %v3070
    %4113 = vmatpush.bf16.msra.mxu0 %v3066
    %4114 = vmatmul.bf16.gmra.mxu0 %v1418
    %v4115 = vpop.f32.mrf.mxu0
    %v4116 = vadd.f32 %v4103, %v4115
    %v4117 = vpop.f32.mrf.mxu0
    %4118 = vdwg.mxu0
    %4119 = vmatpush.bf16.msra.mxu0 %v3126
    %4120 = vmatpush.bf16.msra.mxu0 %v3122
    %4121 = vmatpush.bf16.msra.mxu0 %v3118
    %4122 = vmatpush.bf16.msra.mxu0 %v3114
    %4123 = vmatpush.bf16.msra.mxu0 %v3110
    %4124 = vmatpush.bf16.msra.mxu0 %v3106
    %4125 = vmatpush.bf16.msra.mxu0 %v3102
    %4126 = vmatpush.bf16.msra.mxu0 %v3098
    %4127 = vmatmul.bf16.gmra.mxu0 %v1419
    %v4128 = vpop.f32.mrf.mxu0
    %v4129 = vadd.f32 %v4116, %v4128
    %v4130 = vpop.f32.mrf.mxu0
    %4131 = vdwg.mxu0
    %4132 = vmatpush.bf16.msra.mxu0 %v3158
    %4133 = vmatpush.bf16.msra.mxu0 %v3154
    %4134 = vmatpush.bf16.msra.mxu0 %v3150
    %4135 = vmatpush.bf16.msra.mxu0 %v3146
    %4136 = vmatpush.bf16.msra.mxu0 %v3142
    %4137 = vmatpush.bf16.msra.mxu0 %v3138
    %4138 = vmatpush.bf16.msra.mxu0 %v3134
    %4139 = vmatpush.bf16.msra.mxu0 %v3130
    %4140 = vmatmul.bf16.gmra.mxu0 %v1420
    %v4141 = vpop.f32.mrf.mxu0
    %v4142 = vadd.f32 %v4129, %v4141
    %v4143 = vpop.f32.mrf.mxu0
    %4144 = vdwg.mxu0
    %4145 = vmatpush.bf16.msra.mxu0 %v3190
    %4146 = vmatpush.bf16.msra.mxu0 %v3186
    %4147 = vmatpush.bf16.msra.mxu0 %v3182
    %4148 = vmatpush.bf16.msra.mxu0 %v3178
    %4149 = vmatpush.bf16.msra.mxu0 %v3174
    %4150 = vmatpush.bf16.msra.mxu0 %v3170
    %4151 = vmatpush.bf16.msra.mxu0 %v3166
    %4152 = vmatpush.bf16.msra.mxu0 %v3162
    %4153 = vmatmul.bf16.gmra.mxu0 %v1421
    %v4154 = vpop.f32.mrf.mxu0
    %v4155 = vadd.f32 %v4142, %v4154
    %v4156 = vpop.f32.mrf.mxu0
    %4157 = vdwg.mxu0
    %4158 = vmatpush.bf16.msra.mxu0 %v3222
    %4159 = vmatpush.bf16.msra.mxu0 %v3218
    %4160 = vmatpush.bf16.msra.mxu0 %v3214
    %4161 = vmatpush.bf16.msra.mxu0 %v3210
    %4162 = vmatpush.bf16.msra.mxu0 %v3206
    %4163 = vmatpush.bf16.msra.mxu0 %v3202
    %4164 = vmatpush.bf16.msra.mxu0 %v3198
    %4165 = vmatpush.bf16.msra.mxu0 %v3194
    %4166 = vmatmul.bf16.gmra.mxu0 %v1422
    %v4167 = vpop.f32.mrf.mxu0
    %v4168 = vadd.f32 %v4155, %v4167
    %v4169 = vpop.f32.mrf.mxu0
    %4170 = vdwg.mxu0
    %4171 = vmatpush.bf16.msra.mxu0 %v3254
    %4172 = vmatpush.bf16.msra.mxu0 %v3250
    %4173 = vmatpush.bf16.msra.mxu0 %v3246
    %4174 = vmatpush.bf16.msra.mxu0 %v3242
    %4175 = vmatpush.bf16.msra.mxu0 %v3238
    %4176 = vmatpush.bf16.msra.mxu0 %v3234
    %4177 = vmatpush.bf16.msra.mxu0 %v3230
    %4178 = vmatpush.bf16.msra.mxu0 %v3226
    %4179 = vmatmul.bf16.gmra.mxu0 %v1423
    %v4180 = vpop.f32.mrf.mxu0
    %v4181 = vadd.f32 %v4168, %v4180
    %v4182 = vpop.f32.mrf.mxu0
    %4183 = vdwg.mxu0
    %4184 = vmatpush.bf16.msra.mxu0 %v3286
    %4185 = vmatpush.bf16.msra.mxu0 %v3282
    %4186 = vmatpush.bf16.msra.mxu0 %v3278
    %4187 = vmatpush.bf16.msra.mxu0 %v3274
    %4188 = vmatpush.bf16.msra.mxu0 %v3270
    %4189 = vmatpush.bf16.msra.mxu0 %v3266
    %4190 = vmatpush.bf16.msra.mxu0 %v3262
    %4191 = vmatpush.bf16.msra.mxu0 %v3258
    %4192 = vmatmul.bf16.gmra.mxu0 %v1424
    %v4193 = vpop.f32.mrf.mxu0
    %v4194 = vadd.f32 %v4181, %v4193
    %v4195 = vpop.f32.mrf.mxu0
    %4196 = vdwg.mxu0
    %4197 = vmatpush.bf16.msra.mxu0 %v3318
    %4198 = vmatpush.bf16.msra.mxu0 %v3314
    %4199 = vmatpush.bf16.msra.mxu0 %v3310
    %4200 = vmatpush.bf16.msra.mxu0 %v3306
    %4201 = vmatpush.bf16.msra.mxu0 %v3302
    %4202 = vmatpush.bf16.msra.mxu0 %v3298
    %4203 = vmatpush.bf16.msra.mxu0 %v3294
    %4204 = vmatpush.bf16.msra.mxu0 %v3290
    %4205 = vmatmul.bf16.gmra.mxu0 %v1425
    %v4206 = vpop.f32.mrf.mxu0
    %v4207 = vadd.f32 %v4194, %v4206
    %v4208 = vpop.f32.mrf.mxu0
    %4209 = vdwg.mxu0
    %4210 = vmatpush.bf16.msra.mxu0 %v3350
    %4211 = vmatpush.bf16.msra.mxu0 %v3346
    %4212 = vmatpush.bf16.msra.mxu0 %v3342
    %4213 = vmatpush.bf16.msra.mxu0 %v3338
    %4214 = vmatpush.bf16.msra.mxu0 %v3334
    %4215 = vmatpush.bf16.msra.mxu0 %v3330
    %4216 = vmatpush.bf16.msra.mxu0 %v3326
    %4217 = vmatpush.bf16.msra.mxu0 %v3322
    %4218 = vmatmul.bf16.gmra.mxu0 %v1426
    %v4219 = vpop.f32.mrf.mxu0
    %v4220 = vadd.f32 %v4207, %v4219
    %v4221 = vpop.f32.mrf.mxu0
    %4222 = vdwg.mxu0
    %4223 = vmatpush.bf16.msra.mxu0 %v3382
    %4224 = vmatpush.bf16.msra.mxu0 %v3378
    %4225 = vmatpush.bf16.msra.mxu0 %v3374
    %4226 = vmatpush.bf16.msra.mxu0 %v3370
    %4227 = vmatpush.bf16.msra.mxu0 %v3366
    %4228 = vmatpush.bf16.msra.mxu0 %v3362
    %4229 = vmatpush.bf16.msra.mxu0 %v3358
    %4230 = vmatpush.bf16.msra.mxu0 %v3354
    %4231 = vmatmul.bf16.gmra.mxu0 %v1427
    %v4232 = vpop.f32.mrf.mxu0
    %v4233 = vadd.f32 %v4220, %v4232
    %v4234 = vpop.f32.mrf.mxu0
    %4235 = vdwg.mxu0
    %4236 = vmatpush.bf16.msra.mxu0 %v3414
    %4237 = vmatpush.bf16.msra.mxu0 %v3410
    %4238 = vmatpush.bf16.msra.mxu0 %v3406
    %4239 = vmatpush.bf16.msra.mxu0 %v3402
    %4240 = vmatpush.bf16.msra.mxu0 %v3398
    %4241 = vmatpush.bf16.msra.mxu0 %v3394
    %4242 = vmatpush.bf16.msra.mxu0 %v3390
    %4243 = vmatpush.bf16.msra.mxu0 %v3386
    %4244 = vmatmul.bf16.gmra.mxu0 %v1428
    %v4245 = vpop.f32.mrf.mxu0
    %v4246 = vadd.f32 %v4233, %v4245
    %v4247 = vpop.f32.mrf.mxu0
    %4248 = vdwg.mxu0
    %4249 = vmatpush.bf16.msra.mxu0 %v3446
    %4250 = vmatpush.bf16.msra.mxu0 %v3442
    %4251 = vmatpush.bf16.msra.mxu0 %v3438
    %4252 = vmatpush.bf16.msra.mxu0 %v3434
    %4253 = vmatpush.bf16.msra.mxu0 %v3430
    %4254 = vmatpush.bf16.msra.mxu0 %v3426
    %4255 = vmatpush.bf16.msra.mxu0 %v3422
    %4256 = vmatpush.bf16.msra.mxu0 %v3418
    %4257 = vmatmul.bf16.gmra.mxu0 %v1429
    %v4258 = vpop.f32.mrf.mxu0
    %v4259 = vadd.f32 %v4246, %v4258
    %v4260 = vpop.f32.mrf.mxu0
    %4261 = vdwg.mxu0
    %4262 = vmatpush.bf16.msra.mxu0 %v3478
    %4263 = vmatpush.bf16.msra.mxu0 %v3474
    %4264 = vmatpush.bf16.msra.mxu0 %v3470
    %4265 = vmatpush.bf16.msra.mxu0 %v3466
    %4266 = vmatpush.bf16.msra.mxu0 %v3462
    %4267 = vmatpush.bf16.msra.mxu0 %v3458
    %4268 = vmatpush.bf16.msra.mxu0 %v3454
    %4269 = vmatpush.bf16.msra.mxu0 %v3450
    %4270 = vmatmul.bf16.gmra.mxu0 %v1430
    %v4271 = vpop.f32.mrf.mxu0
    %v4272 = vadd.f32 %v4259, %v4271
    %v4273 = vpop.f32.mrf.mxu0
    %4274 = vdwg.mxu0
    %4275 = vmatpush.bf16.msra.mxu0 %v3510
    %4276 = vmatpush.bf16.msra.mxu0 %v3506
    %4277 = vmatpush.bf16.msra.mxu0 %v3502
    %4278 = vmatpush.bf16.msra.mxu0 %v3498
    %4279 = vmatpush.bf16.msra.mxu0 %v3494
    %4280 = vmatpush.bf16.msra.mxu0 %v3490
    %4281 = vmatpush.bf16.msra.mxu0 %v3486
    %4282 = vmatpush.bf16.msra.mxu0 %v3482
    %4283 = vmatmul.bf16.gmra.mxu0 %v1431
    %v4284 = vpop.f32.mrf.mxu0
    %v4285 = vadd.f32 %v4272, %v4284
    %v4286 = vpop.f32.mrf.mxu0
    %4287 = vdwg.mxu0
    %4288 = vmatpush.bf16.msra.mxu0 %v3542
    %4289 = vmatpush.bf16.msra.mxu0 %v3538
    %4290 = vmatpush.bf16.msra.mxu0 %v3534
    %4291 = vmatpush.bf16.msra.mxu0 %v3530
    %4292 = vmatpush.bf16.msra.mxu0 %v3526
    %4293 = vmatpush.bf16.msra.mxu0 %v3522
    %4294 = vmatpush.bf16.msra.mxu0 %v3518
    %4295 = vmatpush.bf16.msra.mxu0 %v3514
    %4296 = vmatmul.bf16.gmra.mxu0 %v1432
    %v4297 = vpop.f32.mrf.mxu0
    %v4298 = vadd.f32 %v4285, %v4297
    %v4299 = vpop.f32.mrf.mxu0
    %4300 = vdwg.mxu0
    %4301 = vmatpush.bf16.msra.mxu0 0
    %4302 = vmatpush.bf16.msra.mxu0 0
    %4303 = vmatpush.bf16.msra.mxu0 0
    %4304 = vmatpush.bf16.msra.mxu0 0
    %4305 = vmatpush.bf16.msra.mxu0 %v3558
    %4306 = vmatpush.bf16.msra.mxu0 %v3554
    %4307 = vmatpush.bf16.msra.mxu0 %v3550
    %4308 = vmatpush.bf16.msra.mxu0 %v3546
    %4309 = vmatmul.bf16.gmra.mxu0 %v4091
    %v4310 = vpop.f32.mrf.mxu0
    %v4311 = vadd.f32 %v4298, %v4310
    %v4312 = vpop.f32.mrf.mxu0
    %4313 = vdwg.mxu0
    %4314 = vmatpush.bf16.msra.mxu0 %v3063
    %4315 = vmatpush.bf16.msra.mxu0 %v3059
    %4316 = vmatpush.bf16.msra.mxu0 %v3055
    %4317 = vmatpush.bf16.msra.mxu0 %v3051
    %4318 = vmatpush.bf16.msra.mxu0 %v3047
    %4319 = vmatpush.bf16.msra.mxu0 %v3043
    %4320 = vmatpush.bf16.msra.mxu0 %v3039
    %4321 = vmatpush.bf16.msra.mxu0 %v3035
    %4322 = vmatmul.bf16.gmra.mxu0 %v1417
    %v4323 = vpop.f32.mrf.mxu0
    %v4324 = vadd.f32 %v1393, %v4323
    %v4325 = vpop.f32.mrf.mxu0
    %4326 = vdwg.mxu0
    %4327 = vmatpush.bf16.msra.mxu0 %v3095
    %4328 = vmatpush.bf16.msra.mxu0 %v3091
    %4329 = vmatpush.bf16.msra.mxu0 %v3087
    %4330 = vmatpush.bf16.msra.mxu0 %v3083
    %4331 = vmatpush.bf16.msra.mxu0 %v3079
    %4332 = vmatpush.bf16.msra.mxu0 %v3075
    %4333 = vmatpush.bf16.msra.mxu0 %v3071
    %4334 = vmatpush.bf16.msra.mxu0 %v3067
    %4335 = vmatmul.bf16.gmra.mxu0 %v1418
    %v4336 = vpop.f32.mrf.mxu0
    %v4337 = vadd.f32 %v4324, %v4336
    %v4338 = vpop.f32.mrf.mxu0
    %4339 = vdwg.mxu0
    %4340 = vmatpush.bf16.msra.mxu0 %v3127
    %4341 = vmatpush.bf16.msra.mxu0 %v3123
    %4342 = vmatpush.bf16.msra.mxu0 %v3119
    %4343 = vmatpush.bf16.msra.mxu0 %v3115
    %4344 = vmatpush.bf16.msra.mxu0 %v3111
    %4345 = vmatpush.bf16.msra.mxu0 %v3107
    %4346 = vmatpush.bf16.msra.mxu0 %v3103
    %4347 = vmatpush.bf16.msra.mxu0 %v3099
    %4348 = vmatmul.bf16.gmra.mxu0 %v1419
    %v4349 = vpop.f32.mrf.mxu0
    %v4350 = vadd.f32 %v4337, %v4349
    %v4351 = vpop.f32.mrf.mxu0
    %4352 = vdwg.mxu0
    %4353 = vmatpush.bf16.msra.mxu0 %v3159
    %4354 = vmatpush.bf16.msra.mxu0 %v3155
    %4355 = vmatpush.bf16.msra.mxu0 %v3151
    %4356 = vmatpush.bf16.msra.mxu0 %v3147
    %4357 = vmatpush.bf16.msra.mxu0 %v3143
    %4358 = vmatpush.bf16.msra.mxu0 %v3139
    %4359 = vmatpush.bf16.msra.mxu0 %v3135
    %4360 = vmatpush.bf16.msra.mxu0 %v3131
    %4361 = vmatmul.bf16.gmra.mxu0 %v1420
    %v4362 = vpop.f32.mrf.mxu0
    %v4363 = vadd.f32 %v4350, %v4362
    %v4364 = vpop.f32.mrf.mxu0
    %4365 = vdwg.mxu0
    %4366 = vmatpush.bf16.msra.mxu0 %v3191
    %4367 = vmatpush.bf16.msra.mxu0 %v3187
    %4368 = vmatpush.bf16.msra.mxu0 %v3183
    %4369 = vmatpush.bf16.msra.mxu0 %v3179
    %4370 = vmatpush.bf16.msra.mxu0 %v3175
    %4371 = vmatpush.bf16.msra.mxu0 %v3171
    %4372 = vmatpush.bf16.msra.mxu0 %v3167
    %4373 = vmatpush.bf16.msra.mxu0 %v3163
    %4374 = vmatmul.bf16.gmra.mxu0 %v1421
    %v4375 = vpop.f32.mrf.mxu0
    %v4376 = vadd.f32 %v4363, %v4375
    %v4377 = vpop.f32.mrf.mxu0
    %4378 = vdwg.mxu0
    %4379 = vmatpush.bf16.msra.mxu0 %v3223
    %4380 = vmatpush.bf16.msra.mxu0 %v3219
    %4381 = vmatpush.bf16.msra.mxu0 %v3215
    %4382 = vmatpush.bf16.msra.mxu0 %v3211
    %4383 = vmatpush.bf16.msra.mxu0 %v3207
    %4384 = vmatpush.bf16.msra.mxu0 %v3203
    %4385 = vmatpush.bf16.msra.mxu0 %v3199
    %4386 = vmatpush.bf16.msra.mxu0 %v3195
    %4387 = vmatmul.bf16.gmra.mxu0 %v1422
    %v4388 = vpop.f32.mrf.mxu0
    %v4389 = vadd.f32 %v4376, %v4388
    %v4390 = vpop.f32.mrf.mxu0
    %4391 = vdwg.mxu0
    %4392 = vmatpush.bf16.msra.mxu0 %v3255
    %4393 = vmatpush.bf16.msra.mxu0 %v3251
    %4394 = vmatpush.bf16.msra.mxu0 %v3247
    %4395 = vmatpush.bf16.msra.mxu0 %v3243
    %4396 = vmatpush.bf16.msra.mxu0 %v3239
    %4397 = vmatpush.bf16.msra.mxu0 %v3235
    %4398 = vmatpush.bf16.msra.mxu0 %v3231
    %4399 = vmatpush.bf16.msra.mxu0 %v3227
    %4400 = vmatmul.bf16.gmra.mxu0 %v1423
    %v4401 = vpop.f32.mrf.mxu0
    %v4402 = vadd.f32 %v4389, %v4401
    %v4403 = vpop.f32.mrf.mxu0
    %4404 = vdwg.mxu0
    %4405 = vmatpush.bf16.msra.mxu0 %v3287
    %4406 = vmatpush.bf16.msra.mxu0 %v3283
    %4407 = vmatpush.bf16.msra.mxu0 %v3279
    %4408 = vmatpush.bf16.msra.mxu0 %v3275
    %4409 = vmatpush.bf16.msra.mxu0 %v3271
    %4410 = vmatpush.bf16.msra.mxu0 %v3267
    %4411 = vmatpush.bf16.msra.mxu0 %v3263
    %4412 = vmatpush.bf16.msra.mxu0 %v3259
    %4413 = vmatmul.bf16.gmra.mxu0 %v1424
    %v4414 = vpop.f32.mrf.mxu0
    %v4415 = vadd.f32 %v4402, %v4414
    %v4416 = vpop.f32.mrf.mxu0
    %4417 = vdwg.mxu0
    %4418 = vmatpush.bf16.msra.mxu0 %v3319
    %4419 = vmatpush.bf16.msra.mxu0 %v3315
    %4420 = vmatpush.bf16.msra.mxu0 %v3311
    %4421 = vmatpush.bf16.msra.mxu0 %v3307
    %4422 = vmatpush.bf16.msra.mxu0 %v3303
    %4423 = vmatpush.bf16.msra.mxu0 %v3299
    %4424 = vmatpush.bf16.msra.mxu0 %v3295
    %4425 = vmatpush.bf16.msra.mxu0 %v3291
    %4426 = vmatmul.bf16.gmra.mxu0 %v1425
    %v4427 = vpop.f32.mrf.mxu0
    %v4428 = vadd.f32 %v4415, %v4427
    %v4429 = vpop.f32.mrf.mxu0
    %4430 = vdwg.mxu0
    %4431 = vmatpush.bf16.msra.mxu0 %v3351
    %4432 = vmatpush.bf16.msra.mxu0 %v3347
    %4433 = vmatpush.bf16.msra.mxu0 %v3343
    %4434 = vmatpush.bf16.msra.mxu0 %v3339
    %4435 = vmatpush.bf16.msra.mxu0 %v3335
    %4436 = vmatpush.bf16.msra.mxu0 %v3331
    %4437 = vmatpush.bf16.msra.mxu0 %v3327
    %4438 = vmatpush.bf16.msra.mxu0 %v3323
    %4439 = vmatmul.bf16.gmra.mxu0 %v1426
    %v4440 = vpop.f32.mrf.mxu0
    %v4441 = vadd.f32 %v4428, %v4440
    %v4442 = vpop.f32.mrf.mxu0
    %4443 = vdwg.mxu0
    %4444 = vmatpush.bf16.msra.mxu0 %v3383
    %4445 = vmatpush.bf16.msra.mxu0 %v3379
    %4446 = vmatpush.bf16.msra.mxu0 %v3375
    %4447 = vmatpush.bf16.msra.mxu0 %v3371
    %4448 = vmatpush.bf16.msra.mxu0 %v3367
    %4449 = vmatpush.bf16.msra.mxu0 %v3363
    %4450 = vmatpush.bf16.msra.mxu0 %v3359
    %4451 = vmatpush.bf16.msra.mxu0 %v3355
    %4452 = vmatmul.bf16.gmra.mxu0 %v1427
    %v4453 = vpop.f32.mrf.mxu0
    %v4454 = vadd.f32 %v4441, %v4453
    %v4455 = vpop.f32.mrf.mxu0
    %4456 = vdwg.mxu0
    %4457 = vmatpush.bf16.msra.mxu0 %v3415
    %4458 = vmatpush.bf16.msra.mxu0 %v3411
    %4459 = vmatpush.bf16.msra.mxu0 %v3407
    %4460 = vmatpush.bf16.msra.mxu0 %v3403
    %4461 = vmatpush.bf16.msra.mxu0 %v3399
    %4462 = vmatpush.bf16.msra.mxu0 %v3395
    %4463 = vmatpush.bf16.msra.mxu0 %v3391
    %4464 = vmatpush.bf16.msra.mxu0 %v3387
    %4465 = vmatmul.bf16.gmra.mxu0 %v1428
    %v4466 = vpop.f32.mrf.mxu0
    %v4467 = vadd.f32 %v4454, %v4466
    %v4468 = vpop.f32.mrf.mxu0
    %4469 = vdwg.mxu0
    %4470 = vmatpush.bf16.msra.mxu0 %v3447
    %4471 = vmatpush.bf16.msra.mxu0 %v3443
    %4472 = vmatpush.bf16.msra.mxu0 %v3439
    %4473 = vmatpush.bf16.msra.mxu0 %v3435
    %4474 = vmatpush.bf16.msra.mxu0 %v3431
    %4475 = vmatpush.bf16.msra.mxu0 %v3427
    %4476 = vmatpush.bf16.msra.mxu0 %v3423
    %4477 = vmatpush.bf16.msra.mxu0 %v3419
    %4478 = vmatmul.bf16.gmra.mxu0 %v1429
    %v4479 = vpop.f32.mrf.mxu0
    %v4480 = vadd.f32 %v4467, %v4479
    %v4481 = vpop.f32.mrf.mxu0
    %4482 = vdwg.mxu0
    %4483 = vmatpush.bf16.msra.mxu0 %v3479
    %4484 = vmatpush.bf16.msra.mxu0 %v3475
    %4485 = vmatpush.bf16.msra.mxu0 %v3471
    %4486 = vmatpush.bf16.msra.mxu0 %v3467
    %4487 = vmatpush.bf16.msra.mxu0 %v3463
    %4488 = vmatpush.bf16.msra.mxu0 %v3459
    %4489 = vmatpush.bf16.msra.mxu0 %v3455
    %4490 = vmatpush.bf16.msra.mxu0 %v3451
    %4491 = vmatmul.bf16.gmra.mxu0 %v1430
    %v4492 = vpop.f32.mrf.mxu0
    %v4493 = vadd.f32 %v4480, %v4492
    %v4494 = vpop.f32.mrf.mxu0
    %4495 = vdwg.mxu0
    %4496 = vmatpush.bf16.msra.mxu0 %v3511
    %4497 = vmatpush.bf16.msra.mxu0 %v3507
    %4498 = vmatpush.bf16.msra.mxu0 %v3503
    %4499 = vmatpush.bf16.msra.mxu0 %v3499
    %4500 = vmatpush.bf16.msra.mxu0 %v3495
    %4501 = vmatpush.bf16.msra.mxu0 %v3491
    %4502 = vmatpush.bf16.msra.mxu0 %v3487
    %4503 = vmatpush.bf16.msra.mxu0 %v3483
    %4504 = vmatmul.bf16.gmra.mxu0 %v1431
    %v4505 = vpop.f32.mrf.mxu0
    %v4506 = vadd.f32 %v4493, %v4505
    %v4507 = vpop.f32.mrf.mxu0
    %4508 = vdwg.mxu0
    %4509 = vmatpush.bf16.msra.mxu0 %v3543
    %4510 = vmatpush.bf16.msra.mxu0 %v3539
    %4511 = vmatpush.bf16.msra.mxu0 %v3535
    %4512 = vmatpush.bf16.msra.mxu0 %v3531
    %4513 = vmatpush.bf16.msra.mxu0 %v3527
    %4514 = vmatpush.bf16.msra.mxu0 %v3523
    %4515 = vmatpush.bf16.msra.mxu0 %v3519
    %4516 = vmatpush.bf16.msra.mxu0 %v3515
    %4517 = vmatmul.bf16.gmra.mxu0 %v1432
    %v4518 = vpop.f32.mrf.mxu0
    %v4519 = vadd.f32 %v4506, %v4518
    %v4520 = vpop.f32.mrf.mxu0
    %4521 = vdwg.mxu0
    %4522 = vmatpush.bf16.msra.mxu0 0
    %4523 = vmatpush.bf16.msra.mxu0 0
    %4524 = vmatpush.bf16.msra.mxu0 0
    %4525 = vmatpush.bf16.msra.mxu0 0
    %4526 = vmatpush.bf16.msra.mxu0 %v3559
    %4527 = vmatpush.bf16.msra.mxu0 %v3555
    %4528 = vmatpush.bf16.msra.mxu0 %v3551
    %4529 = vmatpush.bf16.msra.mxu0 %v3547
    %4530 = vmatmul.bf16.gmra.mxu0 %v4091
    %v4531 = vpop.f32.mrf.mxu0
    %v4532 = vadd.f32 %v4519, %v4531
    %v4533 = vpop.f32.mrf.mxu0
    %4534 = vdwg.mxu0
    %4535 = vmatpush.bf16.msra.mxu0 %v3064
    %4536 = vmatpush.bf16.msra.mxu0 %v3060
    %4537 = vmatpush.bf16.msra.mxu0 %v3056
    %4538 = vmatpush.bf16.msra.mxu0 %v3052
    %4539 = vmatpush.bf16.msra.mxu0 %v3048
    %4540 = vmatpush.bf16.msra.mxu0 %v3044
    %4541 = vmatpush.bf16.msra.mxu0 %v3040
    %4542 = vmatpush.bf16.msra.mxu0 %v3036
    %4543 = vmatmul.bf16.gmra.mxu0 %v1417
    %v4544 = vpop.f32.mrf.mxu0
    %v4545 = vadd.f32 %v1394, %v4544
    %v4546 = vpop.f32.mrf.mxu0
    %4547 = vdwg.mxu0
    %4548 = vmatpush.bf16.msra.mxu0 %v3096
    %4549 = vmatpush.bf16.msra.mxu0 %v3092
    %4550 = vmatpush.bf16.msra.mxu0 %v3088
    %4551 = vmatpush.bf16.msra.mxu0 %v3084
    %4552 = vmatpush.bf16.msra.mxu0 %v3080
    %4553 = vmatpush.bf16.msra.mxu0 %v3076
    %4554 = vmatpush.bf16.msra.mxu0 %v3072
    %4555 = vmatpush.bf16.msra.mxu0 %v3068
    %4556 = vmatmul.bf16.gmra.mxu0 %v1418
    %v4557 = vpop.f32.mrf.mxu0
    %v4558 = vadd.f32 %v4545, %v4557
    %v4559 = vpop.f32.mrf.mxu0
    %4560 = vdwg.mxu0
    %4561 = vmatpush.bf16.msra.mxu0 %v3128
    %4562 = vmatpush.bf16.msra.mxu0 %v3124
    %4563 = vmatpush.bf16.msra.mxu0 %v3120
    %4564 = vmatpush.bf16.msra.mxu0 %v3116
    %4565 = vmatpush.bf16.msra.mxu0 %v3112
    %4566 = vmatpush.bf16.msra.mxu0 %v3108
    %4567 = vmatpush.bf16.msra.mxu0 %v3104
    %4568 = vmatpush.bf16.msra.mxu0 %v3100
    %4569 = vmatmul.bf16.gmra.mxu0 %v1419
    %v4570 = vpop.f32.mrf.mxu0
    %v4571 = vadd.f32 %v4558, %v4570
    %v4572 = vpop.f32.mrf.mxu0
    %4573 = vdwg.mxu0
    %4574 = vmatpush.bf16.msra.mxu0 %v3160
    %4575 = vmatpush.bf16.msra.mxu0 %v3156
    %4576 = vmatpush.bf16.msra.mxu0 %v3152
    %4577 = vmatpush.bf16.msra.mxu0 %v3148
    %4578 = vmatpush.bf16.msra.mxu0 %v3144
    %4579 = vmatpush.bf16.msra.mxu0 %v3140
    %4580 = vmatpush.bf16.msra.mxu0 %v3136
    %4581 = vmatpush.bf16.msra.mxu0 %v3132
    %4582 = vmatmul.bf16.gmra.mxu0 %v1420
    %v4583 = vpop.f32.mrf.mxu0
    %v4584 = vadd.f32 %v4571, %v4583
    %v4585 = vpop.f32.mrf.mxu0
    %4586 = vdwg.mxu0
    %4587 = vmatpush.bf16.msra.mxu0 %v3192
    %4588 = vmatpush.bf16.msra.mxu0 %v3188
    %4589 = vmatpush.bf16.msra.mxu0 %v3184
    %4590 = vmatpush.bf16.msra.mxu0 %v3180
    %4591 = vmatpush.bf16.msra.mxu0 %v3176
    %4592 = vmatpush.bf16.msra.mxu0 %v3172
    %4593 = vmatpush.bf16.msra.mxu0 %v3168
    %4594 = vmatpush.bf16.msra.mxu0 %v3164
    %4595 = vmatmul.bf16.gmra.mxu0 %v1421
    %v4596 = vpop.f32.mrf.mxu0
    %v4597 = vadd.f32 %v4584, %v4596
    %v4598 = vpop.f32.mrf.mxu0
    %4599 = vdwg.mxu0
    %4600 = vmatpush.bf16.msra.mxu0 %v3224
    %4601 = vmatpush.bf16.msra.mxu0 %v3220
    %4602 = vmatpush.bf16.msra.mxu0 %v3216
    %4603 = vmatpush.bf16.msra.mxu0 %v3212
    %4604 = vmatpush.bf16.msra.mxu0 %v3208
    %4605 = vmatpush.bf16.msra.mxu0 %v3204
    %4606 = vmatpush.bf16.msra.mxu0 %v3200
    %4607 = vmatpush.bf16.msra.mxu0 %v3196
    %4608 = vmatmul.bf16.gmra.mxu0 %v1422
    %v4609 = vpop.f32.mrf.mxu0
    %v4610 = vadd.f32 %v4597, %v4609
    %v4611 = vpop.f32.mrf.mxu0
    %4612 = vdwg.mxu0
    %4613 = vmatpush.bf16.msra.mxu0 %v3256
    %4614 = vmatpush.bf16.msra.mxu0 %v3252
    %4615 = vmatpush.bf16.msra.mxu0 %v3248
    %4616 = vmatpush.bf16.msra.mxu0 %v3244
    %4617 = vmatpush.bf16.msra.mxu0 %v3240
    %4618 = vmatpush.bf16.msra.mxu0 %v3236
    %4619 = vmatpush.bf16.msra.mxu0 %v3232
    %4620 = vmatpush.bf16.msra.mxu0 %v3228
    %4621 = vmatmul.bf16.gmra.mxu0 %v1423
    %v4622 = vpop.f32.mrf.mxu0
    %v4623 = vadd.f32 %v4610, %v4622
    %v4624 = vpop.f32.mrf.mxu0
    %4625 = vdwg.mxu0
    %4626 = vmatpush.bf16.msra.mxu0 %v3288
    %4627 = vmatpush.bf16.msra.mxu0 %v3284
    %4628 = vmatpush.bf16.msra.mxu0 %v3280
    %4629 = vmatpush.bf16.msra.mxu0 %v3276
    %4630 = vmatpush.bf16.msra.mxu0 %v3272
    %4631 = vmatpush.bf16.msra.mxu0 %v3268
    %4632 = vmatpush.bf16.msra.mxu0 %v3264
    %4633 = vmatpush.bf16.msra.mxu0 %v3260
    %4634 = vmatmul.bf16.gmra.mxu0 %v1424
    %v4635 = vpop.f32.mrf.mxu0
    %v4636 = vadd.f32 %v4623, %v4635
    %v4637 = vpop.f32.mrf.mxu0
    %4638 = vdwg.mxu0
    %4639 = vmatpush.bf16.msra.mxu0 %v3320
    %4640 = vmatpush.bf16.msra.mxu0 %v3316
    %4641 = vmatpush.bf16.msra.mxu0 %v3312
    %4642 = vmatpush.bf16.msra.mxu0 %v3308
    %4643 = vmatpush.bf16.msra.mxu0 %v3304
    %4644 = vmatpush.bf16.msra.mxu0 %v3300
    %4645 = vmatpush.bf16.msra.mxu0 %v3296
    %4646 = vmatpush.bf16.msra.mxu0 %v3292
    %4647 = vmatmul.bf16.gmra.mxu0 %v1425
    %v4648 = vpop.f32.mrf.mxu0
    %v4649 = vadd.f32 %v4636, %v4648
    %v4650 = vpop.f32.mrf.mxu0
    %4651 = vdwg.mxu0
    %4652 = vmatpush.bf16.msra.mxu0 %v3352
    %4653 = vmatpush.bf16.msra.mxu0 %v3348
    %4654 = vmatpush.bf16.msra.mxu0 %v3344
    %4655 = vmatpush.bf16.msra.mxu0 %v3340
    %4656 = vmatpush.bf16.msra.mxu0 %v3336
    %4657 = vmatpush.bf16.msra.mxu0 %v3332
    %4658 = vmatpush.bf16.msra.mxu0 %v3328
    %4659 = vmatpush.bf16.msra.mxu0 %v3324
    %4660 = vmatmul.bf16.gmra.mxu0 %v1426
    %v4661 = vpop.f32.mrf.mxu0
    %v4662 = vadd.f32 %v4649, %v4661
    %v4663 = vpop.f32.mrf.mxu0
    %4664 = vdwg.mxu0
    %4665 = vmatpush.bf16.msra.mxu0 %v3384
    %4666 = vmatpush.bf16.msra.mxu0 %v3380
    %4667 = vmatpush.bf16.msra.mxu0 %v3376
    %4668 = vmatpush.bf16.msra.mxu0 %v3372
    %4669 = vmatpush.bf16.msra.mxu0 %v3368
    %4670 = vmatpush.bf16.msra.mxu0 %v3364
    %4671 = vmatpush.bf16.msra.mxu0 %v3360
    %4672 = vmatpush.bf16.msra.mxu0 %v3356
    %4673 = vmatmul.bf16.gmra.mxu0 %v1427
    %v4674 = vpop.f32.mrf.mxu0
    %v4675 = vadd.f32 %v4662, %v4674
    %v4676 = vpop.f32.mrf.mxu0
    %4677 = vdwg.mxu0
    %4678 = vmatpush.bf16.msra.mxu0 %v3416
    %4679 = vmatpush.bf16.msra.mxu0 %v3412
    %4680 = vmatpush.bf16.msra.mxu0 %v3408
    %4681 = vmatpush.bf16.msra.mxu0 %v3404
    %4682 = vmatpush.bf16.msra.mxu0 %v3400
    %4683 = vmatpush.bf16.msra.mxu0 %v3396
    %4684 = vmatpush.bf16.msra.mxu0 %v3392
    %4685 = vmatpush.bf16.msra.mxu0 %v3388
    %4686 = vmatmul.bf16.gmra.mxu0 %v1428
    %v4687 = vpop.f32.mrf.mxu0
    %v4688 = vadd.f32 %v4675, %v4687
    %v4689 = vpop.f32.mrf.mxu0
    %4690 = vdwg.mxu0
    %4691 = vmatpush.bf16.msra.mxu0 %v3448
    %4692 = vmatpush.bf16.msra.mxu0 %v3444
    %4693 = vmatpush.bf16.msra.mxu0 %v3440
    %4694 = vmatpush.bf16.msra.mxu0 %v3436
    %4695 = vmatpush.bf16.msra.mxu0 %v3432
    %4696 = vmatpush.bf16.msra.mxu0 %v3428
    %4697 = vmatpush.bf16.msra.mxu0 %v3424
    %4698 = vmatpush.bf16.msra.mxu0 %v3420
    %4699 = vmatmul.bf16.gmra.mxu0 %v1429
    %v4700 = vpop.f32.mrf.mxu0
    %v4701 = vadd.f32 %v4688, %v4700
    %v4702 = vpop.f32.mrf.mxu0
    %4703 = vdwg.mxu0
    %4704 = vmatpush.bf16.msra.mxu0 %v3480
    %4705 = vmatpush.bf16.msra.mxu0 %v3476
    %4706 = vmatpush.bf16.msra.mxu0 %v3472
    %4707 = vmatpush.bf16.msra.mxu0 %v3468
    %4708 = vmatpush.bf16.msra.mxu0 %v3464
    %4709 = vmatpush.bf16.msra.mxu0 %v3460
    %4710 = vmatpush.bf16.msra.mxu0 %v3456
    %4711 = vmatpush.bf16.msra.mxu0 %v3452
    %4712 = vmatmul.bf16.gmra.mxu0 %v1430
    %v4713 = vpop.f32.mrf.mxu0
    %v4714 = vadd.f32 %v4701, %v4713
    %v4715 = vpop.f32.mrf.mxu0
    %4716 = vdwg.mxu0
    %4717 = vmatpush.bf16.msra.mxu0 %v3512
    %4718 = vmatpush.bf16.msra.mxu0 %v3508
    %4719 = vmatpush.bf16.msra.mxu0 %v3504
    %4720 = vmatpush.bf16.msra.mxu0 %v3500
    %4721 = vmatpush.bf16.msra.mxu0 %v3496
    %4722 = vmatpush.bf16.msra.mxu0 %v3492
    %4723 = vmatpush.bf16.msra.mxu0 %v3488
    %4724 = vmatpush.bf16.msra.mxu0 %v3484
    %4725 = vmatmul.bf16.gmra.mxu0 %v1431
    %v4726 = vpop.f32.mrf.mxu0
    %v4727 = vadd.f32 %v4714, %v4726
    %v4728 = vpop.f32.mrf.mxu0
    %4729 = vdwg.mxu0
    %4730 = vmatpush.bf16.msra.mxu0 %v3544
    %4731 = vmatpush.bf16.msra.mxu0 %v3540
    %4732 = vmatpush.bf16.msra.mxu0 %v3536
    %4733 = vmatpush.bf16.msra.mxu0 %v3532
    %4734 = vmatpush.bf16.msra.mxu0 %v3528
    %4735 = vmatpush.bf16.msra.mxu0 %v3524
    %4736 = vmatpush.bf16.msra.mxu0 %v3520
    %4737 = vmatpush.bf16.msra.mxu0 %v3516
    %4738 = vmatmul.bf16.gmra.mxu0 %v1432
    %v4739 = vpop.f32.mrf.mxu0
    %v4740 = vadd.f32 %v4727, %v4739
    %v4741 = vpop.f32.mrf.mxu0
    %4742 = vdwg.mxu0
    %4743 = vmatpush.bf16.msra.mxu0 0
    %4744 = vmatpush.bf16.msra.mxu0 0
    %4745 = vmatpush.bf16.msra.mxu0 0
    %4746 = vmatpush.bf16.msra.mxu0 0
    %4747 = vmatpush.bf16.msra.mxu0 %v3560
    %4748 = vmatpush.bf16.msra.mxu0 %v3556
    %4749 = vmatpush.bf16.msra.mxu0 %v3552
    %4750 = vmatpush.bf16.msra.mxu0 %v3548
    %4751 = vmatmul.bf16.gmra.mxu0 %v4091
    %v4752 = vpop.f32.mrf.mxu0
    %v4753 = vadd.f32 %v4740, %v4752
    %v4754 = vpop.f32.mrf.mxu0
    %4755 = vdwg.mxu0
    %4756 = vmatpush.bf16.msra.mxu0 %v3065
    %4757 = vmatpush.bf16.msra.mxu0 %v3061
    %4758 = vmatpush.bf16.msra.mxu0 %v3057
    %4759 = vmatpush.bf16.msra.mxu0 %v3053
    %4760 = vmatpush.bf16.msra.mxu0 %v3049
    %4761 = vmatpush.bf16.msra.mxu0 %v3045
    %4762 = vmatpush.bf16.msra.mxu0 %v3041
    %4763 = vmatpush.bf16.msra.mxu0 %v3037
    %4764 = vmatmul.bf16.gmra.mxu0 %v1417
    %v4765 = vpop.f32.mrf.mxu0
    %v4766 = vadd.f32 %v1395, %v4765
    %v4767 = vpop.f32.mrf.mxu0
    %4768 = vdwg.mxu0
    %4769 = vmatpush.bf16.msra.mxu0 %v3097
    %4770 = vmatpush.bf16.msra.mxu0 %v3093
    %4771 = vmatpush.bf16.msra.mxu0 %v3089
    %4772 = vmatpush.bf16.msra.mxu0 %v3085
    %4773 = vmatpush.bf16.msra.mxu0 %v3081
    %4774 = vmatpush.bf16.msra.mxu0 %v3077
    %4775 = vmatpush.bf16.msra.mxu0 %v3073
    %4776 = vmatpush.bf16.msra.mxu0 %v3069
    %4777 = vmatmul.bf16.gmra.mxu0 %v1418
    %v4778 = vpop.f32.mrf.mxu0
    %v4779 = vadd.f32 %v4766, %v4778
    %v4780 = vpop.f32.mrf.mxu0
    %4781 = vdwg.mxu0
    %4782 = vmatpush.bf16.msra.mxu0 %v3129
    %4783 = vmatpush.bf16.msra.mxu0 %v3125
    %4784 = vmatpush.bf16.msra.mxu0 %v3121
    %4785 = vmatpush.bf16.msra.mxu0 %v3117
    %4786 = vmatpush.bf16.msra.mxu0 %v3113
    %4787 = vmatpush.bf16.msra.mxu0 %v3109
    %4788 = vmatpush.bf16.msra.mxu0 %v3105
    %4789 = vmatpush.bf16.msra.mxu0 %v3101
    %4790 = vmatmul.bf16.gmra.mxu0 %v1419
    %v4791 = vpop.f32.mrf.mxu0
    %v4792 = vadd.f32 %v4779, %v4791
    %v4793 = vpop.f32.mrf.mxu0
    %4794 = vdwg.mxu0
    %4795 = vmatpush.bf16.msra.mxu0 %v3161
    %4796 = vmatpush.bf16.msra.mxu0 %v3157
    %4797 = vmatpush.bf16.msra.mxu0 %v3153
    %4798 = vmatpush.bf16.msra.mxu0 %v3149
    %4799 = vmatpush.bf16.msra.mxu0 %v3145
    %4800 = vmatpush.bf16.msra.mxu0 %v3141
    %4801 = vmatpush.bf16.msra.mxu0 %v3137
    %4802 = vmatpush.bf16.msra.mxu0 %v3133
    %4803 = vmatmul.bf16.gmra.mxu0 %v1420
    %v4804 = vpop.f32.mrf.mxu0
    %v4805 = vadd.f32 %v4792, %v4804
    %v4806 = vpop.f32.mrf.mxu0
    %4807 = vdwg.mxu0
    %4808 = vmatpush.bf16.msra.mxu0 %v3193
    %4809 = vmatpush.bf16.msra.mxu0 %v3189
    %4810 = vmatpush.bf16.msra.mxu0 %v3185
    %4811 = vmatpush.bf16.msra.mxu0 %v3181
    %4812 = vmatpush.bf16.msra.mxu0 %v3177
    %4813 = vmatpush.bf16.msra.mxu0 %v3173
    %4814 = vmatpush.bf16.msra.mxu0 %v3169
    %4815 = vmatpush.bf16.msra.mxu0 %v3165
    %4816 = vmatmul.bf16.gmra.mxu0 %v1421
    %v4817 = vpop.f32.mrf.mxu0
    %v4818 = vadd.f32 %v4805, %v4817
    %v4819 = vpop.f32.mrf.mxu0
    %4820 = vdwg.mxu0
    %4821 = vmatpush.bf16.msra.mxu0 %v3225
    %4822 = vmatpush.bf16.msra.mxu0 %v3221
    %4823 = vmatpush.bf16.msra.mxu0 %v3217
    %4824 = vmatpush.bf16.msra.mxu0 %v3213
    %4825 = vmatpush.bf16.msra.mxu0 %v3209
    %4826 = vmatpush.bf16.msra.mxu0 %v3205
    %4827 = vmatpush.bf16.msra.mxu0 %v3201
    %4828 = vmatpush.bf16.msra.mxu0 %v3197
    %4829 = vmatmul.bf16.gmra.mxu0 %v1422
    %v4830 = vpop.f32.mrf.mxu0
    %v4831 = vadd.f32 %v4818, %v4830
    %v4832 = vpop.f32.mrf.mxu0
    %4833 = vdwg.mxu0
    %4834 = vmatpush.bf16.msra.mxu0 %v3257
    %4835 = vmatpush.bf16.msra.mxu0 %v3253
    %4836 = vmatpush.bf16.msra.mxu0 %v3249
    %4837 = vmatpush.bf16.msra.mxu0 %v3245
    %4838 = vmatpush.bf16.msra.mxu0 %v3241
    %4839 = vmatpush.bf16.msra.mxu0 %v3237
    %4840 = vmatpush.bf16.msra.mxu0 %v3233
    %4841 = vmatpush.bf16.msra.mxu0 %v3229
    %4842 = vmatmul.bf16.gmra.mxu0 %v1423
    %v4843 = vpop.f32.mrf.mxu0
    %v4844 = vadd.f32 %v4831, %v4843
    %v4845 = vpop.f32.mrf.mxu0
    %4846 = vdwg.mxu0
    %4847 = vmatpush.bf16.msra.mxu0 %v3289
    %4848 = vmatpush.bf16.msra.mxu0 %v3285
    %4849 = vmatpush.bf16.msra.mxu0 %v3281
    %4850 = vmatpush.bf16.msra.mxu0 %v3277
    %4851 = vmatpush.bf16.msra.mxu0 %v3273
    %4852 = vmatpush.bf16.msra.mxu0 %v3269
    %4853 = vmatpush.bf16.msra.mxu0 %v3265
    %4854 = vmatpush.bf16.msra.mxu0 %v3261
    %4855 = vmatmul.bf16.gmra.mxu0 %v1424
    %v4856 = vpop.f32.mrf.mxu0
    %v4857 = vadd.f32 %v4844, %v4856
    %v4858 = vpop.f32.mrf.mxu0
    %4859 = vdwg.mxu0
    %4860 = vmatpush.bf16.msra.mxu0 %v3321
    %4861 = vmatpush.bf16.msra.mxu0 %v3317
    %4862 = vmatpush.bf16.msra.mxu0 %v3313
    %4863 = vmatpush.bf16.msra.mxu0 %v3309
    %4864 = vmatpush.bf16.msra.mxu0 %v3305
    %4865 = vmatpush.bf16.msra.mxu0 %v3301
    %4866 = vmatpush.bf16.msra.mxu0 %v3297
    %4867 = vmatpush.bf16.msra.mxu0 %v3293
    %4868 = vmatmul.bf16.gmra.mxu0 %v1425
    %v4869 = vpop.f32.mrf.mxu0
    %v4870 = vadd.f32 %v4857, %v4869
    %v4871 = vpop.f32.mrf.mxu0
    %4872 = vdwg.mxu0
    %4873 = vmatpush.bf16.msra.mxu0 %v3353
    %4874 = vmatpush.bf16.msra.mxu0 %v3349
    %4875 = vmatpush.bf16.msra.mxu0 %v3345
    %4876 = vmatpush.bf16.msra.mxu0 %v3341
    %4877 = vmatpush.bf16.msra.mxu0 %v3337
    %4878 = vmatpush.bf16.msra.mxu0 %v3333
    %4879 = vmatpush.bf16.msra.mxu0 %v3329
    %4880 = vmatpush.bf16.msra.mxu0 %v3325
    %4881 = vmatmul.bf16.gmra.mxu0 %v1426
    %v4882 = vpop.f32.mrf.mxu0
    %v4883 = vadd.f32 %v4870, %v4882
    %v4884 = vpop.f32.mrf.mxu0
    %4885 = vdwg.mxu0
    %4886 = vmatpush.bf16.msra.mxu0 %v3385
    %4887 = vmatpush.bf16.msra.mxu0 %v3381
    %4888 = vmatpush.bf16.msra.mxu0 %v3377
    %4889 = vmatpush.bf16.msra.mxu0 %v3373
    %4890 = vmatpush.bf16.msra.mxu0 %v3369
    %4891 = vmatpush.bf16.msra.mxu0 %v3365
    %4892 = vmatpush.bf16.msra.mxu0 %v3361
    %4893 = vmatpush.bf16.msra.mxu0 %v3357
    %4894 = vmatmul.bf16.gmra.mxu0 %v1427
    %v4895 = vpop.f32.mrf.mxu0
    %v4896 = vadd.f32 %v4883, %v4895
    %v4897 = vpop.f32.mrf.mxu0
    %4898 = vdwg.mxu0
    %4899 = vmatpush.bf16.msra.mxu0 %v3417
    %4900 = vmatpush.bf16.msra.mxu0 %v3413
    %4901 = vmatpush.bf16.msra.mxu0 %v3409
    %4902 = vmatpush.bf16.msra.mxu0 %v3405
    %4903 = vmatpush.bf16.msra.mxu0 %v3401
    %4904 = vmatpush.bf16.msra.mxu0 %v3397
    %4905 = vmatpush.bf16.msra.mxu0 %v3393
    %4906 = vmatpush.bf16.msra.mxu0 %v3389
    %4907 = vmatmul.bf16.gmra.mxu0 %v1428
    %v4908 = vpop.f32.mrf.mxu0
    %v4909 = vadd.f32 %v4896, %v4908
    %v4910 = vpop.f32.mrf.mxu0
    %4911 = vdwg.mxu0
    %4912 = vmatpush.bf16.msra.mxu0 %v3449
    %4913 = vmatpush.bf16.msra.mxu0 %v3445
    %4914 = vmatpush.bf16.msra.mxu0 %v3441
    %4915 = vmatpush.bf16.msra.mxu0 %v3437
    %4916 = vmatpush.bf16.msra.mxu0 %v3433
    %4917 = vmatpush.bf16.msra.mxu0 %v3429
    %4918 = vmatpush.bf16.msra.mxu0 %v3425
    %4919 = vmatpush.bf16.msra.mxu0 %v3421
    %4920 = vmatmul.bf16.gmra.mxu0 %v1429
    %v4921 = vpop.f32.mrf.mxu0
    %v4922 = vadd.f32 %v4909, %v4921
    %v4923 = vpop.f32.mrf.mxu0
    %4924 = vdwg.mxu0
    %4925 = vmatpush.bf16.msra.mxu0 %v3481
    %4926 = vmatpush.bf16.msra.mxu0 %v3477
    %4927 = vmatpush.bf16.msra.mxu0 %v3473
    %4928 = vmatpush.bf16.msra.mxu0 %v3469
    %4929 = vmatpush.bf16.msra.mxu0 %v3465
    %4930 = vmatpush.bf16.msra.mxu0 %v3461
    %4931 = vmatpush.bf16.msra.mxu0 %v3457
    %4932 = vmatpush.bf16.msra.mxu0 %v3453
    %4933 = vmatmul.bf16.gmra.mxu0 %v1430
    %v4934 = vpop.f32.mrf.mxu0
    %v4935 = vadd.f32 %v4922, %v4934
    %v4936 = vpop.f32.mrf.mxu0
    %4937 = vdwg.mxu0
    %4938 = vmatpush.bf16.msra.mxu0 %v3513
    %4939 = vmatpush.bf16.msra.mxu0 %v3509
    %4940 = vmatpush.bf16.msra.mxu0 %v3505
    %4941 = vmatpush.bf16.msra.mxu0 %v3501
    %4942 = vmatpush.bf16.msra.mxu0 %v3497
    %4943 = vmatpush.bf16.msra.mxu0 %v3493
    %4944 = vmatpush.bf16.msra.mxu0 %v3489
    %4945 = vmatpush.bf16.msra.mxu0 %v3485
    %4946 = vmatmul.bf16.gmra.mxu0 %v1431
    %v4947 = vpop.f32.mrf.mxu0
    %v4948 = vadd.f32 %v4935, %v4947
    %v4949 = vpop.f32.mrf.mxu0
    %4950 = vdwg.mxu0
    %4951 = vmatpush.bf16.msra.mxu0 %v3545
    %4952 = vmatpush.bf16.msra.mxu0 %v3541
    %4953 = vmatpush.bf16.msra.mxu0 %v3537
    %4954 = vmatpush.bf16.msra.mxu0 %v3533
    %4955 = vmatpush.bf16.msra.mxu0 %v3529
    %4956 = vmatpush.bf16.msra.mxu0 %v3525
    %4957 = vmatpush.bf16.msra.mxu0 %v3521
    %4958 = vmatpush.bf16.msra.mxu0 %v3517
    %4959 = vmatmul.bf16.gmra.mxu0 %v1432
    %v4960 = vpop.f32.mrf.mxu0
    %v4961 = vadd.f32 %v4948, %v4960
    %v4962 = vpop.f32.mrf.mxu0
    %4963 = vdwg.mxu0
    %4964 = vmatpush.bf16.msra.mxu0 0
    %4965 = vmatpush.bf16.msra.mxu0 0
    %4966 = vmatpush.bf16.msra.mxu0 0
    %4967 = vmatpush.bf16.msra.mxu0 0
    %4968 = vmatpush.bf16.msra.mxu0 %v3561
    %4969 = vmatpush.bf16.msra.mxu0 %v3557
    %4970 = vmatpush.bf16.msra.mxu0 %v3553
    %4971 = vmatpush.bf16.msra.mxu0 %v3549
    %4972 = vmatmul.bf16.gmra.mxu0 %v4091
    %v4973 = vpop.f32.mrf.mxu0
    %v4974 = vadd.f32 %v4961, %v4973
    %v4975 = vpop.f32.mrf.mxu0
    %4976 = vdwg.mxu0
    %v4977 = vmax.f32 %v4311, 0.0
    %v4978 = vmax.f32 %v4532, 0.0
    %v4979 = vmax.f32 %v4753, 0.0
    %v4980 = vmax.f32 %v4974, 0.0
    %v4981 = vld [vmem:[%s8] sm:$0xff]
    %v4982 = vld [vmem:[%s8 + $0x8] sm:$0xff]
    %v4983 = vld [vmem:[%s8 + $0x10] sm:$0xff]
    %v4984 = vld [vmem:[%s8 + $0x18] sm:$0xff]
    %v4985 = vld [vmem:[%s8 + $0x20] sm:$0xff]
    %v4986 = vld [vmem:[%s8 + $0x28] sm:$0xff]
    %v4987 = vld [vmem:[%s8 + $0x30] sm:$0xff]
    %v4988 = vld [vmem:[%s8 + $0x38] sm:$0xff]
    %v4989 = vld [vmem:[%s8 + $0x40] sm:$0xff]
    %v4990 = vld [vmem:[%s8 + $0x48] sm:$0xff]
    %v4991 = vld [vmem:[%s8 + $0x50] sm:$0xff]
    %v4992 = vld [vmem:[%s8 + $0x58] sm:$0xff]
    %v4993 = vld [vmem:[%s8 + $0x60] sm:$0xff]
    %v4994 = vld [vmem:[%s8 + $0x68] sm:$0xff]
    %v4995 = vld [vmem:[%s8 + $0x70] sm:$0xff]
    %v4996 = vld [vmem:[%s8 + $0x78] sm:$0xff]
    %v4997 = vld [vmem:[%s8 + $0x80] sm:$0xff]
    %v4998 = vld [vmem:[%s8 + $0x88] sm:$0xff]
    %v4999 = vld [vmem:[%s8 + $0x90] sm:$0xff]
    %v5000 = vld [vmem:[%s8 + $0x98] sm:$0xff]
    %v5001 = vld [vmem:[%s8 + $0xa0] sm:$0xff]
    %v5002 = vld [vmem:[%s8 + $0xa8] sm:$0xff]
    %v5003 = vld [vmem:[%s8 + $0xb0] sm:$0xff]
    %v5004 = vld [vmem:[%s8 + $0xb8] sm:$0xff]
    %v5005 = vld [vmem:[%s8 + $0xc0] sm:$0xff]
    %v5006 = vld [vmem:[%s8 + $0xc8] sm:$0xff]
    %v5007 = vld [vmem:[%s8 + $0xd0] sm:$0xff]
    %v5008 = vld [vmem:[%s8 + $0xd8] sm:$0xff]
    %v5009 = vld [vmem:[%s8 + $0xe0] sm:$0xff]
    %v5010 = vld [vmem:[%s8 + $0xe8] sm:$0xff]
    %v5011 = vld [vmem:[%s8 + $0xf0] sm:$0xff]
    %v5012 = vld [vmem:[%s8 + $0xf8] sm:$0xff]
    %v5013 = vld [vmem:[%s8 + $0x100] sm:$0xff]
    %v5014 = vld [vmem:[%s8 + $0x108] sm:$0xff]
    %v5015 = vld [vmem:[%s8 + $0x110] sm:$0xff]
    %v5016 = vld [vmem:[%s8 + $0x118] sm:$0xff]
    %v5017 = vld [vmem:[%s8 + $0x120] sm:$0xff]
    %v5018 = vld [vmem:[%s8 + $0x128] sm:$0xff]
    %v5019 = vld [vmem:[%s8 + $0x130] sm:$0xff]
    %v5020 = vld [vmem:[%s8 + $0x138] sm:$0xff]
    %v5021 = vld [vmem:[%s8 + $0x140] sm:$0xff]
    %v5022 = vld [vmem:[%s8 + $0x148] sm:$0xff]
    %v5023 = vld [vmem:[%s8 + $0x150] sm:$0xff]
    %v5024 = vld [vmem:[%s8 + $0x158] sm:$0xff]
    %v5025 = vld [vmem:[%s8 + $0x160] sm:$0xff]
    %v5026 = vld [vmem:[%s8 + $0x168] sm:$0xff]
    %v5027 = vld [vmem:[%s8 + $0x170] sm:$0xff]
    %v5028 = vld [vmem:[%s8 + $0x178] sm:$0xff]
    %v5029 = vld [vmem:[%s8 + $0x180] sm:$0xff]
    %v5030 = vld [vmem:[%s8 + $0x188] sm:$0xff]
    %v5031 = vld [vmem:[%s8 + $0x190] sm:$0xff]
    %v5032 = vld [vmem:[%s8 + $0x198] sm:$0xff]
    %v5033 = vld [vmem:[%s8 + $0x1a0] sm:$0xff]
    %v5034 = vld [vmem:[%s8 + $0x1a8] sm:$0xff]
    %v5035 = vld [vmem:[%s8 + $0x1b0] sm:$0xff]
    %v5036 = vld [vmem:[%s8 + $0x1b8] sm:$0xff]
    %v5037 = vld [vmem:[%s8 + $0x1c0] sm:$0xff]
    %v5038 = vld [vmem:[%s8 + $0x1c8] sm:$0xff]
    %v5039 = vld [vmem:[%s8 + $0x1d0] sm:$0xff]
    %v5040 = vld [vmem:[%s8 + $0x1d8] sm:$0xff]
    %v5041 = vld [vmem:[%s8 + $0x1e0] sm:$0xff]
    %v5042 = vld [vmem:[%s8 + $0x1e8] sm:$0xff]
    %v5043 = vld [vmem:[%s8 + $0x1f0] sm:$0xff]
    %v5044 = vld [vmem:[%s8 + $0x1f8] sm:$0xff]
    %v5045 = vld [vmem:[#allocation11] sm:$0x1]
    %v5047 = vperm.slane %v5045, 0
    %5049 = vmatpush.msra.mxu0 %v4996
    %5050 = vmatpush.msra.mxu0 %v4995
    %5051 = vmatpush.msra.mxu0 %v4994
    %5052 = vmatpush.msra.mxu0 %v4993
    %5053 = vmatpush.msra.mxu0 %v4992
    %5054 = vmatpush.msra.mxu0 %v4991
    %5055 = vmatpush.msra.mxu0 %v4990
    %5056 = vmatpush.msra.mxu0 %v4989
    %5057 = vmatpush.msra.mxu0 %v4988
    %5058 = vmatpush.msra.mxu0 %v4987
    %5059 = vmatpush.msra.mxu0 %v4986
    %5060 = vmatpush.msra.mxu0 %v4985
    %5061 = vmatpush.msra.mxu0 %v4984
    %5062 = vmatpush.msra.mxu0 %v4983
    %5063 = vmatpush.msra.mxu0 %v4982
    %5064 = vmatpush.msra.mxu0 %v4981
    %5065 = vmatmul.f32.gmra.mxu0 %v4977
    %v5066 = vpop.f32.mrf.mxu0
    %v5067 = vadd.f32 %v5047, %v5066
    %5068 = vdwg.mxu0
    %5069 = vmatpush.msra.mxu0 %v5012
    %5070 = vmatpush.msra.mxu0 %v5011
    %5071 = vmatpush.msra.mxu0 %v5010
    %5072 = vmatpush.msra.mxu0 %v5009
    %5073 = vmatpush.msra.mxu0 %v5008
    %5074 = vmatpush.msra.mxu0 %v5007
    %5075 = vmatpush.msra.mxu0 %v5006
    %5076 = vmatpush.msra.mxu0 %v5005
    %5077 = vmatpush.msra.mxu0 %v5004
    %5078 = vmatpush.msra.mxu0 %v5003
    %5079 = vmatpush.msra.mxu0 %v5002
    %5080 = vmatpush.msra.mxu0 %v5001
    %5081 = vmatpush.msra.mxu0 %v5000
    %5082 = vmatpush.msra.mxu0 %v4999
    %5083 = vmatpush.msra.mxu0 %v4998
    %5084 = vmatpush.msra.mxu0 %v4997
    %5085 = vmatmul.f32.gmra.mxu0 %v4978
    %v5086 = vpop.f32.mrf.mxu0
    %v5087 = vadd.f32 %v5067, %v5086
    %5088 = vdwg.mxu0
    %5089 = vmatpush.msra.mxu0 %v5028
    %5090 = vmatpush.msra.mxu0 %v5027
    %5091 = vmatpush.msra.mxu0 %v5026
    %5092 = vmatpush.msra.mxu0 %v5025
    %5093 = vmatpush.msra.mxu0 %v5024
    %5094 = vmatpush.msra.mxu0 %v5023
    %5095 = vmatpush.msra.mxu0 %v5022
    %5096 = vmatpush.msra.mxu0 %v5021
    %5097 = vmatpush.msra.mxu0 %v5020
    %5098 = vmatpush.msra.mxu0 %v5019
    %5099 = vmatpush.msra.mxu0 %v5018
    %5100 = vmatpush.msra.mxu0 %v5017
    %5101 = vmatpush.msra.mxu0 %v5016
    %5102 = vmatpush.msra.mxu0 %v5015
    %5103 = vmatpush.msra.mxu0 %v5014
    %5104 = vmatpush.msra.mxu0 %v5013
    %5105 = vmatmul.f32.gmra.mxu0 %v4979
    %v5106 = vpop.f32.mrf.mxu0
    %v5107 = vadd.f32 %v5087, %v5106
    %5108 = vdwg.mxu0
    %5109 = vmatpush.msra.mxu0 %v5044
    %5110 = vmatpush.msra.mxu0 %v5043
    %5111 = vmatpush.msra.mxu0 %v5042
    %5112 = vmatpush.msra.mxu0 %v5041
    %5113 = vmatpush.msra.mxu0 %v5040
    %5114 = vmatpush.msra.mxu0 %v5039
    %5115 = vmatpush.msra.mxu0 %v5038
    %5116 = vmatpush.msra.mxu0 %v5037
    %5117 = vmatpush.msra.mxu0 %v5036
    %5118 = vmatpush.msra.mxu0 %v5035
    %5119 = vmatpush.msra.mxu0 %v5034
    %5120 = vmatpush.msra.mxu0 %v5033
    %5121 = vmatpush.msra.mxu0 %v5032
    %5122 = vmatpush.msra.mxu0 %v5031
    %5123 = vmatpush.msra.mxu0 %v5030
    %5124 = vmatpush.msra.mxu0 %v5029
    %5125 = vmatmul.f32.gmra.mxu0 %v4980
    %v5126 = vpop.f32.mrf.mxu0
    %v5127 = vadd.f32 %v5107, %v5126
    %5128 = vdwg.mxu0
    %v5129 = vmax.f32 %v5127, 0.0
    %v5130 = vld [vmem:[#allocation13] sm:$0xff]
    %v5131 = vld [vmem:[#allocation13 + $0x8] sm:$0xff]
    %v5132 = vld [vmem:[#allocation13 + $0x10] sm:$0xff]
    %v5133 = vld [vmem:[#allocation13 + $0x18] sm:$0xff]
    %v5134 = vld [vmem:[#allocation14] sm:$0x1]
    %v5136 = vperm.slane %v5134, 0
    %v5139 = vsel %vm623, %v5129, 0
    %5141 = vmatpush.msra.mxu0 0.0
    %5142 = vmatpush.msra.mxu0 0.0
    %5143 = vmatpush.msra.mxu0 0.0
    %5144 = vmatpush.msra.mxu0 0.0
    %5145 = vmatpush.msra.mxu0 0.0
    %5146 = vmatpush.msra.mxu0 0.0
    %5147 = vmatpush.msra.mxu0 0.0
    %5148 = vmatpush.msra.mxu0 0.0
    %5149 = vmatpush.msra.mxu0 0.0
    %5150 = vmatpush.msra.mxu0 0.0
    %5151 = vmatpush.msra.mxu0 0.0
    %5152 = vmatpush.msra.mxu0 0.0
    %5153 = vmatpush.msra.mxu0 %v5133
    %5154 = vmatpush.msra.mxu0 %v5132
    %5155 = vmatpush.msra.mxu0 %v5131
    %5156 = vmatpush.msra.mxu0 %v5130
    %5157 = vmatmul.f32.gmra.mxu0 %v5139
    %v5158 = vpop.f32.mrf.mxu0
    %v5159 = vadd.f32 %v5136, %v5158
    %5160 = vdwg.mxu0
    %5161 = vst [vmem:[#allocation16] sm:$0x3] %v5159
    // Predicated region
    $region82: #{tpu_custom_call.1} parent=1 // pred_check
      _
    $region83: #{tpu_custom_call.1} parent=1 // pred_check_branch
      %5163 = sbr.rel (0) target = $region85
    $region84: #{tpu_custom_call.1} parent=1 // pred_region
      %5165 = vsyncadd [#allocation4], 0
      %s5167 = sshll.u32 [#allocation16], 4
      %s5168 = int_to_ptr.vmem [resolvable:$true] %s5167
      %s5169 = sshll.u32 %s12, 4
      %s5170 = int_to_ptr.hbm [resolvable:$true] %s5169
      %5172 = dma.vmem_to_hbm [thread:$0]  %s5168, 32, %s5170, [#allocation4]
    $region85: #{tpu_custom_call.1} parent=1 // pred_fallthru
      _
    // Predicated region
    $region86: #{tpu_custom_call.1} parent=1 // pred_check
      _
    $region87: #{tpu_custom_call.1} parent=1 // pred_check_branch
      %5174 = sbr.rel (0) target = $region89
    $region88: #{tpu_custom_call.1} parent=1 // pred_region
      %5176 = dma.done [#allocation4], 32
    $region89: #{tpu_custom_call.1} parent=1 // pred_fallthru
      _
    %5177 = vsyncpa [#allocation3], 1
    %5178 = vsyncpa [#allocation6], 1
    %5179 = vsyncpa [#allocation9], 1
    %5180 = vsyncpa [#allocation12], 1
    %5181 = vsyncpa [#allocation15], 1
    %5182 = vsyncpa [#allocation4], 1

</llo_original>
